<compile_context>
chip_gen: v7x
topology: tpu7x:2x2x1
jax: 0.10.0
libtpu: 0.0.40
codegen_flags: <defaults>
</compile_context>

<pallas_src>
import functools

import jax
import jax.numpy as jnp
from jax.experimental import pallas as pl
from jax.experimental.pallas import tpu as pltpu


def _round_up(x, m):
    return ((x + m - 1) // m) * m


def _gabor_kernel(x_re_ref, x_im_ref, w_ref, b_ref, out_ref, *,
                  omega, sigma, din, dout, matmul_dtype):
    """One row-tile of the complex linear + Gabor nonlinearity.

    x_re/x_im : (block_n, Din)        input dtype (cast to matmul_dtype here)
    w_ref     : (2*Din, 2*Dout)       packed [[wr, wi], [-wi, wr]]
    b_ref     : (1, 2*Dout)   f32     packed [br | bi]
    out_ref   : (block_n, 2*Dout)     packed [re | im]
    """
    xr = x_re_ref[...].astype(matmul_dtype)
    xi = x_im_ref[...].astype(matmul_dtype)

    # Complex matmul as two real MXU dots, accumulated in f32:
    #   [lin_re | lin_im] = xr @ [wr|wi] + xi @ [-wi|wr] + [br|bi]
    lin = (jnp.dot(xr, w_ref[:din, :], preferred_element_type=jnp.float32)
           + jnp.dot(xi, w_ref[din:, :], preferred_element_type=jnp.float32)
           + b_ref[...])
    lin_re = lin[:, :dout]
    lin_im = lin[:, dout:]

    # exp(1j*omega*lin - |sigma*lin|^2):
    #   re(z) = -omega*lin_im - sigma^2*(lin_re^2 + lin_im^2)
    #   im(z) =  omega*lin_re
    s2 = sigma * sigma                      # trace-time constant fold
    exp_re = -omega * lin_im - s2 * (lin_re * lin_re + lin_im * lin_im)
    exp_im = omega * lin_re
    mag = jnp.exp(exp_re)                   # EUP
    out_ref[:, :dout] = (mag * jnp.cos(exp_im)).astype(out_ref.dtype)
    out_ref[:, dout:] = (mag * jnp.sin(exp_im)).astype(out_ref.dtype)


def pack_gabor_params(w_re, w_im, b_re, b_im, matmul_dtype=jnp.float32):
    """One-time parameter packing (call at init, not per forward)."""
    w_packed = jnp.concatenate(
        [jnp.concatenate([w_re, w_im], axis=1),
         jnp.concatenate([-w_im, w_re], axis=1)], axis=0).astype(matmul_dtype)
    b_packed = jnp.concatenate([b_re, b_im]).reshape(1, -1).astype(jnp.float32)
    return w_packed, b_packed


def complex_gabor_layer_packed(x_re, x_im, w_packed, b_packed, omega0, sigma0,
                               *, block_n=512, matmul_dtype=jnp.float32,
                               out_dtype=jnp.float32, min_steps=4):
    """Fast path: returns packed (N, 2*Dout) [re | im] activation slab."""
    N, Din = x_re.shape
    two_dout = w_packed.shape[1]
    Dout = two_dout // 2
    assert w_packed.shape[0] == 2 * Din
    assert b_packed.shape == (1, two_dout)

    SUBL = 16  # safe for both f32 and bf16 sublane tiling

    # Large row tiles amortize per-step overhead, but keep >= min_steps grid
    # steps so each v7x TensorCore still double-buffers.
    block_n = max(SUBL, min(int(block_n), _round_up(pl.cdiv(N, min_steps), SUBL)))
    block_n = _round_up(block_n, SUBL)
    Np = _round_up(N, block_n)
    if Np != N:
        pad = ((0, Np - N), (0, 0))
        x_re = jnp.pad(x_re, pad)
        x_im = jnp.pad(x_im, pad)
    grid = (Np // block_n,)

    kernel = functools.partial(
        _gabor_kernel, omega=float(omega0), sigma=float(sigma0),
        din=Din, dout=Dout, matmul_dtype=matmul_dtype)

    # Explicit VMEM budget (double-buffered inputs/outputs + f32 intermediates).
    in_isz = jnp.dtype(x_re.dtype).itemsize
    w_isz = jnp.dtype(w_packed.dtype).itemsize
    out_isz = jnp.dtype(out_dtype).itemsize
    vmem_bytes = (2 * (2 * block_n * Din * in_isz)        # x re/im
                  + 2 * (2 * Din * two_dout * w_isz)      # packed weight
                  + 2 * (two_dout * 4)                    # packed bias
                  + 2 * (block_n * two_dout * out_isz)    # packed output
                  + 8 * (block_n * two_dout * 4))         # f32 epilogue headroom
    vmem_limit = int(min(max(2 * vmem_bytes, 4 << 20), 64 << 20))

    out = pl.pallas_call(
        kernel,
        out_shape=jax.ShapeDtypeStruct((Np, two_dout), out_dtype),
        grid_spec=pltpu.PrefetchScalarGridSpec(
            num_scalar_prefetch=0,
            grid=grid,
            in_specs=[
                pl.BlockSpec((block_n, Din), lambda i: (i, 0)),
                pl.BlockSpec((block_n, Din), lambda i: (i, 0)),
                pl.BlockSpec((2 * Din, two_dout), lambda i: (0, 0)),
                pl.BlockSpec((1, two_dout), lambda i: (0, 0)),
            ],
            out_specs=pl.BlockSpec((block_n, two_dout), lambda i: (i, 0)),
        ),
        compiler_params=pltpu.CompilerParams(
            dimension_semantics=("parallel",),
            vmem_limit_bytes=vmem_limit),
    )(x_re, x_im, w_packed, b_packed)

    return out[:N] if Np != N else out


def complex_gabor_layer(x_re, x_im, w_re, w_im, b_re, b_im, omega0, sigma0,
                        *, block_n=512, matmul_dtype=jnp.float32,
                        out_dtype=jnp.float32):
    """Drop-in module equivalent: returns complex64 [N, Dout].

    NOTE: the complex64 assembly adds output-sized HBM passes; chained WIRE
    layers should consume the packed slab from complex_gabor_layer_packed.
    TODO(synk): trainable omega0/sigma0 are baked as trace-time constants
    here (retrace on change); pass them as SMEM scalars if they vary per step.
    """
    w_packed, b_packed = pack_gabor_params(w_re, w_im, b_re, b_im, matmul_dtype)
    out = complex_gabor_layer_packed(
        x_re, x_im, w_packed, b_packed, omega0, sigma0,
        block_n=block_n, matmul_dtype=matmul_dtype, out_dtype=out_dtype)
    Dout = w_re.shape[1]
    return jax.lax.complex(out[:, :Dout].astype(jnp.float32),
                           out[:, Dout:].astype(jnp.float32))


def reference(x_c, w_c, b_c, omega0, sigma0):
    lin = x_c @ w_c + b_c
    omega = omega0 * lin
    scale = sigma0 * lin
    return jnp.exp(1j * omega - jnp.abs(scale) ** 2)


if __name__ == "__main__":
    # Small shapes consistent with the module: N coordinates through a
    # complex Linear(in_features -> out_features) + Gabor activation.
    N, Din, Dout = 512, 32, 32
    omega0, sigma0 = 10.0, 40.0  # module defaults

    key = jax.random.PRNGKey(0)
    k = jax.random.split(key, 6)
    bound = 1.0 / jnp.sqrt(Din)
    # Synthetic nn.Linear(in, out, cfloat) parameters, stored [in, out]
    # (transpose of PyTorch's [out, in]).
    w_re = jax.random.uniform(k[0], (Din, Dout), jnp.float32, -bound, bound)
    w_im = jax.random.uniform(k[1], (Din, Dout), jnp.float32, -bound, bound)
    b_re = jax.random.uniform(k[2], (Dout,), jnp.float32, -bound, bound)
    b_im = jax.random.uniform(k[3], (Dout,), jnp.float32, -bound, bound)
    # Complex input (is_first=False path).  Small magnitudes keep the Gabor
    # Gaussian term from flushing everything to zero.
    x_re = 0.01 * jax.random.normal(k[4], (N, Din), jnp.float32)
    x_im = 0.01 * jax.random.normal(k[5], (N, Din), jnp.float32)

    # Pack parameters once (init-time), jit the packed-output fast path.
    w_packed, b_packed = pack_gabor_params(w_re, w_im, b_re, b_im)
    layer = jax.jit(functools.partial(
        complex_gabor_layer_packed, omega0=omega0, sigma0=sigma0, block_n=512))
    packed = jax.block_until_ready(layer(x_re, x_im, w_packed, b_packed))

    # Assemble complex64 only for the correctness check (not the perf path).
    out = jax.lax.complex(packed[:, :Dout], packed[:, Dout:])

    x_c = x_re + 1j * x_im
    w_c = w_re + 1j * w_im
    b_c = b_re + 1j * b_im
    ref = reference(x_c, w_c, b_c, omega0, sigma0)
    assert out.shape == (N, Dout) and out.dtype == jnp.complex64
    # Tolerance covers the f32-in / f32-accumulate matmul; the Gaussian term
    # amplifies lin error by ~sigma0^2, which is why the matmul stays f32.
    assert jnp.allclose(out, ref, atol=2e-2, rtol=2e-2), float(
        jnp.max(jnp.abs(out - ref)))

    # Also exercise the drop-in complex64 wrapper once.
    out2 = jax.block_until_ready(
        complex_gabor_layer(x_re, x_im, w_re, w_im, b_re, b_im, omega0, sigma0))
    assert jnp.allclose(out2, ref, atol=2e-2, rtol=2e-2)

    print("KERNEL_OK")
</pallas_src>

<mosaic_0001>
module attributes {stable_mosaic.version = 11 : i64} {
  func.func @_gabor_kernel(%arg0: i32, %arg1: memref<128x32xf32, #tpu.memory_space<vmem>>, %arg2: memref<128x32xf32, #tpu.memory_space<vmem>>, %arg3: memref<64x64xf32, #tpu.memory_space<vmem>>, %arg4: memref<1x64xf32, #tpu.memory_space<vmem>>, %arg5: memref<128x64xf32, #tpu.memory_space<vmem>>) attributes {dimension_semantics = [#tpu.dimension_semantics<parallel>], iteration_bounds = array<i64: 4>, scalar_prefetch = 0 : i64, scratch_operands = 0 : i64, tpu.core_type = #tpu.core_type<tc>, window_params = [{transform_indices = @transform_0, window_bounds = array<i64: 128, 32>}, {transform_indices = @transform_1, window_bounds = array<i64: 128, 32>}, {pipeline_mode = #tpu.pipeline_mode<synchronous>, transform_indices = @transform_2, window_bounds = array<i64: 64, 64>}, {pipeline_mode = #tpu.pipeline_mode<synchronous>, transform_indices = @transform_3, window_bounds = array<i64: 1, 64>}, {transform_indices = @transform_4, window_bounds = array<i64: 128, 64>}]} {
    %c0 = arith.constant 0 : index
    %c0_0 = arith.constant 0 : index
    %0 = vector.load %arg1[%c0, %c0_0] : memref<128x32xf32, #tpu.memory_space<vmem>>, vector<128x32xf32>
    %c0_1 = arith.constant 0 : index
    %c0_2 = arith.constant 0 : index
    %1 = vector.load %arg2[%c0_1, %c0_2] : memref<128x32xf32, #tpu.memory_space<vmem>>, vector<128x32xf32>
    %c0_3 = arith.constant 0 : index
    %c0_4 = arith.constant 0 : index
    %2 = vector.load %arg3[%c0_3, %c0_4] : memref<64x64xf32, #tpu.memory_space<vmem>>, vector<32x64xf32>
    %cst = arith.constant dense<0.000000e+00> : vector<128x64xf32>
    %3 = tpu.matmul %0, %2, %cst {dimension_numbers = #tpu.dot_dimension_numbers<[1], [0], [0], [1], [0, 0, 1, 1], [], []>} : vector<128x32xf32>, vector<32x64xf32>, vector<128x64xf32> -> vector<128x64xf32>
    %c32 = arith.constant 32 : index
    %c0_5 = arith.constant 0 : index
    %4 = vector.load %arg3[%c32, %c0_5] : memref<64x64xf32, #tpu.memory_space<vmem>>, vector<32x64xf32>
    %cst_6 = arith.constant dense<0.000000e+00> : vector<128x64xf32>
    %5 = tpu.matmul %1, %4, %cst_6 {dimension_numbers = #tpu.dot_dimension_numbers<[1], [0], [0], [1], [0, 0, 1, 1], [], []>} : vector<128x32xf32>, vector<32x64xf32>, vector<128x64xf32> -> vector<128x64xf32>
    %6 = arith.addf %3, %5 : vector<128x64xf32>
    %c0_7 = arith.constant 0 : index
    %c0_8 = arith.constant 0 : index
    %7 = vector.load %arg4[%c0_7, %c0_8] : memref<1x64xf32, #tpu.memory_space<vmem>>, vector<1x64xf32>
    %8 = vector.broadcast %7 : vector<1x64xf32> to vector<128x64xf32>
    %9 = arith.addf %6, %8 : vector<128x64xf32>
    %10 = vector.extract_strided_slice %9 {offsets = [0, 0], sizes = [128, 32], strides = [1, 1]} : vector<128x64xf32> to vector<128x32xf32>
    %11 = vector.extract_strided_slice %9 {offsets = [0, 32], sizes = [128, 32], strides = [1, 1]} : vector<128x64xf32> to vector<128x32xf32>
    %cst_9 = arith.constant -1.000000e+01 : f32
    %12 = vector.broadcast %cst_9 : f32 to vector<128x32xf32>
    %13 = arith.mulf %12, %11 : vector<128x32xf32>
    %14 = arith.mulf %10, %10 : vector<128x32xf32>
    %15 = arith.mulf %11, %11 : vector<128x32xf32>
    %16 = arith.addf %14, %15 : vector<128x32xf32>
    %cst_10 = arith.constant 1.600000e+03 : f32
    %17 = vector.broadcast %cst_10 : f32 to vector<128x32xf32>
    %18 = arith.mulf %17, %16 : vector<128x32xf32>
    %19 = arith.subf %13, %18 : vector<128x32xf32>
    %cst_11 = arith.constant 1.000000e+01 : f32
    %20 = vector.broadcast %cst_11 : f32 to vector<128x32xf32>
    %21 = arith.mulf %20, %10 : vector<128x32xf32>
    %22 = math.exp %19 : vector<128x32xf32>
    %23 = math.cos %21 : vector<128x32xf32>
    %24 = arith.mulf %22, %23 : vector<128x32xf32>
    %c0_12 = arith.constant 0 : index
    %c0_13 = arith.constant 0 : index
    %25 = vector.load %arg5[%c0_12, %c0_13] : memref<128x64xf32, #tpu.memory_space<vmem>>, vector<128x32xf32>
    tpu.vector_store %arg5[%c0_12, %c0_13], %24 {strides = array<i32>} : memref<128x64xf32, #tpu.memory_space<vmem>>, vector<128x32xf32>,
    %26 = math.sin %21 : vector<128x32xf32>
    %27 = arith.mulf %22, %26 : vector<128x32xf32>
    %c0_14 = arith.constant 0 : index
    %c32_15 = arith.constant 32 : index
    %28 = vector.load %arg5[%c0_14, %c32_15] : memref<128x64xf32, #tpu.memory_space<vmem>>, vector<128x32xf32>
    tpu.vector_store %arg5[%c0_14, %c32_15], %27 {strides = array<i32>} : memref<128x64xf32, #tpu.memory_space<vmem>>, vector<128x32xf32>,
    return
  }
  func.func @transform_0(%arg0: i32) -> (i32, i32) {
    %c0_i32 = arith.constant 0 : i32
    %c0_i32_0 = arith.constant 0 : i32
    return %arg0, %c0_i32 : i32, i32
  }
  func.func @transform_1(%arg0: i32) -> (i32, i32) {
    %c0_i32 = arith.constant 0 : i32
    %c0_i32_0 = arith.constant 0 : i32
    return %arg0, %c0_i32 : i32, i32
  }
  func.func @transform_2(%arg0: i32) -> (i32, i32) {
    %c0_i32 = arith.constant 0 : i32
    %c0_i32_0 = arith.constant 0 : i32
    %c0_i32_1 = arith.constant 0 : i32
    return %c0_i32, %c0_i32_0 : i32, i32
  }
  func.func @transform_3(%arg0: i32) -> (i32, i32) {
    %c0_i32 = arith.constant 0 : i32
    %c0_i32_0 = arith.constant 0 : i32
    %c0_i32_1 = arith.constant 0 : i32
    return %c0_i32, %c0_i32_0 : i32, i32
  }
  func.func @transform_4(%arg0: i32) -> (i32, i32) {
    %c0_i32 = arith.constant 0 : i32
    %c0_i32_0 = arith.constant 0 : i32
    return %arg0, %c0_i32 : i32, i32
  }
}

</mosaic_0001>

<llo_original>
// kernel: complex_gabor_layer_packed.1
$region0: #{complex_gabor_layer_packed.1}
  #allocation0 [shape = 'u32[]', space=smem, size = 0x4, offset = 0x4, fixed_abs, tag = 'smem constant byte address 0x4 - core index']
  #allocation1 [shape = 'u32[144,128]{1,0:T(1,128)}', space=vmem, size = 0x12000, scoped, tag = 'internal scratch']
  %s0 = inlined_call_operand.vmem [shape: f32[512,32], index: 0, kind: input, shape index: {}]
  %s1 = inlined_call_operand.vmem [shape: f32[512,32], index: 1, kind: input, shape index: {}]
  %s2 = inlined_call_operand.vmem [shape: f32[64,64], index: 2, kind: input, shape index: {}]
  %s3 = inlined_call_operand.vmem [shape: f32[1,64], index: 3, kind: input, shape index: {}]
  %s4 = inlined_call_operand.vmem [shape: f32[512,64], index: 4, kind: output, shape index: {}]
  %s5 = sld [smem:[#allocation0]]
  $region49: #{complex_gabor_layer_packed.1} parent=0
    _
  %s7 = ssub.s32 1, %s5
  %s8 = scalar_select 0, %s7, %s5
  loop: start=0, step=1, limit=6
  $region2: #{complex_gabor_layer_packed.1} parent=0 // loop_pre_header
    _
  $region3: #{complex_gabor_layer_packed.1} parent=0 // loop_header
    %s10 = sphi 0, %s14
    %p11 = scmp.ge.s32.totalorder %s10, 6
    %s20 = sphi 0, %s22
    %s23 = sphi 0, %s20
    %s24 = sphi 0, %s23
    %s40 = sphi 0, %s24
    %s46 = sphi 0, %s48
    %s49 = sphi 0, %s46
    %s50 = sphi 0, %s49
    %s66 = sphi 0, %s50
    %s70 = sphi 0, %s70
    %s72 = sphi 0, %s70
    %s73 = sphi 0, %s72
    %s87 = sphi 0, %s73
    %s91 = sphi 0, %s91
    %s93 = sphi 0, %s91
    %s94 = sphi 0, %s93
    %s108 = sphi 0, %s94
    %s114 = sphi 0, %s116
    %s117 = sphi 0, %s114
    %s118 = sphi 0, %s117
    %s134 = sphi 0, %s118
  $region4: #{complex_gabor_layer_packed.1} parent=0 // loop_header_branch
    %13 = sbr.rel (%p11) target = $region8
  $region5: #{complex_gabor_layer_packed.1} parent=0 // loop_body
    %s15 = ssub.s32 %s10, 1
    %s16 = ssub.s32 %s10, 2
    %s17 = sadd.s32 %s10, 1
    %s18 = ssub.s32 %s10, %s17
    %p19 = scmp.eq.s32.totalorder %s18, 0
    %s21 = sadd.s32 %s20, 1
    %s22 = scalar_select %p19, %s20, %s21
    %p25 = pneg %p19
    %p26 = scmp.eq.s32.totalorder %s10, 3
    %p27 = por %p25, %p26
    %p28 = scmp.ne.s32.totalorder %s20, %s23
    %p29 = scmp.eq.s32.totalorder %s10, 0
    %p30 = por %p28, %p29
    %p31 = scmp.ne.s32.totalorder %s20, %s23
    %p32 = scmp.eq.s32.totalorder %s15, 3
    %p33 = por %p31, %p32
    %p34 = scmp.ne.s32.totalorder %s23, %s24
    %p35 = scmp.eq.s32.totalorder %s15, 0
    %p36 = por %p34, %p35
    %p37 = scmp.ne.s32.totalorder %s23, %s24
    %p38 = scmp.eq.s32.totalorder %s16, 3
    %p39 = por %p37, %p38
    %p41 = scmp.ne.s32.totalorder %s24, %s40
    %p42 = scmp.eq.s32.totalorder %s16, 0
    %p43 = por %p41, %p42
    %s44 = ssub.s32 %s10, %s17
    %p45 = scmp.eq.s32.totalorder %s44, 0
    %s47 = sadd.s32 %s46, 1
    %s48 = scalar_select %p45, %s46, %s47
    %p51 = pneg %p45
    %p52 = scmp.eq.s32.totalorder %s10, 3
    %p53 = por %p51, %p52
    %p54 = scmp.ne.s32.totalorder %s46, %s49
    %p55 = scmp.eq.s32.totalorder %s10, 0
    %p56 = por %p54, %p55
    %p57 = scmp.ne.s32.totalorder %s46, %s49
    %p58 = scmp.eq.s32.totalorder %s15, 3
    %p59 = por %p57, %p58
    %p60 = scmp.ne.s32.totalorder %s49, %s50
    %p61 = scmp.eq.s32.totalorder %s15, 0
    %p62 = por %p60, %p61
    %p63 = scmp.ne.s32.totalorder %s49, %s50
    %p64 = scmp.eq.s32.totalorder %s16, 3
    %p65 = por %p63, %p64
    %p67 = scmp.ne.s32.totalorder %s50, %s66
    %p68 = scmp.eq.s32.totalorder %s16, 0
    %p69 = por %p67, %p68
    %s71 = sadd.s32 %s70, 1
    %p74 = scmp.eq.s32.totalorder %s10, 3
    %p75 = scmp.ne.s32.totalorder %s70, %s72
    %p76 = scmp.eq.s32.totalorder %s10, 0
    %p77 = por %p75, %p76
    %p78 = scmp.ne.s32.totalorder %s70, %s72
    %p79 = scmp.eq.s32.totalorder %s15, 3
    %p80 = por %p78, %p79
    %p81 = scmp.ne.s32.totalorder %s72, %s73
    %p82 = scmp.eq.s32.totalorder %s15, 0
    %p83 = por %p81, %p82
    %p84 = scmp.ne.s32.totalorder %s72, %s73
    %p85 = scmp.eq.s32.totalorder %s16, 3
    %p86 = por %p84, %p85
    %p88 = scmp.ne.s32.totalorder %s73, %s87
    %p89 = scmp.eq.s32.totalorder %s16, 0
    %p90 = por %p88, %p89
    %s92 = sadd.s32 %s91, 1
    %p95 = scmp.eq.s32.totalorder %s10, 3
    %p96 = scmp.ne.s32.totalorder %s91, %s93
    %p97 = scmp.eq.s32.totalorder %s10, 0
    %p98 = por %p96, %p97
    %p99 = scmp.ne.s32.totalorder %s91, %s93
    %p100 = scmp.eq.s32.totalorder %s15, 3
    %p101 = por %p99, %p100
    %p102 = scmp.ne.s32.totalorder %s93, %s94
    %p103 = scmp.eq.s32.totalorder %s15, 0
    %p104 = por %p102, %p103
    %p105 = scmp.ne.s32.totalorder %s93, %s94
    %p106 = scmp.eq.s32.totalorder %s16, 3
    %p107 = por %p105, %p106
    %p109 = scmp.ne.s32.totalorder %s94, %s108
    %p110 = scmp.eq.s32.totalorder %s16, 0
    %p111 = por %p109, %p110
    %s112 = ssub.s32 %s10, %s17
    %p113 = scmp.eq.s32.totalorder %s112, 0
    %s115 = sadd.s32 %s114, 1
    %s116 = scalar_select %p113, %s114, %s115
    %p119 = pneg %p113
    %p120 = scmp.eq.s32.totalorder %s10, 3
    %p121 = por %p119, %p120
    %p122 = scmp.ne.s32.totalorder %s114, %s117
    %p123 = scmp.eq.s32.totalorder %s10, 0
    %p124 = por %p122, %p123
    %p125 = scmp.ne.s32.totalorder %s114, %s117
    %p126 = scmp.eq.s32.totalorder %s15, 3
    %p127 = por %p125, %p126
    %p128 = scmp.ne.s32.totalorder %s117, %s118
    %p129 = scmp.eq.s32.totalorder %s15, 0
    %p130 = por %p128, %p129
    %p131 = scmp.ne.s32.totalorder %s117, %s118
    %p132 = scmp.eq.s32.totalorder %s16, 3
    %p133 = por %p131, %p132
    %p135 = scmp.ne.s32.totalorder %s118, %s134
    %p136 = scmp.eq.s32.totalorder %s16, 0
    %p137 = por %p135, %p136
    %p138 = scmp.le.s32.totalorder 1, %s10
    %p139 = scmp.lt.s32.totalorder %s10, 5
    %p140 = pnand %p138, %p139
    %p141 = pneg %p140
    // Predicated region
    $region9: #{complex_gabor_layer_packed.1} parent=5 // pred_check
      _
    $region10: #{complex_gabor_layer_packed.1} parent=5 // pred_check_branch
      %143 = sbr.rel (%p140) target = $region12
    $region11: #{complex_gabor_layer_packed.1} parent=5 // pred_region
      %s144 = ssub.s32 %s10, 1
      // Predicated region
      $region13: #{complex_gabor_layer_packed.1} parent=11 // pred_check
        %p145 = pneg %p83
      $region14: #{complex_gabor_layer_packed.1} parent=11 // pred_check_branch
        %147 = sbr.rel (%p145) target = $region16
      $region15: #{complex_gabor_layer_packed.1} parent=11 // pred_region
        _
      $region16: #{complex_gabor_layer_packed.1} parent=11 // pred_fallthru
        _
      // Predicated region
      $region17: #{complex_gabor_layer_packed.1} parent=11 // pred_check
        %p148 = pneg %p104
      $region18: #{complex_gabor_layer_packed.1} parent=11 // pred_check_branch
        %150 = sbr.rel (%p148) target = $region20
      $region19: #{complex_gabor_layer_packed.1} parent=11 // pred_region
        _
      $region20: #{complex_gabor_layer_packed.1} parent=11 // pred_fallthru
        _
    $region12: #{complex_gabor_layer_packed.1} parent=5 // pred_fallthru
      _
    %p151 = scmp.lt.s32.totalorder %s10, 4
    // Predicated region
    $region21: #{complex_gabor_layer_packed.1} parent=5 // pred_check
      %p152 = pneg %p151
    $region22: #{complex_gabor_layer_packed.1} parent=5 // pred_check_branch
      %154 = sbr.rel (%p152) target = $region24
    $region23: #{complex_gabor_layer_packed.1} parent=5 // pred_region
      // Predicated region
      $region25: #{complex_gabor_layer_packed.1} parent=23 // pred_check
        %p155 = pneg %p30
      $region26: #{complex_gabor_layer_packed.1} parent=23 // pred_check_branch
        %157 = sbr.rel (%p155) target = $region28
      $region27: #{complex_gabor_layer_packed.1} parent=23 // pred_region
        %s158 = smul.u32 16, %s10
        %p159 = scmp.lt.s32.totalorder %s158, 63
        %s160 = scalar_select %p159, %s158, 63
        %s161 = smul.addr %s160, 8
        %s162 = scalar_lea.vmem %s0, %s161
        %s163 = smul.u32 16, %s10
      $region28: #{complex_gabor_layer_packed.1} parent=23 // pred_fallthru
        _
      // Predicated region
      $region29: #{complex_gabor_layer_packed.1} parent=23 // pred_check
        %p164 = pneg %p56
      $region30: #{complex_gabor_layer_packed.1} parent=23 // pred_check_branch
        %166 = sbr.rel (%p164) target = $region32
      $region31: #{complex_gabor_layer_packed.1} parent=23 // pred_region
        %s167 = smul.u32 16, %s10
        %p168 = scmp.lt.s32.totalorder %s167, 63
        %s169 = scalar_select %p168, %s167, 63
        %s170 = smul.addr %s169, 8
        %s171 = scalar_lea.vmem %s1, %s170
        %s172 = smul.u32 16, %s10
      $region32: #{complex_gabor_layer_packed.1} parent=23 // pred_fallthru
        _
    $region24: #{complex_gabor_layer_packed.1} parent=5 // pred_fallthru
      _
    %p173 = scmp.le.s32.totalorder 1, %s10
    %p174 = scmp.lt.s32.totalorder %s10, 5
    %p175 = pnand %p173, %p174
    %p176 = pneg %p175
    // Predicated region
    $region33: #{complex_gabor_layer_packed.1} parent=5 // pred_check
      _
    $region34: #{complex_gabor_layer_packed.1} parent=5 // pred_check_branch
      %178 = sbr.rel (%p175) target = $region36
    $region35: #{complex_gabor_layer_packed.1} parent=5 // pred_region
      %s179 = ssub.s32 %s10, 1
      %s180 = smul.u32 16, %s15
      %p181 = scmp.lt.s32.totalorder %s180, 63
      %s182 = scalar_select %p181, %s180, 63
      %s183 = smul.addr %s182, 8
      %s184 = scalar_lea.vmem %s0, %s183
      %p185 = pneg %p36
      %p186 = pneg %p33
      %s187 = smul.u32 16, %s15
      %p188 = scmp.lt.s32.totalorder %s187, 63
      %s189 = scalar_select %p188, %s187, 63
      %s190 = smul.addr %s189, 8
      %s191 = scalar_lea.vmem %s1, %s190
      %p192 = pneg %p62
      %p193 = pneg %p59
      %p194 = pneg %p83
      %p195 = pneg %p80
      %p196 = pneg %p104
      %p197 = pneg %p101
      %p198 = pneg %p130
      %p199 = pneg %p127
      %s200 = smul.u32 16, %s15
      %p201 = scmp.lt.s32.totalorder %s200, 63
      %s202 = scalar_select %p201, %s200, 63
      %s203 = smul.addr %s202, 8
      %s204 = scalar_lea.vmem %s4, %s203
      %s205 = smul.u32 16, %s15
      %p206 = scmp.lt.s32.totalorder %s205, 63
      %s207 = scalar_select %p206, %s205, 63
      %s208 = smul.addr %s207, 8
      %s209 = scalar_lea.vmem %s0, %s208
      %s210 = smul.u32 16, %s15
      %s211 = smul.u32 16, %s15
      %p212 = scmp.lt.s32.totalorder %s211, 63
      %s213 = scalar_select %p212, %s211, 63
      %s214 = smul.addr %s213, 8
      %s215 = scalar_lea.vmem %s1, %s214
      %s216 = smul.u32 16, %s15
      %s217 = smul.u32 16, %s15
      %p218 = scmp.lt.s32.totalorder %s217, 63
      %s219 = scalar_select %p218, %s217, 63
      %s220 = smul.addr %s219, 8
      %s221 = scalar_lea.vmem %s4, %s220
      %s222 = smul.u32 16, %s15
      %v223 = vld [vmem:[%s209] sm:$0xff]
      %v224 = vld [vmem:[%s209 + $0x8] sm:$0xff]
      %v225 = vld [vmem:[%s209 + $0x10] sm:$0xff]
      %v226 = vld [vmem:[%s209 + $0x18] sm:$0xff]
      %v227 = vld [vmem:[%s209 + $0x20] sm:$0xff]
      %v228 = vld [vmem:[%s209 + $0x28] sm:$0xff]
      %v229 = vld [vmem:[%s209 + $0x30] sm:$0xff]
      %v230 = vld [vmem:[%s209 + $0x38] sm:$0xff]
      %v231 = vld [vmem:[%s209 + $0x40] sm:$0xff]
      %v232 = vld [vmem:[%s209 + $0x48] sm:$0xff]
      %v233 = vld [vmem:[%s209 + $0x50] sm:$0xff]
      %v234 = vld [vmem:[%s209 + $0x58] sm:$0xff]
      %v235 = vld [vmem:[%s209 + $0x60] sm:$0xff]
      %v236 = vld [vmem:[%s209 + $0x68] sm:$0xff]
      %v237 = vld [vmem:[%s209 + $0x70] sm:$0xff]
      %v238 = vld [vmem:[%s209 + $0x78] sm:$0xff]
      %v239 = vld [vmem:[%s215] sm:$0xff]
      %v240 = vld [vmem:[%s215 + $0x8] sm:$0xff]
      %v241 = vld [vmem:[%s215 + $0x10] sm:$0xff]
      %v242 = vld [vmem:[%s215 + $0x18] sm:$0xff]
      %v243 = vld [vmem:[%s215 + $0x20] sm:$0xff]
      %v244 = vld [vmem:[%s215 + $0x28] sm:$0xff]
      %v245 = vld [vmem:[%s215 + $0x30] sm:$0xff]
      %v246 = vld [vmem:[%s215 + $0x38] sm:$0xff]
      %v247 = vld [vmem:[%s215 + $0x40] sm:$0xff]
      %v248 = vld [vmem:[%s215 + $0x48] sm:$0xff]
      %v249 = vld [vmem:[%s215 + $0x50] sm:$0xff]
      %v250 = vld [vmem:[%s215 + $0x58] sm:$0xff]
      %v251 = vld [vmem:[%s215 + $0x60] sm:$0xff]
      %v252 = vld [vmem:[%s215 + $0x68] sm:$0xff]
      %v253 = vld [vmem:[%s215 + $0x70] sm:$0xff]
      %v254 = vld [vmem:[%s215 + $0x78] sm:$0xff]
      %v255 = vld [vmem:[%s2] sm:$0xff]
      %v256 = vld [vmem:[%s2 + $0x8] sm:$0xff]
      %v257 = vld [vmem:[%s2 + $0x10] sm:$0xff]
      %v258 = vld [vmem:[%s2 + $0x18] sm:$0xff]
      %v259 = vld [vmem:[%s2 + $0x20] sm:$0xff]
      %v260 = vld [vmem:[%s2 + $0x28] sm:$0xff]
      %v261 = vld [vmem:[%s2 + $0x30] sm:$0xff]
      %v262 = vld [vmem:[%s2 + $0x38] sm:$0xff]
      %vm263 = vcmask 261120
      %v265 = vsel %vm263, %v239, 0
      %v268 = vsel %vm263, %v240, 0
      %v271 = vsel %vm263, %v241, 0
      %v274 = vsel %vm263, %v242, 0
      %v277 = vsel %vm263, %v243, 0
      %v280 = vsel %vm263, %v244, 0
      %v283 = vsel %vm263, %v245, 0
      %v286 = vsel %vm263, %v246, 0
      %v289 = vsel %vm263, %v247, 0
      %v292 = vsel %vm263, %v248, 0
      %v295 = vsel %vm263, %v249, 0
      %v298 = vsel %vm263, %v250, 0
      %v301 = vsel %vm263, %v251, 0
      %v304 = vsel %vm263, %v252, 0
      %v307 = vsel %vm263, %v253, 0
      %v310 = vsel %vm263, %v254, 0
      %312 = vmatprep.subr.mxu0 0.0
      %313 = vmatpush1.msra.mxu0 %v259
      %314 = vmatprep.subr.mxu0 0.0
      %315 = vmatpush1.msra.mxu0 %v260
      %316 = vmatprep.subr.mxu0 0.0
      %317 = vmatpush1.msra.mxu0 %v261
      %318 = vmatprep.subr.mxu0 0.0
      %319 = vmatpush1.msra.mxu0 %v262
      %320 = vmatprep.subr.mxu0 0.0
      %321 = vmatpush1.msra.mxu0 0.0
      %322 = vmatprep.subr.mxu0 0.0
      %323 = vmatpush1.msra.mxu0 0.0
      %324 = vmatprep.subr.mxu0 0.0
      %325 = vmatpush1.msra.mxu0 0.0
      %326 = vmatprep.subr.mxu0 0.0
      %327 = vmatpush1.msra.mxu0 0.0
      %328 = vmatprep.subr.mxu0 0.0
      %329 = vmatpush1.msra.mxu0 0.0
      %330 = vmatprep.subr.mxu0 0.0
      %331 = vmatpush1.msra.mxu0 0.0
      %332 = vmatprep.subr.mxu0 0.0
      %333 = vmatpush1.msra.mxu0 0.0
      %334 = vmatprep.subr.mxu0 0.0
      %335 = vmatpush1.msra.mxu0 0.0
      %336 = vmatprep.subr.mxu0 0.0
      %337 = vmatpush1.msra.mxu0 0.0
      %338 = vmatprep.subr.mxu0 0.0
      %339 = vmatpush1.msra.mxu0 0.0
      %340 = vmatprep.subr.mxu0 0.0
      %341 = vmatpush1.msra.mxu0 0.0
      %342 = vmatprep.subr.mxu0 0.0
      %343 = vmatpush1.msra.mxu0 0.0
      %344 = vmatprep.subr.mxu0 0.0
      %345 = vmatpush1.msra.mxu0 0.0
      %346 = vmatprep.subr.mxu0 0.0
      %347 = vmatpush1.msra.mxu0 0.0
      %348 = vmatprep.subr.mxu0 0.0
      %349 = vmatpush1.msra.mxu0 0.0
      %350 = vmatprep.subr.mxu0 0.0
      %351 = vmatpush1.msra.mxu0 0.0
      %352 = vmatprep.subr.mxu0 0.0
      %353 = vmatpush1.msra.mxu0 0.0
      %354 = vmatprep.subr.mxu0 0.0
      %355 = vmatpush1.msra.mxu0 0.0
      %356 = vmatprep.subr.mxu0 0.0
      %357 = vmatpush1.msra.mxu0 0.0
      %358 = vmatprep.subr.mxu0 0.0
      %359 = vmatpush1.msra.mxu0 0.0
      %360 = vmatprep.subr.mxu0 0.0
      %361 = vmatpush1.msra.mxu0 0.0
      %362 = vmatprep.subr.mxu0 0.0
      %363 = vmatpush1.msra.mxu0 0.0
      %364 = vmatprep.subr.mxu0 0.0
      %365 = vmatpush1.msra.mxu0 0.0
      %366 = vmatprep.subr.mxu0 0.0
      %367 = vmatpush1.msra.mxu0 0.0
      %368 = vmatprep.subr.mxu0 0.0
      %369 = vmatpush1.msra.mxu0 0.0
      %370 = vmatprep.subr.mxu0 0.0
      %371 = vmatpush1.msra.mxu0 0.0
      %372 = vmatprep.subr.mxu0 0.0
      %373 = vmatpush1.msra.mxu0 0.0
      %374 = vmatprep.subr.mxu0 0.0
      %375 = vmatpush1.msra.mxu0 0.0
      %376 = vmatprep.mubr.f32.mxu0 0.0
      %377 = vmatmul.mubr.f32.gmra.mrb[0].mxu0 %v265
      %v378 = vpop.f32.mrb[0].mxu0
      %v379 = vadd.f32 0.0, %v378
      %v380 = vpop.f32.mrb[0].mxu0
      %381 = vmatprep.mubr.f32.mxu0 0.0
      %382 = vmatmul.mubr.f32.gmra.mrb[0].mxu0 %v268
      %v383 = vpop.f32.mrb[0].mxu0
      %v384 = vadd.f32 0.0, %v383
      %v385 = vpop.f32.mrb[0].mxu0
      %386 = vmatprep.mubr.f32.mxu0 0.0
      %387 = vmatmul.mubr.f32.gmra.mrb[0].mxu0 %v271
      %v388 = vpop.f32.mrb[0].mxu0
      %v389 = vadd.f32 0.0, %v388
      %v390 = vpop.f32.mrb[0].mxu0
      %391 = vmatprep.mubr.f32.mxu0 0.0
      %392 = vmatmul.mubr.f32.gmra.mrb[0].mxu0 %v274
      %v393 = vpop.f32.mrb[0].mxu0
      %v394 = vadd.f32 0.0, %v393
      %v395 = vpop.f32.mrb[0].mxu0
      %396 = vmatprep.mubr.f32.mxu0 0.0
      %397 = vmatmul.mubr.f32.gmra.mrb[0].mxu0 %v277
      %v398 = vpop.f32.mrb[0].mxu0
      %v399 = vadd.f32 0.0, %v398
      %v400 = vpop.f32.mrb[0].mxu0
      %401 = vmatprep.mubr.f32.mxu0 0.0
      %402 = vmatmul.mubr.f32.gmra.mrb[0].mxu0 %v280
      %v403 = vpop.f32.mrb[0].mxu0
      %v404 = vadd.f32 0.0, %v403
      %v405 = vpop.f32.mrb[0].mxu0
      %406 = vmatprep.mubr.f32.mxu0 0.0
      %407 = vmatmul.mubr.f32.gmra.mrb[0].mxu0 %v283
      %v408 = vpop.f32.mrb[0].mxu0
      %v409 = vadd.f32 0.0, %v408
      %v410 = vpop.f32.mrb[0].mxu0
      %411 = vmatprep.mubr.f32.mxu0 0.0
      %412 = vmatmul.mubr.f32.gmra.mrb[0].mxu0 %v286
      %v413 = vpop.f32.mrb[0].mxu0
      %v414 = vadd.f32 0.0, %v413
      %v415 = vpop.f32.mrb[0].mxu0
      %416 = vmatprep.mubr.f32.mxu0 0.0
      %417 = vmatmul.mubr.f32.gmra.mrb[0].mxu0 %v289
      %v418 = vpop.f32.mrb[0].mxu0
      %v419 = vadd.f32 0.0, %v418
      %v420 = vpop.f32.mrb[0].mxu0
      %421 = vmatprep.mubr.f32.mxu0 0.0
      %422 = vmatmul.mubr.f32.gmra.mrb[0].mxu0 %v292
      %v423 = vpop.f32.mrb[0].mxu0
      %v424 = vadd.f32 0.0, %v423
      %v425 = vpop.f32.mrb[0].mxu0
      %426 = vmatprep.mubr.f32.mxu0 0.0
      %427 = vmatmul.mubr.f32.gmra.mrb[0].mxu0 %v295
      %v428 = vpop.f32.mrb[0].mxu0
      %v429 = vadd.f32 0.0, %v428
      %v430 = vpop.f32.mrb[0].mxu0
      %431 = vmatprep.mubr.f32.mxu0 0.0
      %432 = vmatmul.mubr.f32.gmra.mrb[0].mxu0 %v298
      %v433 = vpop.f32.mrb[0].mxu0
      %v434 = vadd.f32 0.0, %v433
      %v435 = vpop.f32.mrb[0].mxu0
      %436 = vmatprep.mubr.f32.mxu0 0.0
      %437 = vmatmul.mubr.f32.gmra.mrb[0].mxu0 %v301
      %v438 = vpop.f32.mrb[0].mxu0
      %v439 = vadd.f32 0.0, %v438
      %v440 = vpop.f32.mrb[0].mxu0
      %441 = vmatprep.mubr.f32.mxu0 0.0
      %442 = vmatmul.mubr.f32.gmra.mrb[0].mxu0 %v304
      %v443 = vpop.f32.mrb[0].mxu0
      %v444 = vadd.f32 0.0, %v443
      %v445 = vpop.f32.mrb[0].mxu0
      %446 = vmatprep.mubr.f32.mxu0 0.0
      %447 = vmatmul.mubr.f32.gmra.mrb[0].mxu0 %v307
      %v448 = vpop.f32.mrb[0].mxu0
      %v449 = vadd.f32 0.0, %v448
      %v450 = vpop.f32.mrb[0].mxu0
      %451 = vmatprep.mubr.f32.mxu0 0.0
      %452 = vmatmul.mubr.f32.gmra.mrb[0].mxu0 %v310
      %v453 = vpop.f32.mrb[0].mxu0
      %v454 = vadd.f32 0.0, %v453
      %v455 = vpop.f32.mrb[0].mxu0
      %456 = vdwg.mxu0
      %v458 = vsel %vm263, %v223, 0
      %v461 = vsel %vm263, %v224, 0
      %v464 = vsel %vm263, %v225, 0
      %v467 = vsel %vm263, %v226, 0
      %v470 = vsel %vm263, %v227, 0
      %v473 = vsel %vm263, %v228, 0
      %v476 = vsel %vm263, %v229, 0
      %v479 = vsel %vm263, %v230, 0
      %v482 = vsel %vm263, %v231, 0
      %v485 = vsel %vm263, %v232, 0
      %v488 = vsel %vm263, %v233, 0
      %v491 = vsel %vm263, %v234, 0
      %v494 = vsel %vm263, %v235, 0
      %v497 = vsel %vm263, %v236, 0
      %v500 = vsel %vm263, %v237, 0
      %v503 = vsel %vm263, %v238, 0
      %505 = vmatprep.subr.mxu0 0.0
      %506 = vmatpush1.msra.mxu0 %v255
      %507 = vmatprep.subr.mxu0 0.0
      %508 = vmatpush1.msra.mxu0 %v256
      %509 = vmatprep.subr.mxu0 0.0
      %510 = vmatpush1.msra.mxu0 %v257
      %511 = vmatprep.subr.mxu0 0.0
      %512 = vmatpush1.msra.mxu0 %v258
      %513 = vmatprep.subr.mxu0 0.0
      %514 = vmatpush1.msra.mxu0 0.0
      %515 = vmatprep.subr.mxu0 0.0
      %516 = vmatpush1.msra.mxu0 0.0
      %517 = vmatprep.subr.mxu0 0.0
      %518 = vmatpush1.msra.mxu0 0.0
      %519 = vmatprep.subr.mxu0 0.0
      %520 = vmatpush1.msra.mxu0 0.0
      %521 = vmatprep.subr.mxu0 0.0
      %522 = vmatpush1.msra.mxu0 0.0
      %523 = vmatprep.subr.mxu0 0.0
      %524 = vmatpush1.msra.mxu0 0.0
      %525 = vmatprep.subr.mxu0 0.0
      %526 = vmatpush1.msra.mxu0 0.0
      %527 = vmatprep.subr.mxu0 0.0
      %528 = vmatpush1.msra.mxu0 0.0
      %529 = vmatprep.subr.mxu0 0.0
      %530 = vmatpush1.msra.mxu0 0.0
      %531 = vmatprep.subr.mxu0 0.0
      %532 = vmatpush1.msra.mxu0 0.0
      %533 = vmatprep.subr.mxu0 0.0
      %534 = vmatpush1.msra.mxu0 0.0
      %535 = vmatprep.subr.mxu0 0.0
      %536 = vmatpush1.msra.mxu0 0.0
      %537 = vmatprep.subr.mxu0 0.0
      %538 = vmatpush1.msra.mxu0 0.0
      %539 = vmatprep.subr.mxu0 0.0
      %540 = vmatpush1.msra.mxu0 0.0
      %541 = vmatprep.subr.mxu0 0.0
      %542 = vmatpush1.msra.mxu0 0.0
      %543 = vmatprep.subr.mxu0 0.0
      %544 = vmatpush1.msra.mxu0 0.0
      %545 = vmatprep.subr.mxu0 0.0
      %546 = vmatpush1.msra.mxu0 0.0
      %547 = vmatprep.subr.mxu0 0.0
      %548 = vmatpush1.msra.mxu0 0.0
      %549 = vmatprep.subr.mxu0 0.0
      %550 = vmatpush1.msra.mxu0 0.0
      %551 = vmatprep.subr.mxu0 0.0
      %552 = vmatpush1.msra.mxu0 0.0
      %553 = vmatprep.subr.mxu0 0.0
      %554 = vmatpush1.msra.mxu0 0.0
      %555 = vmatprep.subr.mxu0 0.0
      %556 = vmatpush1.msra.mxu0 0.0
      %557 = vmatprep.subr.mxu0 0.0
      %558 = vmatpush1.msra.mxu0 0.0
      %559 = vmatprep.subr.mxu0 0.0
      %560 = vmatpush1.msra.mxu0 0.0
      %561 = vmatprep.subr.mxu0 0.0
      %562 = vmatpush1.msra.mxu0 0.0
      %563 = vmatprep.subr.mxu0 0.0
      %564 = vmatpush1.msra.mxu0 0.0
      %565 = vmatprep.subr.mxu0 0.0
      %566 = vmatpush1.msra.mxu0 0.0
      %567 = vmatprep.subr.mxu0 0.0
      %568 = vmatpush1.msra.mxu0 0.0
      %569 = vmatprep.mubr.f32.mxu0 0.0
      %570 = vmatmul.mubr.f32.gmra.mrb[0].mxu0 %v458
      %v571 = vpop.f32.mrb[0].mxu0
      %v572 = vadd.f32 %v379, %v571
      %v573 = vpop.f32.mrb[0].mxu0
      %574 = vmatprep.mubr.f32.mxu0 0.0
      %575 = vmatmul.mubr.f32.gmra.mrb[0].mxu0 %v461
      %v576 = vpop.f32.mrb[0].mxu0
      %v577 = vadd.f32 %v384, %v576
      %v578 = vpop.f32.mrb[0].mxu0
      %579 = vmatprep.mubr.f32.mxu0 0.0
      %580 = vmatmul.mubr.f32.gmra.mrb[0].mxu0 %v464
      %v581 = vpop.f32.mrb[0].mxu0
      %v582 = vadd.f32 %v389, %v581
      %v583 = vpop.f32.mrb[0].mxu0
      %584 = vmatprep.mubr.f32.mxu0 0.0
      %585 = vmatmul.mubr.f32.gmra.mrb[0].mxu0 %v467
      %v586 = vpop.f32.mrb[0].mxu0
      %v587 = vadd.f32 %v394, %v586
      %v588 = vpop.f32.mrb[0].mxu0
      %589 = vmatprep.mubr.f32.mxu0 0.0
      %590 = vmatmul.mubr.f32.gmra.mrb[0].mxu0 %v470
      %v591 = vpop.f32.mrb[0].mxu0
      %v592 = vadd.f32 %v399, %v591
      %v593 = vpop.f32.mrb[0].mxu0
      %594 = vmatprep.mubr.f32.mxu0 0.0
      %595 = vmatmul.mubr.f32.gmra.mrb[0].mxu0 %v473
      %v596 = vpop.f32.mrb[0].mxu0
      %v597 = vadd.f32 %v404, %v596
      %v598 = vpop.f32.mrb[0].mxu0
      %599 = vmatprep.mubr.f32.mxu0 0.0
      %600 = vmatmul.mubr.f32.gmra.mrb[0].mxu0 %v476
      %v601 = vpop.f32.mrb[0].mxu0
      %v602 = vadd.f32 %v409, %v601
      %v603 = vpop.f32.mrb[0].mxu0
      %604 = vmatprep.mubr.f32.mxu0 0.0
      %605 = vmatmul.mubr.f32.gmra.mrb[0].mxu0 %v479
      %v606 = vpop.f32.mrb[0].mxu0
      %v607 = vadd.f32 %v414, %v606
      %v608 = vpop.f32.mrb[0].mxu0
      %609 = vmatprep.mubr.f32.mxu0 0.0
      %610 = vmatmul.mubr.f32.gmra.mrb[0].mxu0 %v482
      %v611 = vpop.f32.mrb[0].mxu0
      %v612 = vadd.f32 %v419, %v611
      %v613 = vpop.f32.mrb[0].mxu0
      %614 = vmatprep.mubr.f32.mxu0 0.0
      %615 = vmatmul.mubr.f32.gmra.mrb[0].mxu0 %v485
      %v616 = vpop.f32.mrb[0].mxu0
      %v617 = vadd.f32 %v424, %v616
      %v618 = vpop.f32.mrb[0].mxu0
      %619 = vmatprep.mubr.f32.mxu0 0.0
      %620 = vmatmul.mubr.f32.gmra.mrb[0].mxu0 %v488
      %v621 = vpop.f32.mrb[0].mxu0
      %v622 = vadd.f32 %v429, %v621
      %v623 = vpop.f32.mrb[0].mxu0
      %624 = vmatprep.mubr.f32.mxu0 0.0
      %625 = vmatmul.mubr.f32.gmra.mrb[0].mxu0 %v491
      %v626 = vpop.f32.mrb[0].mxu0
      %v627 = vadd.f32 %v434, %v626
      %v628 = vpop.f32.mrb[0].mxu0
      %629 = vmatprep.mubr.f32.mxu0 0.0
      %630 = vmatmul.mubr.f32.gmra.mrb[0].mxu0 %v494
      %v631 = vpop.f32.mrb[0].mxu0
      %v632 = vadd.f32 %v439, %v631
      %v633 = vpop.f32.mrb[0].mxu0
      %634 = vmatprep.mubr.f32.mxu0 0.0
      %635 = vmatmul.mubr.f32.gmra.mrb[0].mxu0 %v497
      %v636 = vpop.f32.mrb[0].mxu0
      %v637 = vadd.f32 %v444, %v636
      %v638 = vpop.f32.mrb[0].mxu0
      %639 = vmatprep.mubr.f32.mxu0 0.0
      %640 = vmatmul.mubr.f32.gmra.mrb[0].mxu0 %v500
      %v641 = vpop.f32.mrb[0].mxu0
      %v642 = vadd.f32 %v449, %v641
      %v643 = vpop.f32.mrb[0].mxu0
      %644 = vmatprep.mubr.f32.mxu0 0.0
      %645 = vmatmul.mubr.f32.gmra.mrb[0].mxu0 %v503
      %v646 = vpop.f32.mrb[0].mxu0
      %v647 = vadd.f32 %v454, %v646
      %v648 = vpop.f32.mrb[0].mxu0
      %649 = vdwg.mxu0
      %v650 = vld [vmem:[%s3] sm:$0x1]
      %v652 = vlaneseq
      %v653 = vshrl.u32 %v652, 7
      %v654 = vsub.s32 0, %v653
      %v655 = vrot.slane %v650, %v654
      %v657 = vadd.f32 %v572, %v655
      %v658 = vadd.f32 %v577, %v655
      %v659 = vadd.f32 %v582, %v655
      %v660 = vadd.f32 %v587, %v655
      %v661 = vadd.f32 %v592, %v655
      %v662 = vadd.f32 %v597, %v655
      %v663 = vadd.f32 %v602, %v655
      %v664 = vadd.f32 %v607, %v655
      %v665 = vadd.f32 %v612, %v655
      %v666 = vadd.f32 %v617, %v655
      %v667 = vadd.f32 %v622, %v655
      %v668 = vadd.f32 %v627, %v655
      %v669 = vadd.f32 %v632, %v655
      %v670 = vadd.f32 %v637, %v655
      %v671 = vadd.f32 %v642, %v655
      %v672 = vadd.f32 %v647, %v655
      %v673 = vmul.f32 %v657, -10.0
      %v674 = vmul.f32 %v658, -10.0
      %v675 = vmul.f32 %v659, -10.0
      %v676 = vmul.f32 %v660, -10.0
      %v677 = vmul.f32 %v661, -10.0
      %v678 = vmul.f32 %v662, -10.0
      %v679 = vmul.f32 %v663, -10.0
      %v680 = vmul.f32 %v664, -10.0
      %v681 = vmul.f32 %v665, -10.0
      %v682 = vmul.f32 %v666, -10.0
      %v683 = vmul.f32 %v667, -10.0
      %v684 = vmul.f32 %v668, -10.0
      %v685 = vmul.f32 %v669, -10.0
      %v686 = vmul.f32 %v670, -10.0
      %v687 = vmul.f32 %v671, -10.0
      %v688 = vmul.f32 %v672, -10.0
      %v689 = vmul.f32 %v657, %v657
      %v690 = vmul.f32 %v658, %v658
      %v691 = vmul.f32 %v659, %v659
      %v692 = vmul.f32 %v660, %v660
      %v693 = vmul.f32 %v661, %v661
      %v694 = vmul.f32 %v662, %v662
      %v695 = vmul.f32 %v663, %v663
      %v696 = vmul.f32 %v664, %v664
      %v697 = vmul.f32 %v665, %v665
      %v698 = vmul.f32 %v666, %v666
      %v699 = vmul.f32 %v667, %v667
      %v700 = vmul.f32 %v668, %v668
      %v701 = vmul.f32 %v669, %v669
      %v702 = vmul.f32 %v670, %v670
      %v703 = vmul.f32 %v671, %v671
      %v704 = vmul.f32 %v672, %v672
      %721 = vrot.lane.b32.xlu0 %v689, 96
      %v722 = vpop.permute.xlu0 %721
      %723 = vrot.lane.b32.xlu0 %v690, 96
      %v724 = vpop.permute.xlu0 %723
      %725 = vrot.lane.b32.xlu0 %v691, 96
      %v726 = vpop.permute.xlu0 %725
      %727 = vrot.lane.b32.xlu0 %v692, 96
      %v728 = vpop.permute.xlu0 %727
      %729 = vrot.lane.b32.xlu0 %v693, 96
      %v730 = vpop.permute.xlu0 %729
      %731 = vrot.lane.b32.xlu0 %v694, 96
      %v732 = vpop.permute.xlu0 %731
      %733 = vrot.lane.b32.xlu0 %v695, 96
      %v734 = vpop.permute.xlu0 %733
      %735 = vrot.lane.b32.xlu0 %v696, 96
      %v736 = vpop.permute.xlu0 %735
      %737 = vrot.lane.b32.xlu0 %v697, 96
      %v738 = vpop.permute.xlu0 %737
      %739 = vrot.lane.b32.xlu0 %v698, 96
      %v740 = vpop.permute.xlu0 %739
      %741 = vrot.lane.b32.xlu0 %v699, 96
      %v742 = vpop.permute.xlu0 %741
      %743 = vrot.lane.b32.xlu0 %v700, 96
      %v744 = vpop.permute.xlu0 %743
      %745 = vrot.lane.b32.xlu0 %v701, 96
      %v746 = vpop.permute.xlu0 %745
      %747 = vrot.lane.b32.xlu0 %v702, 96
      %v748 = vpop.permute.xlu0 %747
      %749 = vrot.lane.b32.xlu0 %v703, 96
      %v750 = vpop.permute.xlu0 %749
      %751 = vrot.lane.b32.xlu0 %v704, 96
      %v752 = vpop.permute.xlu0 %751
      %v769 = vadd.f32 %v689, %v722
      %v770 = vadd.f32 %v690, %v724
      %v771 = vadd.f32 %v691, %v726
      %v772 = vadd.f32 %v692, %v728
      %v773 = vadd.f32 %v693, %v730
      %v774 = vadd.f32 %v694, %v732
      %v775 = vadd.f32 %v695, %v734
      %v776 = vadd.f32 %v696, %v736
      %v777 = vadd.f32 %v697, %v738
      %v778 = vadd.f32 %v698, %v740
      %v779 = vadd.f32 %v699, %v742
      %v780 = vadd.f32 %v700, %v744
      %v781 = vadd.f32 %v701, %v746
      %v782 = vadd.f32 %v702, %v748
      %v783 = vadd.f32 %v703, %v750
      %v784 = vadd.f32 %v704, %v752
      %v785 = vmul.f32 %v769, 1600.0
      %v786 = vmul.f32 %v770, 1600.0
      %v787 = vmul.f32 %v771, 1600.0
      %v788 = vmul.f32 %v772, 1600.0
      %v789 = vmul.f32 %v773, 1600.0
      %v790 = vmul.f32 %v774, 1600.0
      %v791 = vmul.f32 %v775, 1600.0
      %v792 = vmul.f32 %v776, 1600.0
      %v793 = vmul.f32 %v777, 1600.0
      %v794 = vmul.f32 %v778, 1600.0
      %v795 = vmul.f32 %v779, 1600.0
      %v796 = vmul.f32 %v780, 1600.0
      %v797 = vmul.f32 %v781, 1600.0
      %v798 = vmul.f32 %v782, 1600.0
      %v799 = vmul.f32 %v783, 1600.0
      %v800 = vmul.f32 %v784, 1600.0
      %817 = vrot.lane.b32.xlu0 %v785, 32
      %v818 = vpop.permute.xlu0 %817
      %819 = vrot.lane.b32.xlu0 %v786, 32
      %v820 = vpop.permute.xlu0 %819
      %821 = vrot.lane.b32.xlu0 %v787, 32
      %v822 = vpop.permute.xlu0 %821
      %823 = vrot.lane.b32.xlu0 %v788, 32
      %v824 = vpop.permute.xlu0 %823
      %825 = vrot.lane.b32.xlu0 %v789, 32
      %v826 = vpop.permute.xlu0 %825
      %827 = vrot.lane.b32.xlu0 %v790, 32
      %v828 = vpop.permute.xlu0 %827
      %829 = vrot.lane.b32.xlu0 %v791, 32
      %v830 = vpop.permute.xlu0 %829
      %831 = vrot.lane.b32.xlu0 %v792, 32
      %v832 = vpop.permute.xlu0 %831
      %833 = vrot.lane.b32.xlu0 %v793, 32
      %v834 = vpop.permute.xlu0 %833
      %835 = vrot.lane.b32.xlu0 %v794, 32
      %v836 = vpop.permute.xlu0 %835
      %837 = vrot.lane.b32.xlu0 %v795, 32
      %v838 = vpop.permute.xlu0 %837
      %839 = vrot.lane.b32.xlu0 %v796, 32
      %v840 = vpop.permute.xlu0 %839
      %841 = vrot.lane.b32.xlu0 %v797, 32
      %v842 = vpop.permute.xlu0 %841
      %843 = vrot.lane.b32.xlu0 %v798, 32
      %v844 = vpop.permute.xlu0 %843
      %845 = vrot.lane.b32.xlu0 %v799, 32
      %v846 = vpop.permute.xlu0 %845
      %847 = vrot.lane.b32.xlu0 %v800, 32
      %v848 = vpop.permute.xlu0 %847
      %v865 = vsub.f32 %v673, %v818
      %v866 = vsub.f32 %v674, %v820
      %v867 = vsub.f32 %v675, %v822
      %v868 = vsub.f32 %v676, %v824
      %v869 = vsub.f32 %v677, %v826
      %v870 = vsub.f32 %v678, %v828
      %v871 = vsub.f32 %v679, %v830
      %v872 = vsub.f32 %v680, %v832
      %v873 = vsub.f32 %v681, %v834
      %v874 = vsub.f32 %v682, %v836
      %v875 = vsub.f32 %v683, %v838
      %v876 = vsub.f32 %v684, %v840
      %v877 = vsub.f32 %v685, %v842
      %v878 = vsub.f32 %v686, %v844
      %v879 = vsub.f32 %v687, %v846
      %v880 = vsub.f32 %v688, %v848
      %v881 = vmul.f32 %v657, 10.0
      %v882 = vmul.f32 %v658, 10.0
      %v883 = vmul.f32 %v659, 10.0
      %v884 = vmul.f32 %v660, 10.0
      %v885 = vmul.f32 %v661, 10.0
      %v886 = vmul.f32 %v662, 10.0
      %v887 = vmul.f32 %v663, 10.0
      %v888 = vmul.f32 %v664, 10.0
      %v889 = vmul.f32 %v665, 10.0
      %v890 = vmul.f32 %v666, 10.0
      %v891 = vmul.f32 %v667, 10.0
      %v892 = vmul.f32 %v668, 10.0
      %v893 = vmul.f32 %v669, 10.0
      %v894 = vmul.f32 %v670, 10.0
      %v895 = vmul.f32 %v671, 10.0
      %v896 = vmul.f32 %v672, 10.0
      %v897 = vmul.f32 %v865, 1.442695
      %v898 = vpow.pop %v897
      %v899 = vmul.f32 %v866, 1.442695
      %v900 = vpow.pop %v899
      %v901 = vmul.f32 %v867, 1.442695
      %v902 = vpow.pop %v901
      %v903 = vmul.f32 %v868, 1.442695
      %v904 = vpow.pop %v903
      %v905 = vmul.f32 %v869, 1.442695
      %v906 = vpow.pop %v905
      %v907 = vmul.f32 %v870, 1.442695
      %v908 = vpow.pop %v907
      %v909 = vmul.f32 %v871, 1.442695
      %v910 = vpow.pop %v909
      %v911 = vmul.f32 %v872, 1.442695
      %v912 = vpow.pop %v911
      %v913 = vmul.f32 %v873, 1.442695
      %v914 = vpow.pop %v913
      %v915 = vmul.f32 %v874, 1.442695
      %v916 = vpow.pop %v915
      %v917 = vmul.f32 %v875, 1.442695
      %v918 = vpow.pop %v917
      %v919 = vmul.f32 %v876, 1.442695
      %v920 = vpow.pop %v919
      %v921 = vmul.f32 %v877, 1.442695
      %v922 = vpow.pop %v921
      %v923 = vmul.f32 %v878, 1.442695
      %v924 = vpow.pop %v923
      %v925 = vmul.f32 %v879, 1.442695
      %v926 = vpow.pop %v925
      %v927 = vmul.f32 %v880, 1.442695
      %v928 = vpow.pop %v927
      %v929 = vand.u32 2147483647, %v881
      %vm930 = vcmp.le.f32.partialorder %v929, 0.7853982
      %vm931 = vcmp.lt.s32.totalorder %v881, 0
      %v932 = vand.u32 %v881, 2139095040
      %v933 = vshrl.u32 %v932, 23
      %v934 = vsub.s32 %v933, 127
      %v935 = vand.u32 2147483647, %v881
      %v936 = vand.u32 %v935, 8388607
      %v937 = vor.u32 %v936, 8388608
      %v938 = vsub.s32 0, %v937
      %v939 = vadd.s32 %v934, 1
      %vm940 = vcmp.gt.s32.totalorder %v939, 0
      %v941 = vsel %vm940, %v939, 0
      %v942 = vshrl.u32 %v941, 5
      %v943 = vand.u32 %v941, 31
      %v944 = vsub.s32 32, %v943
      %v945 = vshrl.u32 683565275, %v944
      %v946 = vshll.u32 683565275, %v943
      %v947 = vshrl.u32 2475754826, %v944
      %v948 = vor.u32 %v946, %v947
      %v949 = vshll.u32 2475754826, %v943
      %v950 = vshrl.u32 2131351028, %v944
      %v951 = vor.u32 %v949, %v950
      %v952 = vshll.u32 2131351028, %v943
      %v953 = vshrl.u32 2102212464, %v944
      %v954 = vor.u32 %v952, %v953
      %v955 = vshll.u32 2102212464, %v943
      %v956 = vshrl.u32 920167782, %v944
      %v957 = vor.u32 %v955, %v956
      %v958 = vshll.u32 920167782, %v943
      %v959 = vshrl.u32 1326507024, %v944
      %v960 = vor.u32 %v958, %v959
      %vm961 = vcmp.lt.s32.totalorder %v942, 1
      %vm962 = vcmp.lt.s32.totalorder %v942, 2
      %vm963 = vcmp.lt.s32.totalorder %v942, 3
      %vm964 = vcmp.lt.s32.totalorder %v942, 4
      %v965 = vsel %vm961, %v945, %v948
      %v966 = vsel %vm964, %v954, 2102212464
      %v967 = vsel %vm963, %v951, %v966
      %v968 = vsel %vm962, %v965, %v967
      %v969 = vsel %vm961, %v948, %v951
      %v970 = vsel %vm964, %v957, 920167782
      %v971 = vsel %vm963, %v954, %v970
      %v972 = vsel %vm962, %v969, %v971
      %v973 = vsel %vm961, %v951, %v954
      %v974 = vsel %vm964, %v960, 1326507024
      %v975 = vsel %vm963, %v957, %v974
      %v976 = vsel %vm962, %v973, %v975
      %v977 = vshll.u32 %v937, 8
      %v978 = vmul.u32.u64.compose %v977, %v976
      %v979 = vextract.low.u32 %v978
      %v980 = vextract.high.u32 %v978
      %v981 = vmul.u32.u64.compose %v977, %v972
      %v982 = vextract.low.u32 %v981
      %v983 = vextract.high.u32 %v981
      %v984 = vmul.u32 %v977, %v968
      %v985 = vadd.s32 %v980, %v982
      %vm986 = vc.u32 %v980, %v982
      %v987 = vadd.s32 %v983, 1
      %v988 = vsel %vm986, %v987, %v983
      %v989 = vadd.s32 %v984, %v988
      %v990 = vadd.s32 %v989, 536870912
      %v991 = vshrl.u32 %v990, 30
      %v992 = vshll.u32 %v991, 30
      %v993 = vsub.s32 %v989, %v992
      %vm994 = vcmp.lt.s32.totalorder %v993, 0
      %v995 = vsub.s32 0, %v993
      %v996 = vsel %vm994, %v995, %v993
      %v997 = vclz %v996
      %v998 = vsub.s32 %v997, 2
      %vm999 = vcmp.gt.s32.totalorder 0, %v998
      %v1000 = vsel %vm999, 0, %v998
      %v1001 = vsub.s32 32, %v1000
      %v1002 = vshll.u32 %v993, %v1000
      %v1003 = vshrl.u32 %v985, %v1001
      %v1004 = vor.u32 %v1002, %v1003
      %v1005 = vsub.s32 4294967266, %v1000
      %v1006 = vadd.s32 %v1005, 127
      %v1007 = vshll.u32 %v1006, 23
      %v1008 = vor.u32 4788187, %v1007
      %v1009 = vand.u32 2147483647, %v1008
      %v1011 = vcvt.s32.f32 %v1004
      %v1012 = vmul.f32 %v1011, %v1009
      %v1013 = vxor.u32 %v1012, 2147483648
      %v1014 = vsel %vm931, %v1013, %v1012
      %v1015 = vsub.s32 4, %v991
      %v1016 = vsel %vm931, %v1015, %v991
      %v1017 = vsel %vm930, %v881, %v1014
      %v1018 = vsel %vm930, 0, %v1016
      %v1019 = vcosq.f32.pop %v1017
      %v1020 = vsinq.f32.pop %v1017
      %vm1021 = vweird.f32 %v881
      %v1022 = vand.u32 %v1018, 3
      %vm1023 = vcmp.lt.s32.totalorder %v1022, 2
      %vm1024 = vcmp.eq.s32.totalorder %v1022, 0
      %v1025 = vxor.u32 %v1020, 2147483648
      %v1026 = vsel %vm1024, %v1019, %v1025
      %vm1027 = vcmp.eq.s32.totalorder %v1022, 2
      %v1028 = vxor.u32 %v1019, 2147483648
      %v1029 = vsel %vm1027, %v1028, %v1020
      %v1030 = vsel %vm1023, %v1026, %v1029
      %v1031 = vsel %vm1021, nan, %v1030
      %v1032 = vand.u32 2147483647, %v882
      %vm1033 = vcmp.le.f32.partialorder %v1032, 0.7853982
      %vm1034 = vcmp.lt.s32.totalorder %v882, 0
      %v1035 = vand.u32 %v882, 2139095040
      %v1036 = vshrl.u32 %v1035, 23
      %v1037 = vsub.s32 %v1036, 127
      %v1038 = vand.u32 2147483647, %v882
      %v1039 = vand.u32 %v1038, 8388607
      %v1040 = vor.u32 %v1039, 8388608
      %v1041 = vsub.s32 0, %v1040
      %v1042 = vadd.s32 %v1037, 1
      %vm1043 = vcmp.gt.s32.totalorder %v1042, 0
      %v1044 = vsel %vm1043, %v1042, 0
      %v1045 = vshrl.u32 %v1044, 5
      %v1046 = vand.u32 %v1044, 31
      %v1047 = vsub.s32 32, %v1046
      %v1048 = vshrl.u32 683565275, %v1047
      %v1049 = vshll.u32 683565275, %v1046
      %v1050 = vshrl.u32 2475754826, %v1047
      %v1051 = vor.u32 %v1049, %v1050
      %v1052 = vshll.u32 2475754826, %v1046
      %v1053 = vshrl.u32 2131351028, %v1047
      %v1054 = vor.u32 %v1052, %v1053
      %v1055 = vshll.u32 2131351028, %v1046
      %v1056 = vshrl.u32 2102212464, %v1047
      %v1057 = vor.u32 %v1055, %v1056
      %v1058 = vshll.u32 2102212464, %v1046
      %v1059 = vshrl.u32 920167782, %v1047
      %v1060 = vor.u32 %v1058, %v1059
      %v1061 = vshll.u32 920167782, %v1046
      %v1062 = vshrl.u32 1326507024, %v1047
      %v1063 = vor.u32 %v1061, %v1062
      %vm1064 = vcmp.lt.s32.totalorder %v1045, 1
      %vm1065 = vcmp.lt.s32.totalorder %v1045, 2
      %vm1066 = vcmp.lt.s32.totalorder %v1045, 3
      %vm1067 = vcmp.lt.s32.totalorder %v1045, 4
      %v1068 = vsel %vm1064, %v1048, %v1051
      %v1069 = vsel %vm1067, %v1057, 2102212464
      %v1070 = vsel %vm1066, %v1054, %v1069
      %v1071 = vsel %vm1065, %v1068, %v1070
      %v1072 = vsel %vm1064, %v1051, %v1054
      %v1073 = vsel %vm1067, %v1060, 920167782
      %v1074 = vsel %vm1066, %v1057, %v1073
      %v1075 = vsel %vm1065, %v1072, %v1074
      %v1076 = vsel %vm1064, %v1054, %v1057
      %v1077 = vsel %vm1067, %v1063, 1326507024
      %v1078 = vsel %vm1066, %v1060, %v1077
      %v1079 = vsel %vm1065, %v1076, %v1078
      %v1080 = vshll.u32 %v1040, 8
      %v1081 = vmul.u32.u64.compose %v1080, %v1079
      %v1082 = vextract.low.u32 %v1081
      %v1083 = vextract.high.u32 %v1081
      %v1084 = vmul.u32.u64.compose %v1080, %v1075
      %v1085 = vextract.low.u32 %v1084
      %v1086 = vextract.high.u32 %v1084
      %v1087 = vmul.u32 %v1080, %v1071
      %v1088 = vadd.s32 %v1083, %v1085
      %vm1089 = vc.u32 %v1083, %v1085
      %v1090 = vadd.s32 %v1086, 1
      %v1091 = vsel %vm1089, %v1090, %v1086
      %v1092 = vadd.s32 %v1087, %v1091
      %v1093 = vadd.s32 %v1092, 536870912
      %v1094 = vshrl.u32 %v1093, 30
      %v1095 = vshll.u32 %v1094, 30
      %v1096 = vsub.s32 %v1092, %v1095
      %vm1097 = vcmp.lt.s32.totalorder %v1096, 0
      %v1098 = vsub.s32 0, %v1096
      %v1099 = vsel %vm1097, %v1098, %v1096
      %v1100 = vclz %v1099
      %v1101 = vsub.s32 %v1100, 2
      %vm1102 = vcmp.gt.s32.totalorder 0, %v1101
      %v1103 = vsel %vm1102, 0, %v1101
      %v1104 = vsub.s32 32, %v1103
      %v1105 = vshll.u32 %v1096, %v1103
      %v1106 = vshrl.u32 %v1088, %v1104
      %v1107 = vor.u32 %v1105, %v1106
      %v1108 = vsub.s32 4294967266, %v1103
      %v1109 = vadd.s32 %v1108, 127
      %v1110 = vshll.u32 %v1109, 23
      %v1111 = vor.u32 4788187, %v1110
      %v1112 = vand.u32 2147483647, %v1111
      %v1114 = vcvt.s32.f32 %v1107
      %v1115 = vmul.f32 %v1114, %v1112
      %v1116 = vxor.u32 %v1115, 2147483648
      %v1117 = vsel %vm1034, %v1116, %v1115
      %v1118 = vsub.s32 4, %v1094
      %v1119 = vsel %vm1034, %v1118, %v1094
      %v1120 = vsel %vm1033, %v882, %v1117
      %v1121 = vsel %vm1033, 0, %v1119
      %v1122 = vcosq.f32.pop %v1120
      %v1123 = vsinq.f32.pop %v1120
      %vm1124 = vweird.f32 %v882
      %v1125 = vand.u32 %v1121, 3
      %vm1126 = vcmp.lt.s32.totalorder %v1125, 2
      %vm1127 = vcmp.eq.s32.totalorder %v1125, 0
      %v1128 = vxor.u32 %v1123, 2147483648
      %v1129 = vsel %vm1127, %v1122, %v1128
      %vm1130 = vcmp.eq.s32.totalorder %v1125, 2
      %v1131 = vxor.u32 %v1122, 2147483648
      %v1132 = vsel %vm1130, %v1131, %v1123
      %v1133 = vsel %vm1126, %v1129, %v1132
      %v1134 = vsel %vm1124, nan, %v1133
      %v1135 = vand.u32 2147483647, %v883
      %vm1136 = vcmp.le.f32.partialorder %v1135, 0.7853982
      %vm1137 = vcmp.lt.s32.totalorder %v883, 0
      %v1138 = vand.u32 %v883, 2139095040
      %v1139 = vshrl.u32 %v1138, 23
      %v1140 = vsub.s32 %v1139, 127
      %v1141 = vand.u32 2147483647, %v883
      %v1142 = vand.u32 %v1141, 8388607
      %v1143 = vor.u32 %v1142, 8388608
      %v1144 = vsub.s32 0, %v1143
      %v1145 = vadd.s32 %v1140, 1
      %vm1146 = vcmp.gt.s32.totalorder %v1145, 0
      %v1147 = vsel %vm1146, %v1145, 0
      %v1148 = vshrl.u32 %v1147, 5
      %v1149 = vand.u32 %v1147, 31
      %v1150 = vsub.s32 32, %v1149
      %v1151 = vshrl.u32 683565275, %v1150
      %v1152 = vshll.u32 683565275, %v1149
      %v1153 = vshrl.u32 2475754826, %v1150
      %v1154 = vor.u32 %v1152, %v1153
      %v1155 = vshll.u32 2475754826, %v1149
      %v1156 = vshrl.u32 2131351028, %v1150
      %v1157 = vor.u32 %v1155, %v1156
      %v1158 = vshll.u32 2131351028, %v1149
      %v1159 = vshrl.u32 2102212464, %v1150
      %v1160 = vor.u32 %v1158, %v1159
      %v1161 = vshll.u32 2102212464, %v1149
      %v1162 = vshrl.u32 920167782, %v1150
      %v1163 = vor.u32 %v1161, %v1162
      %v1164 = vshll.u32 920167782, %v1149
      %v1165 = vshrl.u32 1326507024, %v1150
      %v1166 = vor.u32 %v1164, %v1165
      %vm1167 = vcmp.lt.s32.totalorder %v1148, 1
      %vm1168 = vcmp.lt.s32.totalorder %v1148, 2
      %vm1169 = vcmp.lt.s32.totalorder %v1148, 3
      %vm1170 = vcmp.lt.s32.totalorder %v1148, 4
      %v1171 = vsel %vm1167, %v1151, %v1154
      %v1172 = vsel %vm1170, %v1160, 2102212464
      %v1173 = vsel %vm1169, %v1157, %v1172
      %v1174 = vsel %vm1168, %v1171, %v1173
      %v1175 = vsel %vm1167, %v1154, %v1157
      %v1176 = vsel %vm1170, %v1163, 920167782
      %v1177 = vsel %vm1169, %v1160, %v1176
      %v1178 = vsel %vm1168, %v1175, %v1177
      %v1179 = vsel %vm1167, %v1157, %v1160
      %v1180 = vsel %vm1170, %v1166, 1326507024
      %v1181 = vsel %vm1169, %v1163, %v1180
      %v1182 = vsel %vm1168, %v1179, %v1181
      %v1183 = vshll.u32 %v1143, 8
      %v1184 = vmul.u32.u64.compose %v1183, %v1182
      %v1185 = vextract.low.u32 %v1184
      %v1186 = vextract.high.u32 %v1184
      %v1187 = vmul.u32.u64.compose %v1183, %v1178
      %v1188 = vextract.low.u32 %v1187
      %v1189 = vextract.high.u32 %v1187
      %v1190 = vmul.u32 %v1183, %v1174
      %v1191 = vadd.s32 %v1186, %v1188
      %vm1192 = vc.u32 %v1186, %v1188
      %v1193 = vadd.s32 %v1189, 1
      %v1194 = vsel %vm1192, %v1193, %v1189
      %v1195 = vadd.s32 %v1190, %v1194
      %v1196 = vadd.s32 %v1195, 536870912
      %v1197 = vshrl.u32 %v1196, 30
      %v1198 = vshll.u32 %v1197, 30
      %v1199 = vsub.s32 %v1195, %v1198
      %vm1200 = vcmp.lt.s32.totalorder %v1199, 0
      %v1201 = vsub.s32 0, %v1199
      %v1202 = vsel %vm1200, %v1201, %v1199
      %v1203 = vclz %v1202
      %v1204 = vsub.s32 %v1203, 2
      %vm1205 = vcmp.gt.s32.totalorder 0, %v1204
      %v1206 = vsel %vm1205, 0, %v1204
      %v1207 = vsub.s32 32, %v1206
      %v1208 = vshll.u32 %v1199, %v1206
      %v1209 = vshrl.u32 %v1191, %v1207
      %v1210 = vor.u32 %v1208, %v1209
      %v1211 = vsub.s32 4294967266, %v1206
      %v1212 = vadd.s32 %v1211, 127
      %v1213 = vshll.u32 %v1212, 23
      %v1214 = vor.u32 4788187, %v1213
      %v1215 = vand.u32 2147483647, %v1214
      %v1217 = vcvt.s32.f32 %v1210
      %v1218 = vmul.f32 %v1217, %v1215
      %v1219 = vxor.u32 %v1218, 2147483648
      %v1220 = vsel %vm1137, %v1219, %v1218
      %v1221 = vsub.s32 4, %v1197
      %v1222 = vsel %vm1137, %v1221, %v1197
      %v1223 = vsel %vm1136, %v883, %v1220
      %v1224 = vsel %vm1136, 0, %v1222
      %v1225 = vcosq.f32.pop %v1223
      %v1226 = vsinq.f32.pop %v1223
      %vm1227 = vweird.f32 %v883
      %v1228 = vand.u32 %v1224, 3
      %vm1229 = vcmp.lt.s32.totalorder %v1228, 2
      %vm1230 = vcmp.eq.s32.totalorder %v1228, 0
      %v1231 = vxor.u32 %v1226, 2147483648
      %v1232 = vsel %vm1230, %v1225, %v1231
      %vm1233 = vcmp.eq.s32.totalorder %v1228, 2
      %v1234 = vxor.u32 %v1225, 2147483648
      %v1235 = vsel %vm1233, %v1234, %v1226
      %v1236 = vsel %vm1229, %v1232, %v1235
      %v1237 = vsel %vm1227, nan, %v1236
      %v1238 = vand.u32 2147483647, %v884
      %vm1239 = vcmp.le.f32.partialorder %v1238, 0.7853982
      %vm1240 = vcmp.lt.s32.totalorder %v884, 0
      %v1241 = vand.u32 %v884, 2139095040
      %v1242 = vshrl.u32 %v1241, 23
      %v1243 = vsub.s32 %v1242, 127
      %v1244 = vand.u32 2147483647, %v884
      %v1245 = vand.u32 %v1244, 8388607
      %v1246 = vor.u32 %v1245, 8388608
      %v1247 = vsub.s32 0, %v1246
      %v1248 = vadd.s32 %v1243, 1
      %vm1249 = vcmp.gt.s32.totalorder %v1248, 0
      %v1250 = vsel %vm1249, %v1248, 0
      %v1251 = vshrl.u32 %v1250, 5
      %v1252 = vand.u32 %v1250, 31
      %v1253 = vsub.s32 32, %v1252
      %v1254 = vshrl.u32 683565275, %v1253
      %v1255 = vshll.u32 683565275, %v1252
      %v1256 = vshrl.u32 2475754826, %v1253
      %v1257 = vor.u32 %v1255, %v1256
      %v1258 = vshll.u32 2475754826, %v1252
      %v1259 = vshrl.u32 2131351028, %v1253
      %v1260 = vor.u32 %v1258, %v1259
      %v1261 = vshll.u32 2131351028, %v1252
      %v1262 = vshrl.u32 2102212464, %v1253
      %v1263 = vor.u32 %v1261, %v1262
      %v1264 = vshll.u32 2102212464, %v1252
      %v1265 = vshrl.u32 920167782, %v1253
      %v1266 = vor.u32 %v1264, %v1265
      %v1267 = vshll.u32 920167782, %v1252
      %v1268 = vshrl.u32 1326507024, %v1253
      %v1269 = vor.u32 %v1267, %v1268
      %vm1270 = vcmp.lt.s32.totalorder %v1251, 1
      %vm1271 = vcmp.lt.s32.totalorder %v1251, 2
      %vm1272 = vcmp.lt.s32.totalorder %v1251, 3
      %vm1273 = vcmp.lt.s32.totalorder %v1251, 4
      %v1274 = vsel %vm1270, %v1254, %v1257
      %v1275 = vsel %vm1273, %v1263, 2102212464
      %v1276 = vsel %vm1272, %v1260, %v1275
      %v1277 = vsel %vm1271, %v1274, %v1276
      %v1278 = vsel %vm1270, %v1257, %v1260
      %v1279 = vsel %vm1273, %v1266, 920167782
      %v1280 = vsel %vm1272, %v1263, %v1279
      %v1281 = vsel %vm1271, %v1278, %v1280
      %v1282 = vsel %vm1270, %v1260, %v1263
      %v1283 = vsel %vm1273, %v1269, 1326507024
      %v1284 = vsel %vm1272, %v1266, %v1283
      %v1285 = vsel %vm1271, %v1282, %v1284
      %v1286 = vshll.u32 %v1246, 8
      %v1287 = vmul.u32.u64.compose %v1286, %v1285
      %v1288 = vextract.low.u32 %v1287
      %v1289 = vextract.high.u32 %v1287
      %v1290 = vmul.u32.u64.compose %v1286, %v1281
      %v1291 = vextract.low.u32 %v1290
      %v1292 = vextract.high.u32 %v1290
      %v1293 = vmul.u32 %v1286, %v1277
      %v1294 = vadd.s32 %v1289, %v1291
      %vm1295 = vc.u32 %v1289, %v1291
      %v1296 = vadd.s32 %v1292, 1
      %v1297 = vsel %vm1295, %v1296, %v1292
      %v1298 = vadd.s32 %v1293, %v1297
      %v1299 = vadd.s32 %v1298, 536870912
      %v1300 = vshrl.u32 %v1299, 30
      %v1301 = vshll.u32 %v1300, 30
      %v1302 = vsub.s32 %v1298, %v1301
      %vm1303 = vcmp.lt.s32.totalorder %v1302, 0
      %v1304 = vsub.s32 0, %v1302
      %v1305 = vsel %vm1303, %v1304, %v1302
      %v1306 = vclz %v1305
      %v1307 = vsub.s32 %v1306, 2
      %vm1308 = vcmp.gt.s32.totalorder 0, %v1307
      %v1309 = vsel %vm1308, 0, %v1307
      %v1310 = vsub.s32 32, %v1309
      %v1311 = vshll.u32 %v1302, %v1309
      %v1312 = vshrl.u32 %v1294, %v1310
      %v1313 = vor.u32 %v1311, %v1312
      %v1314 = vsub.s32 4294967266, %v1309
      %v1315 = vadd.s32 %v1314, 127
      %v1316 = vshll.u32 %v1315, 23
      %v1317 = vor.u32 4788187, %v1316
      %v1318 = vand.u32 2147483647, %v1317
      %v1320 = vcvt.s32.f32 %v1313
      %v1321 = vmul.f32 %v1320, %v1318
      %v1322 = vxor.u32 %v1321, 2147483648
      %v1323 = vsel %vm1240, %v1322, %v1321
      %v1324 = vsub.s32 4, %v1300
      %v1325 = vsel %vm1240, %v1324, %v1300
      %v1326 = vsel %vm1239, %v884, %v1323
      %v1327 = vsel %vm1239, 0, %v1325
      %v1328 = vcosq.f32.pop %v1326
      %v1329 = vsinq.f32.pop %v1326
      %vm1330 = vweird.f32 %v884
      %v1331 = vand.u32 %v1327, 3
      %vm1332 = vcmp.lt.s32.totalorder %v1331, 2
      %vm1333 = vcmp.eq.s32.totalorder %v1331, 0
      %v1334 = vxor.u32 %v1329, 2147483648
      %v1335 = vsel %vm1333, %v1328, %v1334
      %vm1336 = vcmp.eq.s32.totalorder %v1331, 2
      %v1337 = vxor.u32 %v1328, 2147483648
      %v1338 = vsel %vm1336, %v1337, %v1329
      %v1339 = vsel %vm1332, %v1335, %v1338
      %v1340 = vsel %vm1330, nan, %v1339
      %v1341 = vand.u32 2147483647, %v885
      %vm1342 = vcmp.le.f32.partialorder %v1341, 0.7853982
      %vm1343 = vcmp.lt.s32.totalorder %v885, 0
      %v1344 = vand.u32 %v885, 2139095040
      %v1345 = vshrl.u32 %v1344, 23
      %v1346 = vsub.s32 %v1345, 127
      %v1347 = vand.u32 2147483647, %v885
      %v1348 = vand.u32 %v1347, 8388607
      %v1349 = vor.u32 %v1348, 8388608
      %v1350 = vsub.s32 0, %v1349
      %v1351 = vadd.s32 %v1346, 1
      %vm1352 = vcmp.gt.s32.totalorder %v1351, 0
      %v1353 = vsel %vm1352, %v1351, 0
      %v1354 = vshrl.u32 %v1353, 5
      %v1355 = vand.u32 %v1353, 31
      %v1356 = vsub.s32 32, %v1355
      %v1357 = vshrl.u32 683565275, %v1356
      %v1358 = vshll.u32 683565275, %v1355
      %v1359 = vshrl.u32 2475754826, %v1356
      %v1360 = vor.u32 %v1358, %v1359
      %v1361 = vshll.u32 2475754826, %v1355
      %v1362 = vshrl.u32 2131351028, %v1356
      %v1363 = vor.u32 %v1361, %v1362
      %v1364 = vshll.u32 2131351028, %v1355
      %v1365 = vshrl.u32 2102212464, %v1356
      %v1366 = vor.u32 %v1364, %v1365
      %v1367 = vshll.u32 2102212464, %v1355
      %v1368 = vshrl.u32 920167782, %v1356
      %v1369 = vor.u32 %v1367, %v1368
      %v1370 = vshll.u32 920167782, %v1355
      %v1371 = vshrl.u32 1326507024, %v1356
      %v1372 = vor.u32 %v1370, %v1371
      %vm1373 = vcmp.lt.s32.totalorder %v1354, 1
      %vm1374 = vcmp.lt.s32.totalorder %v1354, 2
      %vm1375 = vcmp.lt.s32.totalorder %v1354, 3
      %vm1376 = vcmp.lt.s32.totalorder %v1354, 4
      %v1377 = vsel %vm1373, %v1357, %v1360
      %v1378 = vsel %vm1376, %v1366, 2102212464
      %v1379 = vsel %vm1375, %v1363, %v1378
      %v1380 = vsel %vm1374, %v1377, %v1379
      %v1381 = vsel %vm1373, %v1360, %v1363
      %v1382 = vsel %vm1376, %v1369, 920167782
      %v1383 = vsel %vm1375, %v1366, %v1382
      %v1384 = vsel %vm1374, %v1381, %v1383
      %v1385 = vsel %vm1373, %v1363, %v1366
      %v1386 = vsel %vm1376, %v1372, 1326507024
      %v1387 = vsel %vm1375, %v1369, %v1386
      %v1388 = vsel %vm1374, %v1385, %v1387
      %v1389 = vshll.u32 %v1349, 8
      %v1390 = vmul.u32.u64.compose %v1389, %v1388
      %v1391 = vextract.low.u32 %v1390
      %v1392 = vextract.high.u32 %v1390
      %v1393 = vmul.u32.u64.compose %v1389, %v1384
      %v1394 = vextract.low.u32 %v1393
      %v1395 = vextract.high.u32 %v1393
      %v1396 = vmul.u32 %v1389, %v1380
      %v1397 = vadd.s32 %v1392, %v1394
      %vm1398 = vc.u32 %v1392, %v1394
      %v1399 = vadd.s32 %v1395, 1
      %v1400 = vsel %vm1398, %v1399, %v1395
      %v1401 = vadd.s32 %v1396, %v1400
      %v1402 = vadd.s32 %v1401, 536870912
      %v1403 = vshrl.u32 %v1402, 30
      %v1404 = vshll.u32 %v1403, 30
      %v1405 = vsub.s32 %v1401, %v1404
      %vm1406 = vcmp.lt.s32.totalorder %v1405, 0
      %v1407 = vsub.s32 0, %v1405
      %v1408 = vsel %vm1406, %v1407, %v1405
      %v1409 = vclz %v1408
      %v1410 = vsub.s32 %v1409, 2
      %vm1411 = vcmp.gt.s32.totalorder 0, %v1410
      %v1412 = vsel %vm1411, 0, %v1410
      %v1413 = vsub.s32 32, %v1412
      %v1414 = vshll.u32 %v1405, %v1412
      %v1415 = vshrl.u32 %v1397, %v1413
      %v1416 = vor.u32 %v1414, %v1415
      %v1417 = vsub.s32 4294967266, %v1412
      %v1418 = vadd.s32 %v1417, 127
      %v1419 = vshll.u32 %v1418, 23
      %v1420 = vor.u32 4788187, %v1419
      %v1421 = vand.u32 2147483647, %v1420
      %v1423 = vcvt.s32.f32 %v1416
      %v1424 = vmul.f32 %v1423, %v1421
      %v1425 = vxor.u32 %v1424, 2147483648
      %v1426 = vsel %vm1343, %v1425, %v1424
      %v1427 = vsub.s32 4, %v1403
      %v1428 = vsel %vm1343, %v1427, %v1403
      %v1429 = vsel %vm1342, %v885, %v1426
      %v1430 = vsel %vm1342, 0, %v1428
      %v1431 = vcosq.f32.pop %v1429
      %v1432 = vsinq.f32.pop %v1429
      %vm1433 = vweird.f32 %v885
      %v1434 = vand.u32 %v1430, 3
      %vm1435 = vcmp.lt.s32.totalorder %v1434, 2
      %vm1436 = vcmp.eq.s32.totalorder %v1434, 0
      %v1437 = vxor.u32 %v1432, 2147483648
      %v1438 = vsel %vm1436, %v1431, %v1437
      %vm1439 = vcmp.eq.s32.totalorder %v1434, 2
      %v1440 = vxor.u32 %v1431, 2147483648
      %v1441 = vsel %vm1439, %v1440, %v1432
      %v1442 = vsel %vm1435, %v1438, %v1441
      %v1443 = vsel %vm1433, nan, %v1442
      %v1444 = vand.u32 2147483647, %v886
      %vm1445 = vcmp.le.f32.partialorder %v1444, 0.7853982
      %vm1446 = vcmp.lt.s32.totalorder %v886, 0
      %v1447 = vand.u32 %v886, 2139095040
      %v1448 = vshrl.u32 %v1447, 23
      %v1449 = vsub.s32 %v1448, 127
      %v1450 = vand.u32 2147483647, %v886
      %v1451 = vand.u32 %v1450, 8388607
      %v1452 = vor.u32 %v1451, 8388608
      %v1453 = vsub.s32 0, %v1452
      %v1454 = vadd.s32 %v1449, 1
      %vm1455 = vcmp.gt.s32.totalorder %v1454, 0
      %v1456 = vsel %vm1455, %v1454, 0
      %v1457 = vshrl.u32 %v1456, 5
      %v1458 = vand.u32 %v1456, 31
      %v1459 = vsub.s32 32, %v1458
      %v1460 = vshrl.u32 683565275, %v1459
      %v1461 = vshll.u32 683565275, %v1458
      %v1462 = vshrl.u32 2475754826, %v1459
      %v1463 = vor.u32 %v1461, %v1462
      %v1464 = vshll.u32 2475754826, %v1458
      %v1465 = vshrl.u32 2131351028, %v1459
      %v1466 = vor.u32 %v1464, %v1465
      %v1467 = vshll.u32 2131351028, %v1458
      %v1468 = vshrl.u32 2102212464, %v1459
      %v1469 = vor.u32 %v1467, %v1468
      %v1470 = vshll.u32 2102212464, %v1458
      %v1471 = vshrl.u32 920167782, %v1459
      %v1472 = vor.u32 %v1470, %v1471
      %v1473 = vshll.u32 920167782, %v1458
      %v1474 = vshrl.u32 1326507024, %v1459
      %v1475 = vor.u32 %v1473, %v1474
      %vm1476 = vcmp.lt.s32.totalorder %v1457, 1
      %vm1477 = vcmp.lt.s32.totalorder %v1457, 2
      %vm1478 = vcmp.lt.s32.totalorder %v1457, 3
      %vm1479 = vcmp.lt.s32.totalorder %v1457, 4
      %v1480 = vsel %vm1476, %v1460, %v1463
      %v1481 = vsel %vm1479, %v1469, 2102212464
      %v1482 = vsel %vm1478, %v1466, %v1481
      %v1483 = vsel %vm1477, %v1480, %v1482
      %v1484 = vsel %vm1476, %v1463, %v1466
      %v1485 = vsel %vm1479, %v1472, 920167782
      %v1486 = vsel %vm1478, %v1469, %v1485
      %v1487 = vsel %vm1477, %v1484, %v1486
      %v1488 = vsel %vm1476, %v1466, %v1469
      %v1489 = vsel %vm1479, %v1475, 1326507024
      %v1490 = vsel %vm1478, %v1472, %v1489
      %v1491 = vsel %vm1477, %v1488, %v1490
      %v1492 = vshll.u32 %v1452, 8
      %v1493 = vmul.u32.u64.compose %v1492, %v1491
      %v1494 = vextract.low.u32 %v1493
      %v1495 = vextract.high.u32 %v1493
      %v1496 = vmul.u32.u64.compose %v1492, %v1487
      %v1497 = vextract.low.u32 %v1496
      %v1498 = vextract.high.u32 %v1496
      %v1499 = vmul.u32 %v1492, %v1483
      %v1500 = vadd.s32 %v1495, %v1497
      %vm1501 = vc.u32 %v1495, %v1497
      %v1502 = vadd.s32 %v1498, 1
      %v1503 = vsel %vm1501, %v1502, %v1498
      %v1504 = vadd.s32 %v1499, %v1503
      %v1505 = vadd.s32 %v1504, 536870912
      %v1506 = vshrl.u32 %v1505, 30
      %v1507 = vshll.u32 %v1506, 30
      %v1508 = vsub.s32 %v1504, %v1507
      %vm1509 = vcmp.lt.s32.totalorder %v1508, 0
      %v1510 = vsub.s32 0, %v1508
      %v1511 = vsel %vm1509, %v1510, %v1508
      %v1512 = vclz %v1511
      %v1513 = vsub.s32 %v1512, 2
      %vm1514 = vcmp.gt.s32.totalorder 0, %v1513
      %v1515 = vsel %vm1514, 0, %v1513
      %v1516 = vsub.s32 32, %v1515
      %v1517 = vshll.u32 %v1508, %v1515
      %v1518 = vshrl.u32 %v1500, %v1516
      %v1519 = vor.u32 %v1517, %v1518
      %v1520 = vsub.s32 4294967266, %v1515
      %v1521 = vadd.s32 %v1520, 127
      %v1522 = vshll.u32 %v1521, 23
      %v1523 = vor.u32 4788187, %v1522
      %v1524 = vand.u32 2147483647, %v1523
      %v1526 = vcvt.s32.f32 %v1519
      %v1527 = vmul.f32 %v1526, %v1524
      %v1528 = vxor.u32 %v1527, 2147483648
      %v1529 = vsel %vm1446, %v1528, %v1527
      %v1530 = vsub.s32 4, %v1506
      %v1531 = vsel %vm1446, %v1530, %v1506
      %v1532 = vsel %vm1445, %v886, %v1529
      %v1533 = vsel %vm1445, 0, %v1531
      %v1534 = vcosq.f32.pop %v1532
      %v1535 = vsinq.f32.pop %v1532
      %vm1536 = vweird.f32 %v886
      %v1537 = vand.u32 %v1533, 3
      %vm1538 = vcmp.lt.s32.totalorder %v1537, 2
      %vm1539 = vcmp.eq.s32.totalorder %v1537, 0
      %v1540 = vxor.u32 %v1535, 2147483648
      %v1541 = vsel %vm1539, %v1534, %v1540
      %vm1542 = vcmp.eq.s32.totalorder %v1537, 2
      %v1543 = vxor.u32 %v1534, 2147483648
      %v1544 = vsel %vm1542, %v1543, %v1535
      %v1545 = vsel %vm1538, %v1541, %v1544
      %v1546 = vsel %vm1536, nan, %v1545
      %v1547 = vand.u32 2147483647, %v887
      %vm1548 = vcmp.le.f32.partialorder %v1547, 0.7853982
      %vm1549 = vcmp.lt.s32.totalorder %v887, 0
      %v1550 = vand.u32 %v887, 2139095040
      %v1551 = vshrl.u32 %v1550, 23
      %v1552 = vsub.s32 %v1551, 127
      %v1553 = vand.u32 2147483647, %v887
      %v1554 = vand.u32 %v1553, 8388607
      %v1555 = vor.u32 %v1554, 8388608
      %v1556 = vsub.s32 0, %v1555
      %v1557 = vadd.s32 %v1552, 1
      %vm1558 = vcmp.gt.s32.totalorder %v1557, 0
      %v1559 = vsel %vm1558, %v1557, 0
      %v1560 = vshrl.u32 %v1559, 5
      %v1561 = vand.u32 %v1559, 31
      %v1562 = vsub.s32 32, %v1561
      %v1563 = vshrl.u32 683565275, %v1562
      %v1564 = vshll.u32 683565275, %v1561
      %v1565 = vshrl.u32 2475754826, %v1562
      %v1566 = vor.u32 %v1564, %v1565
      %v1567 = vshll.u32 2475754826, %v1561
      %v1568 = vshrl.u32 2131351028, %v1562
      %v1569 = vor.u32 %v1567, %v1568
      %v1570 = vshll.u32 2131351028, %v1561
      %v1571 = vshrl.u32 2102212464, %v1562
      %v1572 = vor.u32 %v1570, %v1571
      %v1573 = vshll.u32 2102212464, %v1561
      %v1574 = vshrl.u32 920167782, %v1562
      %v1575 = vor.u32 %v1573, %v1574
      %v1576 = vshll.u32 920167782, %v1561
      %v1577 = vshrl.u32 1326507024, %v1562
      %v1578 = vor.u32 %v1576, %v1577
      %vm1579 = vcmp.lt.s32.totalorder %v1560, 1
      %vm1580 = vcmp.lt.s32.totalorder %v1560, 2
      %vm1581 = vcmp.lt.s32.totalorder %v1560, 3
      %vm1582 = vcmp.lt.s32.totalorder %v1560, 4
      %v1583 = vsel %vm1579, %v1563, %v1566
      %v1584 = vsel %vm1582, %v1572, 2102212464
      %v1585 = vsel %vm1581, %v1569, %v1584
      %v1586 = vsel %vm1580, %v1583, %v1585
      %v1587 = vsel %vm1579, %v1566, %v1569
      %v1588 = vsel %vm1582, %v1575, 920167782
      %v1589 = vsel %vm1581, %v1572, %v1588
      %v1590 = vsel %vm1580, %v1587, %v1589
      %v1591 = vsel %vm1579, %v1569, %v1572
      %v1592 = vsel %vm1582, %v1578, 1326507024
      %v1593 = vsel %vm1581, %v1575, %v1592
      %v1594 = vsel %vm1580, %v1591, %v1593
      %v1595 = vshll.u32 %v1555, 8
      %v1596 = vmul.u32.u64.compose %v1595, %v1594
      %v1597 = vextract.low.u32 %v1596
      %v1598 = vextract.high.u32 %v1596
      %v1599 = vmul.u32.u64.compose %v1595, %v1590
      %v1600 = vextract.low.u32 %v1599
      %v1601 = vextract.high.u32 %v1599
      %v1602 = vmul.u32 %v1595, %v1586
      %v1603 = vadd.s32 %v1598, %v1600
      %vm1604 = vc.u32 %v1598, %v1600
      %v1605 = vadd.s32 %v1601, 1
      %v1606 = vsel %vm1604, %v1605, %v1601
      %v1607 = vadd.s32 %v1602, %v1606
      %v1608 = vadd.s32 %v1607, 536870912
      %v1609 = vshrl.u32 %v1608, 30
      %v1610 = vshll.u32 %v1609, 30
      %v1611 = vsub.s32 %v1607, %v1610
      %vm1612 = vcmp.lt.s32.totalorder %v1611, 0
      %v1613 = vsub.s32 0, %v1611
      %v1614 = vsel %vm1612, %v1613, %v1611
      %v1615 = vclz %v1614
      %v1616 = vsub.s32 %v1615, 2
      %vm1617 = vcmp.gt.s32.totalorder 0, %v1616
      %v1618 = vsel %vm1617, 0, %v1616
      %v1619 = vsub.s32 32, %v1618
      %v1620 = vshll.u32 %v1611, %v1618
      %v1621 = vshrl.u32 %v1603, %v1619
      %v1622 = vor.u32 %v1620, %v1621
      %v1623 = vsub.s32 4294967266, %v1618
      %v1624 = vadd.s32 %v1623, 127
      %v1625 = vshll.u32 %v1624, 23
      %v1626 = vor.u32 4788187, %v1625
      %v1627 = vand.u32 2147483647, %v1626
      %v1629 = vcvt.s32.f32 %v1622
      %v1630 = vmul.f32 %v1629, %v1627
      %v1631 = vxor.u32 %v1630, 2147483648
      %v1632 = vsel %vm1549, %v1631, %v1630
      %v1633 = vsub.s32 4, %v1609
      %v1634 = vsel %vm1549, %v1633, %v1609
      %v1635 = vsel %vm1548, %v887, %v1632
      %v1636 = vsel %vm1548, 0, %v1634
      %v1637 = vcosq.f32.pop %v1635
      %v1638 = vsinq.f32.pop %v1635
      %vm1639 = vweird.f32 %v887
      %v1640 = vand.u32 %v1636, 3
      %vm1641 = vcmp.lt.s32.totalorder %v1640, 2
      %vm1642 = vcmp.eq.s32.totalorder %v1640, 0
      %v1643 = vxor.u32 %v1638, 2147483648
      %v1644 = vsel %vm1642, %v1637, %v1643
      %vm1645 = vcmp.eq.s32.totalorder %v1640, 2
      %v1646 = vxor.u32 %v1637, 2147483648
      %v1647 = vsel %vm1645, %v1646, %v1638
      %v1648 = vsel %vm1641, %v1644, %v1647
      %v1649 = vsel %vm1639, nan, %v1648
      %v1650 = vand.u32 2147483647, %v888
      %vm1651 = vcmp.le.f32.partialorder %v1650, 0.7853982
      %vm1652 = vcmp.lt.s32.totalorder %v888, 0
      %v1653 = vand.u32 %v888, 2139095040
      %v1654 = vshrl.u32 %v1653, 23
      %v1655 = vsub.s32 %v1654, 127
      %v1656 = vand.u32 2147483647, %v888
      %v1657 = vand.u32 %v1656, 8388607
      %v1658 = vor.u32 %v1657, 8388608
      %v1659 = vsub.s32 0, %v1658
      %v1660 = vadd.s32 %v1655, 1
      %vm1661 = vcmp.gt.s32.totalorder %v1660, 0
      %v1662 = vsel %vm1661, %v1660, 0
      %v1663 = vshrl.u32 %v1662, 5
      %v1664 = vand.u32 %v1662, 31
      %v1665 = vsub.s32 32, %v1664
      %v1666 = vshrl.u32 683565275, %v1665
      %v1667 = vshll.u32 683565275, %v1664
      %v1668 = vshrl.u32 2475754826, %v1665
      %v1669 = vor.u32 %v1667, %v1668
      %v1670 = vshll.u32 2475754826, %v1664
      %v1671 = vshrl.u32 2131351028, %v1665
      %v1672 = vor.u32 %v1670, %v1671
      %v1673 = vshll.u32 2131351028, %v1664
      %v1674 = vshrl.u32 2102212464, %v1665
      %v1675 = vor.u32 %v1673, %v1674
      %v1676 = vshll.u32 2102212464, %v1664
      %v1677 = vshrl.u32 920167782, %v1665
      %v1678 = vor.u32 %v1676, %v1677
      %v1679 = vshll.u32 920167782, %v1664
      %v1680 = vshrl.u32 1326507024, %v1665
      %v1681 = vor.u32 %v1679, %v1680
      %vm1682 = vcmp.lt.s32.totalorder %v1663, 1
      %vm1683 = vcmp.lt.s32.totalorder %v1663, 2
      %vm1684 = vcmp.lt.s32.totalorder %v1663, 3
      %vm1685 = vcmp.lt.s32.totalorder %v1663, 4
      %v1686 = vsel %vm1682, %v1666, %v1669
      %v1687 = vsel %vm1685, %v1675, 2102212464
      %v1688 = vsel %vm1684, %v1672, %v1687
      %v1689 = vsel %vm1683, %v1686, %v1688
      %v1690 = vsel %vm1682, %v1669, %v1672
      %v1691 = vsel %vm1685, %v1678, 920167782
      %v1692 = vsel %vm1684, %v1675, %v1691
      %v1693 = vsel %vm1683, %v1690, %v1692
      %v1694 = vsel %vm1682, %v1672, %v1675
      %v1695 = vsel %vm1685, %v1681, 1326507024
      %v1696 = vsel %vm1684, %v1678, %v1695
      %v1697 = vsel %vm1683, %v1694, %v1696
      %v1698 = vshll.u32 %v1658, 8
      %v1699 = vmul.u32.u64.compose %v1698, %v1697
      %v1700 = vextract.low.u32 %v1699
      %v1701 = vextract.high.u32 %v1699
      %v1702 = vmul.u32.u64.compose %v1698, %v1693
      %v1703 = vextract.low.u32 %v1702
      %v1704 = vextract.high.u32 %v1702
      %v1705 = vmul.u32 %v1698, %v1689
      %v1706 = vadd.s32 %v1701, %v1703
      %vm1707 = vc.u32 %v1701, %v1703
      %v1708 = vadd.s32 %v1704, 1
      %v1709 = vsel %vm1707, %v1708, %v1704
      %v1710 = vadd.s32 %v1705, %v1709
      %v1711 = vadd.s32 %v1710, 536870912
      %v1712 = vshrl.u32 %v1711, 30
      %v1713 = vshll.u32 %v1712, 30
      %v1714 = vsub.s32 %v1710, %v1713
      %vm1715 = vcmp.lt.s32.totalorder %v1714, 0
      %v1716 = vsub.s32 0, %v1714
      %v1717 = vsel %vm1715, %v1716, %v1714
      %v1718 = vclz %v1717
      %v1719 = vsub.s32 %v1718, 2
      %vm1720 = vcmp.gt.s32.totalorder 0, %v1719
      %v1721 = vsel %vm1720, 0, %v1719
      %v1722 = vsub.s32 32, %v1721
      %v1723 = vshll.u32 %v1714, %v1721
      %v1724 = vshrl.u32 %v1706, %v1722
      %v1725 = vor.u32 %v1723, %v1724
      %v1726 = vsub.s32 4294967266, %v1721
      %v1727 = vadd.s32 %v1726, 127
      %v1728 = vshll.u32 %v1727, 23
      %v1729 = vor.u32 4788187, %v1728
      %v1730 = vand.u32 2147483647, %v1729
      %v1732 = vcvt.s32.f32 %v1725
      %v1733 = vmul.f32 %v1732, %v1730
      %v1734 = vxor.u32 %v1733, 2147483648
      %v1735 = vsel %vm1652, %v1734, %v1733
      %v1736 = vsub.s32 4, %v1712
      %v1737 = vsel %vm1652, %v1736, %v1712
      %v1738 = vsel %vm1651, %v888, %v1735
      %v1739 = vsel %vm1651, 0, %v1737
      %v1740 = vcosq.f32.pop %v1738
      %v1741 = vsinq.f32.pop %v1738
      %vm1742 = vweird.f32 %v888
      %v1743 = vand.u32 %v1739, 3
      %vm1744 = vcmp.lt.s32.totalorder %v1743, 2
      %vm1745 = vcmp.eq.s32.totalorder %v1743, 0
      %v1746 = vxor.u32 %v1741, 2147483648
      %v1747 = vsel %vm1745, %v1740, %v1746
      %vm1748 = vcmp.eq.s32.totalorder %v1743, 2
      %v1749 = vxor.u32 %v1740, 2147483648
      %v1750 = vsel %vm1748, %v1749, %v1741
      %v1751 = vsel %vm1744, %v1747, %v1750
      %v1752 = vsel %vm1742, nan, %v1751
      %v1753 = vand.u32 2147483647, %v889
      %vm1754 = vcmp.le.f32.partialorder %v1753, 0.7853982
      %vm1755 = vcmp.lt.s32.totalorder %v889, 0
      %v1756 = vand.u32 %v889, 2139095040
      %v1757 = vshrl.u32 %v1756, 23
      %v1758 = vsub.s32 %v1757, 127
      %v1759 = vand.u32 2147483647, %v889
      %v1760 = vand.u32 %v1759, 8388607
      %v1761 = vor.u32 %v1760, 8388608
      %v1762 = vsub.s32 0, %v1761
      %v1763 = vadd.s32 %v1758, 1
      %vm1764 = vcmp.gt.s32.totalorder %v1763, 0
      %v1765 = vsel %vm1764, %v1763, 0
      %v1766 = vshrl.u32 %v1765, 5
      %v1767 = vand.u32 %v1765, 31
      %v1768 = vsub.s32 32, %v1767
      %v1769 = vshrl.u32 683565275, %v1768
      %v1770 = vshll.u32 683565275, %v1767
      %v1771 = vshrl.u32 2475754826, %v1768
      %v1772 = vor.u32 %v1770, %v1771
      %v1773 = vshll.u32 2475754826, %v1767
      %v1774 = vshrl.u32 2131351028, %v1768
      %v1775 = vor.u32 %v1773, %v1774
      %v1776 = vshll.u32 2131351028, %v1767
      %v1777 = vshrl.u32 2102212464, %v1768
      %v1778 = vor.u32 %v1776, %v1777
      %v1779 = vshll.u32 2102212464, %v1767
      %v1780 = vshrl.u32 920167782, %v1768
      %v1781 = vor.u32 %v1779, %v1780
      %v1782 = vshll.u32 920167782, %v1767
      %v1783 = vshrl.u32 1326507024, %v1768
      %v1784 = vor.u32 %v1782, %v1783
      %vm1785 = vcmp.lt.s32.totalorder %v1766, 1
      %vm1786 = vcmp.lt.s32.totalorder %v1766, 2
      %vm1787 = vcmp.lt.s32.totalorder %v1766, 3
      %vm1788 = vcmp.lt.s32.totalorder %v1766, 4
      %v1789 = vsel %vm1785, %v1769, %v1772
      %v1790 = vsel %vm1788, %v1778, 2102212464
      %v1791 = vsel %vm1787, %v1775, %v1790
      %v1792 = vsel %vm1786, %v1789, %v1791
      %v1793 = vsel %vm1785, %v1772, %v1775
      %v1794 = vsel %vm1788, %v1781, 920167782
      %v1795 = vsel %vm1787, %v1778, %v1794
      %v1796 = vsel %vm1786, %v1793, %v1795
      %v1797 = vsel %vm1785, %v1775, %v1778
      %v1798 = vsel %vm1788, %v1784, 1326507024
      %v1799 = vsel %vm1787, %v1781, %v1798
      %v1800 = vsel %vm1786, %v1797, %v1799
      %v1801 = vshll.u32 %v1761, 8
      %v1802 = vmul.u32.u64.compose %v1801, %v1800
      %v1803 = vextract.low.u32 %v1802
      %v1804 = vextract.high.u32 %v1802
      %v1805 = vmul.u32.u64.compose %v1801, %v1796
      %v1806 = vextract.low.u32 %v1805
      %v1807 = vextract.high.u32 %v1805
      %v1808 = vmul.u32 %v1801, %v1792
      %v1809 = vadd.s32 %v1804, %v1806
      %vm1810 = vc.u32 %v1804, %v1806
      %v1811 = vadd.s32 %v1807, 1
      %v1812 = vsel %vm1810, %v1811, %v1807
      %v1813 = vadd.s32 %v1808, %v1812
      %v1814 = vadd.s32 %v1813, 536870912
      %v1815 = vshrl.u32 %v1814, 30
      %v1816 = vshll.u32 %v1815, 30
      %v1817 = vsub.s32 %v1813, %v1816
      %vm1818 = vcmp.lt.s32.totalorder %v1817, 0
      %v1819 = vsub.s32 0, %v1817
      %v1820 = vsel %vm1818, %v1819, %v1817
      %v1821 = vclz %v1820
      %v1822 = vsub.s32 %v1821, 2
      %vm1823 = vcmp.gt.s32.totalorder 0, %v1822
      %v1824 = vsel %vm1823, 0, %v1822
      %v1825 = vsub.s32 32, %v1824
      %v1826 = vshll.u32 %v1817, %v1824
      %v1827 = vshrl.u32 %v1809, %v1825
      %v1828 = vor.u32 %v1826, %v1827
      %v1829 = vsub.s32 4294967266, %v1824
      %v1830 = vadd.s32 %v1829, 127
      %v1831 = vshll.u32 %v1830, 23
      %v1832 = vor.u32 4788187, %v1831
      %v1833 = vand.u32 2147483647, %v1832
      %v1835 = vcvt.s32.f32 %v1828
      %v1836 = vmul.f32 %v1835, %v1833
      %v1837 = vxor.u32 %v1836, 2147483648
      %v1838 = vsel %vm1755, %v1837, %v1836
      %v1839 = vsub.s32 4, %v1815
      %v1840 = vsel %vm1755, %v1839, %v1815
      %v1841 = vsel %vm1754, %v889, %v1838
      %v1842 = vsel %vm1754, 0, %v1840
      %v1843 = vcosq.f32.pop %v1841
      %v1844 = vsinq.f32.pop %v1841
      %vm1845 = vweird.f32 %v889
      %v1846 = vand.u32 %v1842, 3
      %vm1847 = vcmp.lt.s32.totalorder %v1846, 2
      %vm1848 = vcmp.eq.s32.totalorder %v1846, 0
      %v1849 = vxor.u32 %v1844, 2147483648
      %v1850 = vsel %vm1848, %v1843, %v1849
      %vm1851 = vcmp.eq.s32.totalorder %v1846, 2
      %v1852 = vxor.u32 %v1843, 2147483648
      %v1853 = vsel %vm1851, %v1852, %v1844
      %v1854 = vsel %vm1847, %v1850, %v1853
      %v1855 = vsel %vm1845, nan, %v1854
      %v1856 = vand.u32 2147483647, %v890
      %vm1857 = vcmp.le.f32.partialorder %v1856, 0.7853982
      %vm1858 = vcmp.lt.s32.totalorder %v890, 0
      %v1859 = vand.u32 %v890, 2139095040
      %v1860 = vshrl.u32 %v1859, 23
      %v1861 = vsub.s32 %v1860, 127
      %v1862 = vand.u32 2147483647, %v890
      %v1863 = vand.u32 %v1862, 8388607
      %v1864 = vor.u32 %v1863, 8388608
      %v1865 = vsub.s32 0, %v1864
      %v1866 = vadd.s32 %v1861, 1
      %vm1867 = vcmp.gt.s32.totalorder %v1866, 0
      %v1868 = vsel %vm1867, %v1866, 0
      %v1869 = vshrl.u32 %v1868, 5
      %v1870 = vand.u32 %v1868, 31
      %v1871 = vsub.s32 32, %v1870
      %v1872 = vshrl.u32 683565275, %v1871
      %v1873 = vshll.u32 683565275, %v1870
      %v1874 = vshrl.u32 2475754826, %v1871
      %v1875 = vor.u32 %v1873, %v1874
      %v1876 = vshll.u32 2475754826, %v1870
      %v1877 = vshrl.u32 2131351028, %v1871
      %v1878 = vor.u32 %v1876, %v1877
      %v1879 = vshll.u32 2131351028, %v1870
      %v1880 = vshrl.u32 2102212464, %v1871
      %v1881 = vor.u32 %v1879, %v1880
      %v1882 = vshll.u32 2102212464, %v1870
      %v1883 = vshrl.u32 920167782, %v1871
      %v1884 = vor.u32 %v1882, %v1883
      %v1885 = vshll.u32 920167782, %v1870
      %v1886 = vshrl.u32 1326507024, %v1871
      %v1887 = vor.u32 %v1885, %v1886
      %vm1888 = vcmp.lt.s32.totalorder %v1869, 1
      %vm1889 = vcmp.lt.s32.totalorder %v1869, 2
      %vm1890 = vcmp.lt.s32.totalorder %v1869, 3
      %vm1891 = vcmp.lt.s32.totalorder %v1869, 4
      %v1892 = vsel %vm1888, %v1872, %v1875
      %v1893 = vsel %vm1891, %v1881, 2102212464
      %v1894 = vsel %vm1890, %v1878, %v1893
      %v1895 = vsel %vm1889, %v1892, %v1894
      %v1896 = vsel %vm1888, %v1875, %v1878
      %v1897 = vsel %vm1891, %v1884, 920167782
      %v1898 = vsel %vm1890, %v1881, %v1897
      %v1899 = vsel %vm1889, %v1896, %v1898
      %v1900 = vsel %vm1888, %v1878, %v1881
      %v1901 = vsel %vm1891, %v1887, 1326507024
      %v1902 = vsel %vm1890, %v1884, %v1901
      %v1903 = vsel %vm1889, %v1900, %v1902
      %v1904 = vshll.u32 %v1864, 8
      %v1905 = vmul.u32.u64.compose %v1904, %v1903
      %v1906 = vextract.low.u32 %v1905
      %v1907 = vextract.high.u32 %v1905
      %v1908 = vmul.u32.u64.compose %v1904, %v1899
      %v1909 = vextract.low.u32 %v1908
      %v1910 = vextract.high.u32 %v1908
      %v1911 = vmul.u32 %v1904, %v1895
      %v1912 = vadd.s32 %v1907, %v1909
      %vm1913 = vc.u32 %v1907, %v1909
      %v1914 = vadd.s32 %v1910, 1
      %v1915 = vsel %vm1913, %v1914, %v1910
      %v1916 = vadd.s32 %v1911, %v1915
      %v1917 = vadd.s32 %v1916, 536870912
      %v1918 = vshrl.u32 %v1917, 30
      %v1919 = vshll.u32 %v1918, 30
      %v1920 = vsub.s32 %v1916, %v1919
      %vm1921 = vcmp.lt.s32.totalorder %v1920, 0
      %v1922 = vsub.s32 0, %v1920
      %v1923 = vsel %vm1921, %v1922, %v1920
      %v1924 = vclz %v1923
      %v1925 = vsub.s32 %v1924, 2
      %vm1926 = vcmp.gt.s32.totalorder 0, %v1925
      %v1927 = vsel %vm1926, 0, %v1925
      %v1928 = vsub.s32 32, %v1927
      %v1929 = vshll.u32 %v1920, %v1927
      %v1930 = vshrl.u32 %v1912, %v1928
      %v1931 = vor.u32 %v1929, %v1930
      %v1932 = vsub.s32 4294967266, %v1927
      %v1933 = vadd.s32 %v1932, 127
      %v1934 = vshll.u32 %v1933, 23
      %v1935 = vor.u32 4788187, %v1934
      %v1936 = vand.u32 2147483647, %v1935
      %v1938 = vcvt.s32.f32 %v1931
      %v1939 = vmul.f32 %v1938, %v1936
      %v1940 = vxor.u32 %v1939, 2147483648
      %v1941 = vsel %vm1858, %v1940, %v1939
      %v1942 = vsub.s32 4, %v1918
      %v1943 = vsel %vm1858, %v1942, %v1918
      %v1944 = vsel %vm1857, %v890, %v1941
      %v1945 = vsel %vm1857, 0, %v1943
      %v1946 = vcosq.f32.pop %v1944
      %v1947 = vsinq.f32.pop %v1944
      %vm1948 = vweird.f32 %v890
      %v1949 = vand.u32 %v1945, 3
      %vm1950 = vcmp.lt.s32.totalorder %v1949, 2
      %vm1951 = vcmp.eq.s32.totalorder %v1949, 0
      %v1952 = vxor.u32 %v1947, 2147483648
      %v1953 = vsel %vm1951, %v1946, %v1952
      %vm1954 = vcmp.eq.s32.totalorder %v1949, 2
      %v1955 = vxor.u32 %v1946, 2147483648
      %v1956 = vsel %vm1954, %v1955, %v1947
      %v1957 = vsel %vm1950, %v1953, %v1956
      %v1958 = vsel %vm1948, nan, %v1957
      %v1959 = vand.u32 2147483647, %v891
      %vm1960 = vcmp.le.f32.partialorder %v1959, 0.7853982
      %vm1961 = vcmp.lt.s32.totalorder %v891, 0
      %v1962 = vand.u32 %v891, 2139095040
      %v1963 = vshrl.u32 %v1962, 23
      %v1964 = vsub.s32 %v1963, 127
      %v1965 = vand.u32 2147483647, %v891
      %v1966 = vand.u32 %v1965, 8388607
      %v1967 = vor.u32 %v1966, 8388608
      %v1968 = vsub.s32 0, %v1967
      %v1969 = vadd.s32 %v1964, 1
      %vm1970 = vcmp.gt.s32.totalorder %v1969, 0
      %v1971 = vsel %vm1970, %v1969, 0
      %v1972 = vshrl.u32 %v1971, 5
      %v1973 = vand.u32 %v1971, 31
      %v1974 = vsub.s32 32, %v1973
      %v1975 = vshrl.u32 683565275, %v1974
      %v1976 = vshll.u32 683565275, %v1973
      %v1977 = vshrl.u32 2475754826, %v1974
      %v1978 = vor.u32 %v1976, %v1977
      %v1979 = vshll.u32 2475754826, %v1973
      %v1980 = vshrl.u32 2131351028, %v1974
      %v1981 = vor.u32 %v1979, %v1980
      %v1982 = vshll.u32 2131351028, %v1973
      %v1983 = vshrl.u32 2102212464, %v1974
      %v1984 = vor.u32 %v1982, %v1983
      %v1985 = vshll.u32 2102212464, %v1973
      %v1986 = vshrl.u32 920167782, %v1974
      %v1987 = vor.u32 %v1985, %v1986
      %v1988 = vshll.u32 920167782, %v1973
      %v1989 = vshrl.u32 1326507024, %v1974
      %v1990 = vor.u32 %v1988, %v1989
      %vm1991 = vcmp.lt.s32.totalorder %v1972, 1
      %vm1992 = vcmp.lt.s32.totalorder %v1972, 2
      %vm1993 = vcmp.lt.s32.totalorder %v1972, 3
      %vm1994 = vcmp.lt.s32.totalorder %v1972, 4
      %v1995 = vsel %vm1991, %v1975, %v1978
      %v1996 = vsel %vm1994, %v1984, 2102212464
      %v1997 = vsel %vm1993, %v1981, %v1996
      %v1998 = vsel %vm1992, %v1995, %v1997
      %v1999 = vsel %vm1991, %v1978, %v1981
      %v2000 = vsel %vm1994, %v1987, 920167782
      %v2001 = vsel %vm1993, %v1984, %v2000
      %v2002 = vsel %vm1992, %v1999, %v2001
      %v2003 = vsel %vm1991, %v1981, %v1984
      %v2004 = vsel %vm1994, %v1990, 1326507024
      %v2005 = vsel %vm1993, %v1987, %v2004
      %v2006 = vsel %vm1992, %v2003, %v2005
      %v2007 = vshll.u32 %v1967, 8
      %v2008 = vmul.u32.u64.compose %v2007, %v2006
      %v2009 = vextract.low.u32 %v2008
      %v2010 = vextract.high.u32 %v2008
      %v2011 = vmul.u32.u64.compose %v2007, %v2002
      %v2012 = vextract.low.u32 %v2011
      %v2013 = vextract.high.u32 %v2011
      %v2014 = vmul.u32 %v2007, %v1998
      %v2015 = vadd.s32 %v2010, %v2012
      %vm2016 = vc.u32 %v2010, %v2012
      %v2017 = vadd.s32 %v2013, 1
      %v2018 = vsel %vm2016, %v2017, %v2013
      %v2019 = vadd.s32 %v2014, %v2018
      %v2020 = vadd.s32 %v2019, 536870912
      %v2021 = vshrl.u32 %v2020, 30
      %v2022 = vshll.u32 %v2021, 30
      %v2023 = vsub.s32 %v2019, %v2022
      %vm2024 = vcmp.lt.s32.totalorder %v2023, 0
      %v2025 = vsub.s32 0, %v2023
      %v2026 = vsel %vm2024, %v2025, %v2023
      %v2027 = vclz %v2026
      %v2028 = vsub.s32 %v2027, 2
      %vm2029 = vcmp.gt.s32.totalorder 0, %v2028
      %v2030 = vsel %vm2029, 0, %v2028
      %v2031 = vsub.s32 32, %v2030
      %v2032 = vshll.u32 %v2023, %v2030
      %v2033 = vshrl.u32 %v2015, %v2031
      %v2034 = vor.u32 %v2032, %v2033
      %v2035 = vsub.s32 4294967266, %v2030
      %v2036 = vadd.s32 %v2035, 127
      %v2037 = vshll.u32 %v2036, 23
      %v2038 = vor.u32 4788187, %v2037
      %v2039 = vand.u32 2147483647, %v2038
      %v2041 = vcvt.s32.f32 %v2034
      %v2042 = vmul.f32 %v2041, %v2039
      %v2043 = vxor.u32 %v2042, 2147483648
      %v2044 = vsel %vm1961, %v2043, %v2042
      %v2045 = vsub.s32 4, %v2021
      %v2046 = vsel %vm1961, %v2045, %v2021
      %v2047 = vsel %vm1960, %v891, %v2044
      %v2048 = vsel %vm1960, 0, %v2046
      %v2049 = vcosq.f32.pop %v2047
      %v2050 = vsinq.f32.pop %v2047
      %vm2051 = vweird.f32 %v891
      %v2052 = vand.u32 %v2048, 3
      %vm2053 = vcmp.lt.s32.totalorder %v2052, 2
      %vm2054 = vcmp.eq.s32.totalorder %v2052, 0
      %v2055 = vxor.u32 %v2050, 2147483648
      %v2056 = vsel %vm2054, %v2049, %v2055
      %vm2057 = vcmp.eq.s32.totalorder %v2052, 2
      %v2058 = vxor.u32 %v2049, 2147483648
      %v2059 = vsel %vm2057, %v2058, %v2050
      %v2060 = vsel %vm2053, %v2056, %v2059
      %v2061 = vsel %vm2051, nan, %v2060
      %v2062 = vand.u32 2147483647, %v892
      %vm2063 = vcmp.le.f32.partialorder %v2062, 0.7853982
      %vm2064 = vcmp.lt.s32.totalorder %v892, 0
      %v2065 = vand.u32 %v892, 2139095040
      %v2066 = vshrl.u32 %v2065, 23
      %v2067 = vsub.s32 %v2066, 127
      %v2068 = vand.u32 2147483647, %v892
      %v2069 = vand.u32 %v2068, 8388607
      %v2070 = vor.u32 %v2069, 8388608
      %v2071 = vsub.s32 0, %v2070
      %v2072 = vadd.s32 %v2067, 1
      %vm2073 = vcmp.gt.s32.totalorder %v2072, 0
      %v2074 = vsel %vm2073, %v2072, 0
      %v2075 = vshrl.u32 %v2074, 5
      %v2076 = vand.u32 %v2074, 31
      %v2077 = vsub.s32 32, %v2076
      %v2078 = vshrl.u32 683565275, %v2077
      %v2079 = vshll.u32 683565275, %v2076
      %v2080 = vshrl.u32 2475754826, %v2077
      %v2081 = vor.u32 %v2079, %v2080
      %v2082 = vshll.u32 2475754826, %v2076
      %v2083 = vshrl.u32 2131351028, %v2077
      %v2084 = vor.u32 %v2082, %v2083
      %v2085 = vshll.u32 2131351028, %v2076
      %v2086 = vshrl.u32 2102212464, %v2077
      %v2087 = vor.u32 %v2085, %v2086
      %v2088 = vshll.u32 2102212464, %v2076
      %v2089 = vshrl.u32 920167782, %v2077
      %v2090 = vor.u32 %v2088, %v2089
      %v2091 = vshll.u32 920167782, %v2076
      %v2092 = vshrl.u32 1326507024, %v2077
      %v2093 = vor.u32 %v2091, %v2092
      %vm2094 = vcmp.lt.s32.totalorder %v2075, 1
      %vm2095 = vcmp.lt.s32.totalorder %v2075, 2
      %vm2096 = vcmp.lt.s32.totalorder %v2075, 3
      %vm2097 = vcmp.lt.s32.totalorder %v2075, 4
      %v2098 = vsel %vm2094, %v2078, %v2081
      %v2099 = vsel %vm2097, %v2087, 2102212464
      %v2100 = vsel %vm2096, %v2084, %v2099
      %v2101 = vsel %vm2095, %v2098, %v2100
      %v2102 = vsel %vm2094, %v2081, %v2084
      %v2103 = vsel %vm2097, %v2090, 920167782
      %v2104 = vsel %vm2096, %v2087, %v2103
      %v2105 = vsel %vm2095, %v2102, %v2104
      %v2106 = vsel %vm2094, %v2084, %v2087
      %v2107 = vsel %vm2097, %v2093, 1326507024
      %v2108 = vsel %vm2096, %v2090, %v2107
      %v2109 = vsel %vm2095, %v2106, %v2108
      %v2110 = vshll.u32 %v2070, 8
      %v2111 = vmul.u32.u64.compose %v2110, %v2109
      %v2112 = vextract.low.u32 %v2111
      %v2113 = vextract.high.u32 %v2111
      %v2114 = vmul.u32.u64.compose %v2110, %v2105
      %v2115 = vextract.low.u32 %v2114
      %v2116 = vextract.high.u32 %v2114
      %v2117 = vmul.u32 %v2110, %v2101
      %v2118 = vadd.s32 %v2113, %v2115
      %vm2119 = vc.u32 %v2113, %v2115
      %v2120 = vadd.s32 %v2116, 1
      %v2121 = vsel %vm2119, %v2120, %v2116
      %v2122 = vadd.s32 %v2117, %v2121
      %v2123 = vadd.s32 %v2122, 536870912
      %v2124 = vshrl.u32 %v2123, 30
      %v2125 = vshll.u32 %v2124, 30
      %v2126 = vsub.s32 %v2122, %v2125
      %vm2127 = vcmp.lt.s32.totalorder %v2126, 0
      %v2128 = vsub.s32 0, %v2126
      %v2129 = vsel %vm2127, %v2128, %v2126
      %v2130 = vclz %v2129
      %v2131 = vsub.s32 %v2130, 2
      %vm2132 = vcmp.gt.s32.totalorder 0, %v2131
      %v2133 = vsel %vm2132, 0, %v2131
      %v2134 = vsub.s32 32, %v2133
      %v2135 = vshll.u32 %v2126, %v2133
      %v2136 = vshrl.u32 %v2118, %v2134
      %v2137 = vor.u32 %v2135, %v2136
      %v2138 = vsub.s32 4294967266, %v2133
      %v2139 = vadd.s32 %v2138, 127
      %v2140 = vshll.u32 %v2139, 23
      %v2141 = vor.u32 4788187, %v2140
      %v2142 = vand.u32 2147483647, %v2141
      %v2144 = vcvt.s32.f32 %v2137
      %v2145 = vmul.f32 %v2144, %v2142
      %v2146 = vxor.u32 %v2145, 2147483648
      %v2147 = vsel %vm2064, %v2146, %v2145
      %v2148 = vsub.s32 4, %v2124
      %v2149 = vsel %vm2064, %v2148, %v2124
      %v2150 = vsel %vm2063, %v892, %v2147
      %v2151 = vsel %vm2063, 0, %v2149
      %v2152 = vcosq.f32.pop %v2150
      %v2153 = vsinq.f32.pop %v2150
      %vm2154 = vweird.f32 %v892
      %v2155 = vand.u32 %v2151, 3
      %vm2156 = vcmp.lt.s32.totalorder %v2155, 2
      %vm2157 = vcmp.eq.s32.totalorder %v2155, 0
      %v2158 = vxor.u32 %v2153, 2147483648
      %v2159 = vsel %vm2157, %v2152, %v2158
      %vm2160 = vcmp.eq.s32.totalorder %v2155, 2
      %v2161 = vxor.u32 %v2152, 2147483648
      %v2162 = vsel %vm2160, %v2161, %v2153
      %v2163 = vsel %vm2156, %v2159, %v2162
      %v2164 = vsel %vm2154, nan, %v2163
      %v2165 = vand.u32 2147483647, %v893
      %vm2166 = vcmp.le.f32.partialorder %v2165, 0.7853982
      %vm2167 = vcmp.lt.s32.totalorder %v893, 0
      %v2168 = vand.u32 %v893, 2139095040
      %v2169 = vshrl.u32 %v2168, 23
      %v2170 = vsub.s32 %v2169, 127
      %v2171 = vand.u32 2147483647, %v893
      %v2172 = vand.u32 %v2171, 8388607
      %v2173 = vor.u32 %v2172, 8388608
      %v2174 = vsub.s32 0, %v2173
      %v2175 = vadd.s32 %v2170, 1
      %vm2176 = vcmp.gt.s32.totalorder %v2175, 0
      %v2177 = vsel %vm2176, %v2175, 0
      %v2178 = vshrl.u32 %v2177, 5
      %v2179 = vand.u32 %v2177, 31
      %v2180 = vsub.s32 32, %v2179
      %v2181 = vshrl.u32 683565275, %v2180
      %v2182 = vshll.u32 683565275, %v2179
      %v2183 = vshrl.u32 2475754826, %v2180
      %v2184 = vor.u32 %v2182, %v2183
      %v2185 = vshll.u32 2475754826, %v2179
      %v2186 = vshrl.u32 2131351028, %v2180
      %v2187 = vor.u32 %v2185, %v2186
      %v2188 = vshll.u32 2131351028, %v2179
      %v2189 = vshrl.u32 2102212464, %v2180
      %v2190 = vor.u32 %v2188, %v2189
      %v2191 = vshll.u32 2102212464, %v2179
      %v2192 = vshrl.u32 920167782, %v2180
      %v2193 = vor.u32 %v2191, %v2192
      %v2194 = vshll.u32 920167782, %v2179
      %v2195 = vshrl.u32 1326507024, %v2180
      %v2196 = vor.u32 %v2194, %v2195
      %vm2197 = vcmp.lt.s32.totalorder %v2178, 1
      %vm2198 = vcmp.lt.s32.totalorder %v2178, 2
      %vm2199 = vcmp.lt.s32.totalorder %v2178, 3
      %vm2200 = vcmp.lt.s32.totalorder %v2178, 4
      %v2201 = vsel %vm2197, %v2181, %v2184
      %v2202 = vsel %vm2200, %v2190, 2102212464
      %v2203 = vsel %vm2199, %v2187, %v2202
      %v2204 = vsel %vm2198, %v2201, %v2203
      %v2205 = vsel %vm2197, %v2184, %v2187
      %v2206 = vsel %vm2200, %v2193, 920167782
      %v2207 = vsel %vm2199, %v2190, %v2206
      %v2208 = vsel %vm2198, %v2205, %v2207
      %v2209 = vsel %vm2197, %v2187, %v2190
      %v2210 = vsel %vm2200, %v2196, 1326507024
      %v2211 = vsel %vm2199, %v2193, %v2210
      %v2212 = vsel %vm2198, %v2209, %v2211
      %v2213 = vshll.u32 %v2173, 8
      %v2214 = vmul.u32.u64.compose %v2213, %v2212
      %v2215 = vextract.low.u32 %v2214
      %v2216 = vextract.high.u32 %v2214
      %v2217 = vmul.u32.u64.compose %v2213, %v2208
      %v2218 = vextract.low.u32 %v2217
      %v2219 = vextract.high.u32 %v2217
      %v2220 = vmul.u32 %v2213, %v2204
      %v2221 = vadd.s32 %v2216, %v2218
      %vm2222 = vc.u32 %v2216, %v2218
      %v2223 = vadd.s32 %v2219, 1
      %v2224 = vsel %vm2222, %v2223, %v2219
      %v2225 = vadd.s32 %v2220, %v2224
      %v2226 = vadd.s32 %v2225, 536870912
      %v2227 = vshrl.u32 %v2226, 30
      %v2228 = vshll.u32 %v2227, 30
      %v2229 = vsub.s32 %v2225, %v2228
      %vm2230 = vcmp.lt.s32.totalorder %v2229, 0
      %v2231 = vsub.s32 0, %v2229
      %v2232 = vsel %vm2230, %v2231, %v2229
      %v2233 = vclz %v2232
      %v2234 = vsub.s32 %v2233, 2
      %vm2235 = vcmp.gt.s32.totalorder 0, %v2234
      %v2236 = vsel %vm2235, 0, %v2234
      %v2237 = vsub.s32 32, %v2236
      %v2238 = vshll.u32 %v2229, %v2236
      %v2239 = vshrl.u32 %v2221, %v2237
      %v2240 = vor.u32 %v2238, %v2239
      %v2241 = vsub.s32 4294967266, %v2236
      %v2242 = vadd.s32 %v2241, 127
      %v2243 = vshll.u32 %v2242, 23
      %v2244 = vor.u32 4788187, %v2243
      %v2245 = vand.u32 2147483647, %v2244
      %v2247 = vcvt.s32.f32 %v2240
      %v2248 = vmul.f32 %v2247, %v2245
      %v2249 = vxor.u32 %v2248, 2147483648
      %v2250 = vsel %vm2167, %v2249, %v2248
      %v2251 = vsub.s32 4, %v2227
      %v2252 = vsel %vm2167, %v2251, %v2227
      %v2253 = vsel %vm2166, %v893, %v2250
      %v2254 = vsel %vm2166, 0, %v2252
      %v2255 = vcosq.f32.pop %v2253
      %v2256 = vsinq.f32.pop %v2253
      %vm2257 = vweird.f32 %v893
      %v2258 = vand.u32 %v2254, 3
      %vm2259 = vcmp.lt.s32.totalorder %v2258, 2
      %vm2260 = vcmp.eq.s32.totalorder %v2258, 0
      %v2261 = vxor.u32 %v2256, 2147483648
      %v2262 = vsel %vm2260, %v2255, %v2261
      %vm2263 = vcmp.eq.s32.totalorder %v2258, 2
      %v2264 = vxor.u32 %v2255, 2147483648
      %v2265 = vsel %vm2263, %v2264, %v2256
      %v2266 = vsel %vm2259, %v2262, %v2265
      %v2267 = vsel %vm2257, nan, %v2266
      %v2268 = vand.u32 2147483647, %v894
      %vm2269 = vcmp.le.f32.partialorder %v2268, 0.7853982
      %vm2270 = vcmp.lt.s32.totalorder %v894, 0
      %v2271 = vand.u32 %v894, 2139095040
      %v2272 = vshrl.u32 %v2271, 23
      %v2273 = vsub.s32 %v2272, 127
      %v2274 = vand.u32 2147483647, %v894
      %v2275 = vand.u32 %v2274, 8388607
      %v2276 = vor.u32 %v2275, 8388608
      %v2277 = vsub.s32 0, %v2276
      %v2278 = vadd.s32 %v2273, 1
      %vm2279 = vcmp.gt.s32.totalorder %v2278, 0
      %v2280 = vsel %vm2279, %v2278, 0
      %v2281 = vshrl.u32 %v2280, 5
      %v2282 = vand.u32 %v2280, 31
      %v2283 = vsub.s32 32, %v2282
      %v2284 = vshrl.u32 683565275, %v2283
      %v2285 = vshll.u32 683565275, %v2282
      %v2286 = vshrl.u32 2475754826, %v2283
      %v2287 = vor.u32 %v2285, %v2286
      %v2288 = vshll.u32 2475754826, %v2282
      %v2289 = vshrl.u32 2131351028, %v2283
      %v2290 = vor.u32 %v2288, %v2289
      %v2291 = vshll.u32 2131351028, %v2282
      %v2292 = vshrl.u32 2102212464, %v2283
      %v2293 = vor.u32 %v2291, %v2292
      %v2294 = vshll.u32 2102212464, %v2282
      %v2295 = vshrl.u32 920167782, %v2283
      %v2296 = vor.u32 %v2294, %v2295
      %v2297 = vshll.u32 920167782, %v2282
      %v2298 = vshrl.u32 1326507024, %v2283
      %v2299 = vor.u32 %v2297, %v2298
      %vm2300 = vcmp.lt.s32.totalorder %v2281, 1
      %vm2301 = vcmp.lt.s32.totalorder %v2281, 2
      %vm2302 = vcmp.lt.s32.totalorder %v2281, 3
      %vm2303 = vcmp.lt.s32.totalorder %v2281, 4
      %v2304 = vsel %vm2300, %v2284, %v2287
      %v2305 = vsel %vm2303, %v2293, 2102212464
      %v2306 = vsel %vm2302, %v2290, %v2305
      %v2307 = vsel %vm2301, %v2304, %v2306
      %v2308 = vsel %vm2300, %v2287, %v2290
      %v2309 = vsel %vm2303, %v2296, 920167782
      %v2310 = vsel %vm2302, %v2293, %v2309
      %v2311 = vsel %vm2301, %v2308, %v2310
      %v2312 = vsel %vm2300, %v2290, %v2293
      %v2313 = vsel %vm2303, %v2299, 1326507024
      %v2314 = vsel %vm2302, %v2296, %v2313
      %v2315 = vsel %vm2301, %v2312, %v2314
      %v2316 = vshll.u32 %v2276, 8
      %v2317 = vmul.u32.u64.compose %v2316, %v2315
      %v2318 = vextract.low.u32 %v2317
      %v2319 = vextract.high.u32 %v2317
      %v2320 = vmul.u32.u64.compose %v2316, %v2311
      %v2321 = vextract.low.u32 %v2320
      %v2322 = vextract.high.u32 %v2320
      %v2323 = vmul.u32 %v2316, %v2307
      %v2324 = vadd.s32 %v2319, %v2321
      %vm2325 = vc.u32 %v2319, %v2321
      %v2326 = vadd.s32 %v2322, 1
      %v2327 = vsel %vm2325, %v2326, %v2322
      %v2328 = vadd.s32 %v2323, %v2327
      %v2329 = vadd.s32 %v2328, 536870912
      %v2330 = vshrl.u32 %v2329, 30
      %v2331 = vshll.u32 %v2330, 30
      %v2332 = vsub.s32 %v2328, %v2331
      %vm2333 = vcmp.lt.s32.totalorder %v2332, 0
      %v2334 = vsub.s32 0, %v2332
      %v2335 = vsel %vm2333, %v2334, %v2332
      %v2336 = vclz %v2335
      %v2337 = vsub.s32 %v2336, 2
      %vm2338 = vcmp.gt.s32.totalorder 0, %v2337
      %v2339 = vsel %vm2338, 0, %v2337
      %v2340 = vsub.s32 32, %v2339
      %v2341 = vshll.u32 %v2332, %v2339
      %v2342 = vshrl.u32 %v2324, %v2340
      %v2343 = vor.u32 %v2341, %v2342
      %v2344 = vsub.s32 4294967266, %v2339
      %v2345 = vadd.s32 %v2344, 127
      %v2346 = vshll.u32 %v2345, 23
      %v2347 = vor.u32 4788187, %v2346
      %v2348 = vand.u32 2147483647, %v2347
      %v2350 = vcvt.s32.f32 %v2343
      %v2351 = vmul.f32 %v2350, %v2348
      %v2352 = vxor.u32 %v2351, 2147483648
      %v2353 = vsel %vm2270, %v2352, %v2351
      %v2354 = vsub.s32 4, %v2330
      %v2355 = vsel %vm2270, %v2354, %v2330
      %v2356 = vsel %vm2269, %v894, %v2353
      %v2357 = vsel %vm2269, 0, %v2355
      %v2358 = vcosq.f32.pop %v2356
      %v2359 = vsinq.f32.pop %v2356
      %vm2360 = vweird.f32 %v894
      %v2361 = vand.u32 %v2357, 3
      %vm2362 = vcmp.lt.s32.totalorder %v2361, 2
      %vm2363 = vcmp.eq.s32.totalorder %v2361, 0
      %v2364 = vxor.u32 %v2359, 2147483648
      %v2365 = vsel %vm2363, %v2358, %v2364
      %vm2366 = vcmp.eq.s32.totalorder %v2361, 2
      %v2367 = vxor.u32 %v2358, 2147483648
      %v2368 = vsel %vm2366, %v2367, %v2359
      %v2369 = vsel %vm2362, %v2365, %v2368
      %v2370 = vsel %vm2360, nan, %v2369
      %v2371 = vand.u32 2147483647, %v895
      %vm2372 = vcmp.le.f32.partialorder %v2371, 0.7853982
      %vm2373 = vcmp.lt.s32.totalorder %v895, 0
      %v2374 = vand.u32 %v895, 2139095040
      %v2375 = vshrl.u32 %v2374, 23
      %v2376 = vsub.s32 %v2375, 127
      %v2377 = vand.u32 2147483647, %v895
      %v2378 = vand.u32 %v2377, 8388607
      %v2379 = vor.u32 %v2378, 8388608
      %v2380 = vsub.s32 0, %v2379
      %v2381 = vadd.s32 %v2376, 1
      %vm2382 = vcmp.gt.s32.totalorder %v2381, 0
      %v2383 = vsel %vm2382, %v2381, 0
      %v2384 = vshrl.u32 %v2383, 5
      %v2385 = vand.u32 %v2383, 31
      %v2386 = vsub.s32 32, %v2385
      %v2387 = vshrl.u32 683565275, %v2386
      %v2388 = vshll.u32 683565275, %v2385
      %v2389 = vshrl.u32 2475754826, %v2386
      %v2390 = vor.u32 %v2388, %v2389
      %v2391 = vshll.u32 2475754826, %v2385
      %v2392 = vshrl.u32 2131351028, %v2386
      %v2393 = vor.u32 %v2391, %v2392
      %v2394 = vshll.u32 2131351028, %v2385
      %v2395 = vshrl.u32 2102212464, %v2386
      %v2396 = vor.u32 %v2394, %v2395
      %v2397 = vshll.u32 2102212464, %v2385
      %v2398 = vshrl.u32 920167782, %v2386
      %v2399 = vor.u32 %v2397, %v2398
      %v2400 = vshll.u32 920167782, %v2385
      %v2401 = vshrl.u32 1326507024, %v2386
      %v2402 = vor.u32 %v2400, %v2401
      %vm2403 = vcmp.lt.s32.totalorder %v2384, 1
      %vm2404 = vcmp.lt.s32.totalorder %v2384, 2
      %vm2405 = vcmp.lt.s32.totalorder %v2384, 3
      %vm2406 = vcmp.lt.s32.totalorder %v2384, 4
      %v2407 = vsel %vm2403, %v2387, %v2390
      %v2408 = vsel %vm2406, %v2396, 2102212464
      %v2409 = vsel %vm2405, %v2393, %v2408
      %v2410 = vsel %vm2404, %v2407, %v2409
      %v2411 = vsel %vm2403, %v2390, %v2393
      %v2412 = vsel %vm2406, %v2399, 920167782
      %v2413 = vsel %vm2405, %v2396, %v2412
      %v2414 = vsel %vm2404, %v2411, %v2413
      %v2415 = vsel %vm2403, %v2393, %v2396
      %v2416 = vsel %vm2406, %v2402, 1326507024
      %v2417 = vsel %vm2405, %v2399, %v2416
      %v2418 = vsel %vm2404, %v2415, %v2417
      %v2419 = vshll.u32 %v2379, 8
      %v2420 = vmul.u32.u64.compose %v2419, %v2418
      %v2421 = vextract.low.u32 %v2420
      %v2422 = vextract.high.u32 %v2420
      %v2423 = vmul.u32.u64.compose %v2419, %v2414
      %v2424 = vextract.low.u32 %v2423
      %v2425 = vextract.high.u32 %v2423
      %v2426 = vmul.u32 %v2419, %v2410
      %v2427 = vadd.s32 %v2422, %v2424
      %vm2428 = vc.u32 %v2422, %v2424
      %v2429 = vadd.s32 %v2425, 1
      %v2430 = vsel %vm2428, %v2429, %v2425
      %v2431 = vadd.s32 %v2426, %v2430
      %v2432 = vadd.s32 %v2431, 536870912
      %v2433 = vshrl.u32 %v2432, 30
      %v2434 = vshll.u32 %v2433, 30
      %v2435 = vsub.s32 %v2431, %v2434
      %vm2436 = vcmp.lt.s32.totalorder %v2435, 0
      %v2437 = vsub.s32 0, %v2435
      %v2438 = vsel %vm2436, %v2437, %v2435
      %v2439 = vclz %v2438
      %v2440 = vsub.s32 %v2439, 2
      %vm2441 = vcmp.gt.s32.totalorder 0, %v2440
      %v2442 = vsel %vm2441, 0, %v2440
      %v2443 = vsub.s32 32, %v2442
      %v2444 = vshll.u32 %v2435, %v2442
      %v2445 = vshrl.u32 %v2427, %v2443
      %v2446 = vor.u32 %v2444, %v2445
      %v2447 = vsub.s32 4294967266, %v2442
      %v2448 = vadd.s32 %v2447, 127
      %v2449 = vshll.u32 %v2448, 23
      %v2450 = vor.u32 4788187, %v2449
      %v2451 = vand.u32 2147483647, %v2450
      %v2453 = vcvt.s32.f32 %v2446
      %v2454 = vmul.f32 %v2453, %v2451
      %v2455 = vxor.u32 %v2454, 2147483648
      %v2456 = vsel %vm2373, %v2455, %v2454
      %v2457 = vsub.s32 4, %v2433
      %v2458 = vsel %vm2373, %v2457, %v2433
      %v2459 = vsel %vm2372, %v895, %v2456
      %v2460 = vsel %vm2372, 0, %v2458
      %v2461 = vcosq.f32.pop %v2459
      %v2462 = vsinq.f32.pop %v2459
      %vm2463 = vweird.f32 %v895
      %v2464 = vand.u32 %v2460, 3
      %vm2465 = vcmp.lt.s32.totalorder %v2464, 2
      %vm2466 = vcmp.eq.s32.totalorder %v2464, 0
      %v2467 = vxor.u32 %v2462, 2147483648
      %v2468 = vsel %vm2466, %v2461, %v2467
      %vm2469 = vcmp.eq.s32.totalorder %v2464, 2
      %v2470 = vxor.u32 %v2461, 2147483648
      %v2471 = vsel %vm2469, %v2470, %v2462
      %v2472 = vsel %vm2465, %v2468, %v2471
      %v2473 = vsel %vm2463, nan, %v2472
      %v2474 = vand.u32 2147483647, %v896
      %vm2475 = vcmp.le.f32.partialorder %v2474, 0.7853982
      %vm2476 = vcmp.lt.s32.totalorder %v896, 0
      %v2477 = vand.u32 %v896, 2139095040
      %v2478 = vshrl.u32 %v2477, 23
      %v2479 = vsub.s32 %v2478, 127
      %v2480 = vand.u32 2147483647, %v896
      %v2481 = vand.u32 %v2480, 8388607
      %v2482 = vor.u32 %v2481, 8388608
      %v2483 = vsub.s32 0, %v2482
      %v2484 = vadd.s32 %v2479, 1
      %vm2485 = vcmp.gt.s32.totalorder %v2484, 0
      %v2486 = vsel %vm2485, %v2484, 0
      %v2487 = vshrl.u32 %v2486, 5
      %v2488 = vand.u32 %v2486, 31
      %v2489 = vsub.s32 32, %v2488
      %v2490 = vshrl.u32 683565275, %v2489
      %v2491 = vshll.u32 683565275, %v2488
      %v2492 = vshrl.u32 2475754826, %v2489
      %v2493 = vor.u32 %v2491, %v2492
      %v2494 = vshll.u32 2475754826, %v2488
      %v2495 = vshrl.u32 2131351028, %v2489
      %v2496 = vor.u32 %v2494, %v2495
      %v2497 = vshll.u32 2131351028, %v2488
      %v2498 = vshrl.u32 2102212464, %v2489
      %v2499 = vor.u32 %v2497, %v2498
      %v2500 = vshll.u32 2102212464, %v2488
      %v2501 = vshrl.u32 920167782, %v2489
      %v2502 = vor.u32 %v2500, %v2501
      %v2503 = vshll.u32 920167782, %v2488
      %v2504 = vshrl.u32 1326507024, %v2489
      %v2505 = vor.u32 %v2503, %v2504
      %vm2506 = vcmp.lt.s32.totalorder %v2487, 1
      %vm2507 = vcmp.lt.s32.totalorder %v2487, 2
      %vm2508 = vcmp.lt.s32.totalorder %v2487, 3
      %vm2509 = vcmp.lt.s32.totalorder %v2487, 4
      %v2510 = vsel %vm2506, %v2490, %v2493
      %v2511 = vsel %vm2509, %v2499, 2102212464
      %v2512 = vsel %vm2508, %v2496, %v2511
      %v2513 = vsel %vm2507, %v2510, %v2512
      %v2514 = vsel %vm2506, %v2493, %v2496
      %v2515 = vsel %vm2509, %v2502, 920167782
      %v2516 = vsel %vm2508, %v2499, %v2515
      %v2517 = vsel %vm2507, %v2514, %v2516
      %v2518 = vsel %vm2506, %v2496, %v2499
      %v2519 = vsel %vm2509, %v2505, 1326507024
      %v2520 = vsel %vm2508, %v2502, %v2519
      %v2521 = vsel %vm2507, %v2518, %v2520
      %v2522 = vshll.u32 %v2482, 8
      %v2523 = vmul.u32.u64.compose %v2522, %v2521
      %v2524 = vextract.low.u32 %v2523
      %v2525 = vextract.high.u32 %v2523
      %v2526 = vmul.u32.u64.compose %v2522, %v2517
      %v2527 = vextract.low.u32 %v2526
      %v2528 = vextract.high.u32 %v2526
      %v2529 = vmul.u32 %v2522, %v2513
      %v2530 = vadd.s32 %v2525, %v2527
      %vm2531 = vc.u32 %v2525, %v2527
      %v2532 = vadd.s32 %v2528, 1
      %v2533 = vsel %vm2531, %v2532, %v2528
      %v2534 = vadd.s32 %v2529, %v2533
      %v2535 = vadd.s32 %v2534, 536870912
      %v2536 = vshrl.u32 %v2535, 30
      %v2537 = vshll.u32 %v2536, 30
      %v2538 = vsub.s32 %v2534, %v2537
      %vm2539 = vcmp.lt.s32.totalorder %v2538, 0
      %v2540 = vsub.s32 0, %v2538
      %v2541 = vsel %vm2539, %v2540, %v2538
      %v2542 = vclz %v2541
      %v2543 = vsub.s32 %v2542, 2
      %vm2544 = vcmp.gt.s32.totalorder 0, %v2543
      %v2545 = vsel %vm2544, 0, %v2543
      %v2546 = vsub.s32 32, %v2545
      %v2547 = vshll.u32 %v2538, %v2545
      %v2548 = vshrl.u32 %v2530, %v2546
      %v2549 = vor.u32 %v2547, %v2548
      %v2550 = vsub.s32 4294967266, %v2545
      %v2551 = vadd.s32 %v2550, 127
      %v2552 = vshll.u32 %v2551, 23
      %v2553 = vor.u32 4788187, %v2552
      %v2554 = vand.u32 2147483647, %v2553
      %v2556 = vcvt.s32.f32 %v2549
      %v2557 = vmul.f32 %v2556, %v2554
      %v2558 = vxor.u32 %v2557, 2147483648
      %v2559 = vsel %vm2476, %v2558, %v2557
      %v2560 = vsub.s32 4, %v2536
      %v2561 = vsel %vm2476, %v2560, %v2536
      %v2562 = vsel %vm2475, %v896, %v2559
      %v2563 = vsel %vm2475, 0, %v2561
      %v2564 = vcosq.f32.pop %v2562
      %v2565 = vsinq.f32.pop %v2562
      %vm2566 = vweird.f32 %v896
      %v2567 = vand.u32 %v2563, 3
      %vm2568 = vcmp.lt.s32.totalorder %v2567, 2
      %vm2569 = vcmp.eq.s32.totalorder %v2567, 0
      %v2570 = vxor.u32 %v2565, 2147483648
      %v2571 = vsel %vm2569, %v2564, %v2570
      %vm2572 = vcmp.eq.s32.totalorder %v2567, 2
      %v2573 = vxor.u32 %v2564, 2147483648
      %v2574 = vsel %vm2572, %v2573, %v2565
      %v2575 = vsel %vm2568, %v2571, %v2574
      %v2576 = vsel %vm2566, nan, %v2575
      %2593 = vrot.lane.b32.xlu0 %v1031, 32
      %v2594 = vpop.permute.xlu0 %2593
      %2595 = vrot.lane.b32.xlu0 %v1134, 32
      %v2596 = vpop.permute.xlu0 %2595
      %2597 = vrot.lane.b32.xlu0 %v1237, 32
      %v2598 = vpop.permute.xlu0 %2597
      %2599 = vrot.lane.b32.xlu0 %v1340, 32
      %v2600 = vpop.permute.xlu0 %2599
      %2601 = vrot.lane.b32.xlu0 %v1443, 32
      %v2602 = vpop.permute.xlu0 %2601
      %2603 = vrot.lane.b32.xlu0 %v1546, 32
      %v2604 = vpop.permute.xlu0 %2603
      %2605 = vrot.lane.b32.xlu0 %v1649, 32
      %v2606 = vpop.permute.xlu0 %2605
      %2607 = vrot.lane.b32.xlu0 %v1752, 32
      %v2608 = vpop.permute.xlu0 %2607
      %2609 = vrot.lane.b32.xlu0 %v1855, 32
      %v2610 = vpop.permute.xlu0 %2609
      %2611 = vrot.lane.b32.xlu0 %v1958, 32
      %v2612 = vpop.permute.xlu0 %2611
      %2613 = vrot.lane.b32.xlu0 %v2061, 32
      %v2614 = vpop.permute.xlu0 %2613
      %2615 = vrot.lane.b32.xlu0 %v2164, 32
      %v2616 = vpop.permute.xlu0 %2615
      %2617 = vrot.lane.b32.xlu0 %v2267, 32
      %v2618 = vpop.permute.xlu0 %2617
      %2619 = vrot.lane.b32.xlu0 %v2370, 32
      %v2620 = vpop.permute.xlu0 %2619
      %2621 = vrot.lane.b32.xlu0 %v2473, 32
      %v2622 = vpop.permute.xlu0 %2621
      %2623 = vrot.lane.b32.xlu0 %v2576, 32
      %v2624 = vpop.permute.xlu0 %2623
      %v2641 = vmul.f32 %v898, %v2594
      %v2642 = vmul.f32 %v900, %v2596
      %v2643 = vmul.f32 %v902, %v2598
      %v2644 = vmul.f32 %v904, %v2600
      %v2645 = vmul.f32 %v906, %v2602
      %v2646 = vmul.f32 %v908, %v2604
      %v2647 = vmul.f32 %v910, %v2606
      %v2648 = vmul.f32 %v912, %v2608
      %v2649 = vmul.f32 %v914, %v2610
      %v2650 = vmul.f32 %v916, %v2612
      %v2651 = vmul.f32 %v918, %v2614
      %v2652 = vmul.f32 %v920, %v2616
      %v2653 = vmul.f32 %v922, %v2618
      %v2654 = vmul.f32 %v924, %v2620
      %v2655 = vmul.f32 %v926, %v2622
      %v2656 = vmul.f32 %v928, %v2624
      %2673 = vrot.lane.b32.xlu0 %v2641, 96
      %v2674 = vpop.permute.xlu0 %2673
      %2675 = vrot.lane.b32.xlu0 %v2642, 96
      %v2676 = vpop.permute.xlu0 %2675
      %2677 = vrot.lane.b32.xlu0 %v2643, 96
      %v2678 = vpop.permute.xlu0 %2677
      %2679 = vrot.lane.b32.xlu0 %v2644, 96
      %v2680 = vpop.permute.xlu0 %2679
      %2681 = vrot.lane.b32.xlu0 %v2645, 96
      %v2682 = vpop.permute.xlu0 %2681
      %2683 = vrot.lane.b32.xlu0 %v2646, 96
      %v2684 = vpop.permute.xlu0 %2683
      %2685 = vrot.lane.b32.xlu0 %v2647, 96
      %v2686 = vpop.permute.xlu0 %2685
      %2687 = vrot.lane.b32.xlu0 %v2648, 96
      %v2688 = vpop.permute.xlu0 %2687
      %2689 = vrot.lane.b32.xlu0 %v2649, 96
      %v2690 = vpop.permute.xlu0 %2689
      %2691 = vrot.lane.b32.xlu0 %v2650, 96
      %v2692 = vpop.permute.xlu0 %2691
      %2693 = vrot.lane.b32.xlu0 %v2651, 96
      %v2694 = vpop.permute.xlu0 %2693
      %2695 = vrot.lane.b32.xlu0 %v2652, 96
      %v2696 = vpop.permute.xlu0 %2695
      %2697 = vrot.lane.b32.xlu0 %v2653, 96
      %v2698 = vpop.permute.xlu0 %2697
      %2699 = vrot.lane.b32.xlu0 %v2654, 96
      %v2700 = vpop.permute.xlu0 %2699
      %2701 = vrot.lane.b32.xlu0 %v2655, 96
      %v2702 = vpop.permute.xlu0 %2701
      %2703 = vrot.lane.b32.xlu0 %v2656, 96
      %v2704 = vpop.permute.xlu0 %2703
      %2721 = vst.msk [vmem:[%s221] sm:$0xff] %vm263, %v2674
      %2722 = vst.msk [vmem:[%s221 + $0x8] sm:$0xff] %vm263, %v2676
      %2723 = vst.msk [vmem:[%s221 + $0x10] sm:$0xff] %vm263, %v2678
      %2724 = vst.msk [vmem:[%s221 + $0x18] sm:$0xff] %vm263, %v2680
      %2725 = vst.msk [vmem:[%s221 + $0x20] sm:$0xff] %vm263, %v2682
      %2726 = vst.msk [vmem:[%s221 + $0x28] sm:$0xff] %vm263, %v2684
      %2727 = vst.msk [vmem:[%s221 + $0x30] sm:$0xff] %vm263, %v2686
      %2728 = vst.msk [vmem:[%s221 + $0x38] sm:$0xff] %vm263, %v2688
      %2729 = vst.msk [vmem:[%s221 + $0x40] sm:$0xff] %vm263, %v2690
      %2730 = vst.msk [vmem:[%s221 + $0x48] sm:$0xff] %vm263, %v2692
      %2731 = vst.msk [vmem:[%s221 + $0x50] sm:$0xff] %vm263, %v2694
      %2732 = vst.msk [vmem:[%s221 + $0x58] sm:$0xff] %vm263, %v2696
      %2733 = vst.msk [vmem:[%s221 + $0x60] sm:$0xff] %vm263, %v2698
      %2734 = vst.msk [vmem:[%s221 + $0x68] sm:$0xff] %vm263, %v2700
      %2735 = vst.msk [vmem:[%s221 + $0x70] sm:$0xff] %vm263, %v2702
      %2736 = vst.msk [vmem:[%s221 + $0x78] sm:$0xff] %vm263, %v2704
      %v2737 = vand.u32 2147483647, %v881
      %vm2738 = vcmp.le.f32.partialorder %v2737, 0.7853982
      %vm2739 = vcmp.lt.s32.totalorder %v881, 0
      %v2740 = vand.u32 %v881, 2139095040
      %v2741 = vshrl.u32 %v2740, 23
      %v2742 = vsub.s32 %v2741, 127
      %v2743 = vand.u32 2147483647, %v881
      %v2744 = vand.u32 %v2743, 8388607
      %v2745 = vor.u32 %v2744, 8388608
      %v2746 = vsub.s32 0, %v2745
      %v2747 = vadd.s32 %v2742, 1
      %vm2748 = vcmp.gt.s32.totalorder %v2747, 0
      %v2749 = vsel %vm2748, %v2747, 0
      %v2750 = vshrl.u32 %v2749, 5
      %v2751 = vand.u32 %v2749, 31
      %v2752 = vsub.s32 32, %v2751
      %v2753 = vshrl.u32 683565275, %v2752
      %v2754 = vshll.u32 683565275, %v2751
      %v2755 = vshrl.u32 2475754826, %v2752
      %v2756 = vor.u32 %v2754, %v2755
      %v2757 = vshll.u32 2475754826, %v2751
      %v2758 = vshrl.u32 2131351028, %v2752
      %v2759 = vor.u32 %v2757, %v2758
      %v2760 = vshll.u32 2131351028, %v2751
      %v2761 = vshrl.u32 2102212464, %v2752
      %v2762 = vor.u32 %v2760, %v2761
      %v2763 = vshll.u32 2102212464, %v2751
      %v2764 = vshrl.u32 920167782, %v2752
      %v2765 = vor.u32 %v2763, %v2764
      %v2766 = vshll.u32 920167782, %v2751
      %v2767 = vshrl.u32 1326507024, %v2752
      %v2768 = vor.u32 %v2766, %v2767
      %vm2769 = vcmp.lt.s32.totalorder %v2750, 1
      %vm2770 = vcmp.lt.s32.totalorder %v2750, 2
      %vm2771 = vcmp.lt.s32.totalorder %v2750, 3
      %vm2772 = vcmp.lt.s32.totalorder %v2750, 4
      %v2773 = vsel %vm2769, %v2753, %v2756
      %v2774 = vsel %vm2772, %v2762, 2102212464
      %v2775 = vsel %vm2771, %v2759, %v2774
      %v2776 = vsel %vm2770, %v2773, %v2775
      %v2777 = vsel %vm2769, %v2756, %v2759
      %v2778 = vsel %vm2772, %v2765, 920167782
      %v2779 = vsel %vm2771, %v2762, %v2778
      %v2780 = vsel %vm2770, %v2777, %v2779
      %v2781 = vsel %vm2769, %v2759, %v2762
      %v2782 = vsel %vm2772, %v2768, 1326507024
      %v2783 = vsel %vm2771, %v2765, %v2782
      %v2784 = vsel %vm2770, %v2781, %v2783
      %v2785 = vshll.u32 %v2745, 8
      %v2786 = vmul.u32.u64.compose %v2785, %v2784
      %v2787 = vextract.low.u32 %v2786
      %v2788 = vextract.high.u32 %v2786
      %v2789 = vmul.u32.u64.compose %v2785, %v2780
      %v2790 = vextract.low.u32 %v2789
      %v2791 = vextract.high.u32 %v2789
      %v2792 = vmul.u32 %v2785, %v2776
      %v2793 = vadd.s32 %v2788, %v2790
      %vm2794 = vc.u32 %v2788, %v2790
      %v2795 = vadd.s32 %v2791, 1
      %v2796 = vsel %vm2794, %v2795, %v2791
      %v2797 = vadd.s32 %v2792, %v2796
      %v2798 = vadd.s32 %v2797, 536870912
      %v2799 = vshrl.u32 %v2798, 30
      %v2800 = vshll.u32 %v2799, 30
      %v2801 = vsub.s32 %v2797, %v2800
      %vm2802 = vcmp.lt.s32.totalorder %v2801, 0
      %v2803 = vsub.s32 0, %v2801
      %v2804 = vsel %vm2802, %v2803, %v2801
      %v2805 = vclz %v2804
      %v2806 = vsub.s32 %v2805, 2
      %vm2807 = vcmp.gt.s32.totalorder 0, %v2806
      %v2808 = vsel %vm2807, 0, %v2806
      %v2809 = vsub.s32 32, %v2808
      %v2810 = vshll.u32 %v2801, %v2808
      %v2811 = vshrl.u32 %v2793, %v2809
      %v2812 = vor.u32 %v2810, %v2811
      %v2813 = vsub.s32 4294967266, %v2808
      %v2814 = vadd.s32 %v2813, 127
      %v2815 = vshll.u32 %v2814, 23
      %v2816 = vor.u32 4788187, %v2815
      %v2817 = vand.u32 2147483647, %v2816
      %v2819 = vcvt.s32.f32 %v2812
      %v2820 = vmul.f32 %v2819, %v2817
      %v2821 = vxor.u32 %v2820, 2147483648
      %v2822 = vsel %vm2739, %v2821, %v2820
      %v2823 = vsub.s32 4, %v2799
      %v2824 = vsel %vm2739, %v2823, %v2799
      %v2825 = vsel %vm2738, %v881, %v2822
      %v2826 = vsel %vm2738, 0, %v2824
      %v2827 = vcosq.f32.pop %v2825
      %v2828 = vsinq.f32.pop %v2825
      %vm2829 = vweird.f32 %v881
      %v2830 = vadd.s32 %v2826, 3
      %v2831 = vand.u32 %v2830, 3
      %vm2832 = vcmp.lt.s32.totalorder %v2831, 2
      %vm2833 = vcmp.eq.s32.totalorder %v2831, 0
      %v2834 = vxor.u32 %v2828, 2147483648
      %v2835 = vsel %vm2833, %v2827, %v2834
      %vm2836 = vcmp.eq.s32.totalorder %v2831, 2
      %v2837 = vxor.u32 %v2827, 2147483648
      %v2838 = vsel %vm2836, %v2837, %v2828
      %v2839 = vsel %vm2832, %v2835, %v2838
      %v2840 = vsel %vm2829, nan, %v2839
      %v2841 = vand.u32 2147483647, %v882
      %vm2842 = vcmp.le.f32.partialorder %v2841, 0.7853982
      %vm2843 = vcmp.lt.s32.totalorder %v882, 0
      %v2844 = vand.u32 %v882, 2139095040
      %v2845 = vshrl.u32 %v2844, 23
      %v2846 = vsub.s32 %v2845, 127
      %v2847 = vand.u32 2147483647, %v882
      %v2848 = vand.u32 %v2847, 8388607
      %v2849 = vor.u32 %v2848, 8388608
      %v2850 = vsub.s32 0, %v2849
      %v2851 = vadd.s32 %v2846, 1
      %vm2852 = vcmp.gt.s32.totalorder %v2851, 0
      %v2853 = vsel %vm2852, %v2851, 0
      %v2854 = vshrl.u32 %v2853, 5
      %v2855 = vand.u32 %v2853, 31
      %v2856 = vsub.s32 32, %v2855
      %v2857 = vshrl.u32 683565275, %v2856
      %v2858 = vshll.u32 683565275, %v2855
      %v2859 = vshrl.u32 2475754826, %v2856
      %v2860 = vor.u32 %v2858, %v2859
      %v2861 = vshll.u32 2475754826, %v2855
      %v2862 = vshrl.u32 2131351028, %v2856
      %v2863 = vor.u32 %v2861, %v2862
      %v2864 = vshll.u32 2131351028, %v2855
      %v2865 = vshrl.u32 2102212464, %v2856
      %v2866 = vor.u32 %v2864, %v2865
      %v2867 = vshll.u32 2102212464, %v2855
      %v2868 = vshrl.u32 920167782, %v2856
      %v2869 = vor.u32 %v2867, %v2868
      %v2870 = vshll.u32 920167782, %v2855
      %v2871 = vshrl.u32 1326507024, %v2856
      %v2872 = vor.u32 %v2870, %v2871
      %vm2873 = vcmp.lt.s32.totalorder %v2854, 1
      %vm2874 = vcmp.lt.s32.totalorder %v2854, 2
      %vm2875 = vcmp.lt.s32.totalorder %v2854, 3
      %vm2876 = vcmp.lt.s32.totalorder %v2854, 4
      %v2877 = vsel %vm2873, %v2857, %v2860
      %v2878 = vsel %vm2876, %v2866, 2102212464
      %v2879 = vsel %vm2875, %v2863, %v2878
      %v2880 = vsel %vm2874, %v2877, %v2879
      %v2881 = vsel %vm2873, %v2860, %v2863
      %v2882 = vsel %vm2876, %v2869, 920167782
      %v2883 = vsel %vm2875, %v2866, %v2882
      %v2884 = vsel %vm2874, %v2881, %v2883
      %v2885 = vsel %vm2873, %v2863, %v2866
      %v2886 = vsel %vm2876, %v2872, 1326507024
      %v2887 = vsel %vm2875, %v2869, %v2886
      %v2888 = vsel %vm2874, %v2885, %v2887
      %v2889 = vshll.u32 %v2849, 8
      %v2890 = vmul.u32.u64.compose %v2889, %v2888
      %v2891 = vextract.low.u32 %v2890
      %v2892 = vextract.high.u32 %v2890
      %v2893 = vmul.u32.u64.compose %v2889, %v2884
      %v2894 = vextract.low.u32 %v2893
      %v2895 = vextract.high.u32 %v2893
      %v2896 = vmul.u32 %v2889, %v2880
      %v2897 = vadd.s32 %v2892, %v2894
      %vm2898 = vc.u32 %v2892, %v2894
      %v2899 = vadd.s32 %v2895, 1
      %v2900 = vsel %vm2898, %v2899, %v2895
      %v2901 = vadd.s32 %v2896, %v2900
      %v2902 = vadd.s32 %v2901, 536870912
      %v2903 = vshrl.u32 %v2902, 30
      %v2904 = vshll.u32 %v2903, 30
      %v2905 = vsub.s32 %v2901, %v2904
      %vm2906 = vcmp.lt.s32.totalorder %v2905, 0
      %v2907 = vsub.s32 0, %v2905
      %v2908 = vsel %vm2906, %v2907, %v2905
      %v2909 = vclz %v2908
      %v2910 = vsub.s32 %v2909, 2
      %vm2911 = vcmp.gt.s32.totalorder 0, %v2910
      %v2912 = vsel %vm2911, 0, %v2910
      %v2913 = vsub.s32 32, %v2912
      %v2914 = vshll.u32 %v2905, %v2912
      %v2915 = vshrl.u32 %v2897, %v2913
      %v2916 = vor.u32 %v2914, %v2915
      %v2917 = vsub.s32 4294967266, %v2912
      %v2918 = vadd.s32 %v2917, 127
      %v2919 = vshll.u32 %v2918, 23
      %v2920 = vor.u32 4788187, %v2919
      %v2921 = vand.u32 2147483647, %v2920
      %v2923 = vcvt.s32.f32 %v2916
      %v2924 = vmul.f32 %v2923, %v2921
      %v2925 = vxor.u32 %v2924, 2147483648
      %v2926 = vsel %vm2843, %v2925, %v2924
      %v2927 = vsub.s32 4, %v2903
      %v2928 = vsel %vm2843, %v2927, %v2903
      %v2929 = vsel %vm2842, %v882, %v2926
      %v2930 = vsel %vm2842, 0, %v2928
      %v2931 = vcosq.f32.pop %v2929
      %v2932 = vsinq.f32.pop %v2929
      %vm2933 = vweird.f32 %v882
      %v2934 = vadd.s32 %v2930, 3
      %v2935 = vand.u32 %v2934, 3
      %vm2936 = vcmp.lt.s32.totalorder %v2935, 2
      %vm2937 = vcmp.eq.s32.totalorder %v2935, 0
      %v2938 = vxor.u32 %v2932, 2147483648
      %v2939 = vsel %vm2937, %v2931, %v2938
      %vm2940 = vcmp.eq.s32.totalorder %v2935, 2
      %v2941 = vxor.u32 %v2931, 2147483648
      %v2942 = vsel %vm2940, %v2941, %v2932
      %v2943 = vsel %vm2936, %v2939, %v2942
      %v2944 = vsel %vm2933, nan, %v2943
      %v2945 = vand.u32 2147483647, %v883
      %vm2946 = vcmp.le.f32.partialorder %v2945, 0.7853982
      %vm2947 = vcmp.lt.s32.totalorder %v883, 0
      %v2948 = vand.u32 %v883, 2139095040
      %v2949 = vshrl.u32 %v2948, 23
      %v2950 = vsub.s32 %v2949, 127
      %v2951 = vand.u32 2147483647, %v883
      %v2952 = vand.u32 %v2951, 8388607
      %v2953 = vor.u32 %v2952, 8388608
      %v2954 = vsub.s32 0, %v2953
      %v2955 = vadd.s32 %v2950, 1
      %vm2956 = vcmp.gt.s32.totalorder %v2955, 0
      %v2957 = vsel %vm2956, %v2955, 0
      %v2958 = vshrl.u32 %v2957, 5
      %v2959 = vand.u32 %v2957, 31
      %v2960 = vsub.s32 32, %v2959
      %v2961 = vshrl.u32 683565275, %v2960
      %v2962 = vshll.u32 683565275, %v2959
      %v2963 = vshrl.u32 2475754826, %v2960
      %v2964 = vor.u32 %v2962, %v2963
      %v2965 = vshll.u32 2475754826, %v2959
      %v2966 = vshrl.u32 2131351028, %v2960
      %v2967 = vor.u32 %v2965, %v2966
      %v2968 = vshll.u32 2131351028, %v2959
      %v2969 = vshrl.u32 2102212464, %v2960
      %v2970 = vor.u32 %v2968, %v2969
      %v2971 = vshll.u32 2102212464, %v2959
      %v2972 = vshrl.u32 920167782, %v2960
      %v2973 = vor.u32 %v2971, %v2972
      %v2974 = vshll.u32 920167782, %v2959
      %v2975 = vshrl.u32 1326507024, %v2960
      %v2976 = vor.u32 %v2974, %v2975
      %vm2977 = vcmp.lt.s32.totalorder %v2958, 1
      %vm2978 = vcmp.lt.s32.totalorder %v2958, 2
      %vm2979 = vcmp.lt.s32.totalorder %v2958, 3
      %vm2980 = vcmp.lt.s32.totalorder %v2958, 4
      %v2981 = vsel %vm2977, %v2961, %v2964
      %v2982 = vsel %vm2980, %v2970, 2102212464
      %v2983 = vsel %vm2979, %v2967, %v2982
      %v2984 = vsel %vm2978, %v2981, %v2983
      %v2985 = vsel %vm2977, %v2964, %v2967
      %v2986 = vsel %vm2980, %v2973, 920167782
      %v2987 = vsel %vm2979, %v2970, %v2986
      %v2988 = vsel %vm2978, %v2985, %v2987
      %v2989 = vsel %vm2977, %v2967, %v2970
      %v2990 = vsel %vm2980, %v2976, 1326507024
      %v2991 = vsel %vm2979, %v2973, %v2990
      %v2992 = vsel %vm2978, %v2989, %v2991
      %v2993 = vshll.u32 %v2953, 8
      %v2994 = vmul.u32.u64.compose %v2993, %v2992
      %v2995 = vextract.low.u32 %v2994
      %v2996 = vextract.high.u32 %v2994
      %v2997 = vmul.u32.u64.compose %v2993, %v2988
      %v2998 = vextract.low.u32 %v2997
      %v2999 = vextract.high.u32 %v2997
      %v3000 = vmul.u32 %v2993, %v2984
      %v3001 = vadd.s32 %v2996, %v2998
      %vm3002 = vc.u32 %v2996, %v2998
      %v3003 = vadd.s32 %v2999, 1
      %v3004 = vsel %vm3002, %v3003, %v2999
      %v3005 = vadd.s32 %v3000, %v3004
      %v3006 = vadd.s32 %v3005, 536870912
      %v3007 = vshrl.u32 %v3006, 30
      %v3008 = vshll.u32 %v3007, 30
      %v3009 = vsub.s32 %v3005, %v3008
      %vm3010 = vcmp.lt.s32.totalorder %v3009, 0
      %v3011 = vsub.s32 0, %v3009
      %v3012 = vsel %vm3010, %v3011, %v3009
      %v3013 = vclz %v3012
      %v3014 = vsub.s32 %v3013, 2
      %vm3015 = vcmp.gt.s32.totalorder 0, %v3014
      %v3016 = vsel %vm3015, 0, %v3014
      %v3017 = vsub.s32 32, %v3016
      %v3018 = vshll.u32 %v3009, %v3016
      %v3019 = vshrl.u32 %v3001, %v3017
      %v3020 = vor.u32 %v3018, %v3019
      %v3021 = vsub.s32 4294967266, %v3016
      %v3022 = vadd.s32 %v3021, 127
      %v3023 = vshll.u32 %v3022, 23
      %v3024 = vor.u32 4788187, %v3023
      %v3025 = vand.u32 2147483647, %v3024
      %v3027 = vcvt.s32.f32 %v3020
      %v3028 = vmul.f32 %v3027, %v3025
      %v3029 = vxor.u32 %v3028, 2147483648
      %v3030 = vsel %vm2947, %v3029, %v3028
      %v3031 = vsub.s32 4, %v3007
      %v3032 = vsel %vm2947, %v3031, %v3007
      %v3033 = vsel %vm2946, %v883, %v3030
      %v3034 = vsel %vm2946, 0, %v3032
      %v3035 = vcosq.f32.pop %v3033
      %v3036 = vsinq.f32.pop %v3033
      %vm3037 = vweird.f32 %v883
      %v3038 = vadd.s32 %v3034, 3
      %v3039 = vand.u32 %v3038, 3
      %vm3040 = vcmp.lt.s32.totalorder %v3039, 2
      %vm3041 = vcmp.eq.s32.totalorder %v3039, 0
      %v3042 = vxor.u32 %v3036, 2147483648
      %v3043 = vsel %vm3041, %v3035, %v3042
      %vm3044 = vcmp.eq.s32.totalorder %v3039, 2
      %v3045 = vxor.u32 %v3035, 2147483648
      %v3046 = vsel %vm3044, %v3045, %v3036
      %v3047 = vsel %vm3040, %v3043, %v3046
      %v3048 = vsel %vm3037, nan, %v3047
      %v3049 = vand.u32 2147483647, %v884
      %vm3050 = vcmp.le.f32.partialorder %v3049, 0.7853982
      %vm3051 = vcmp.lt.s32.totalorder %v884, 0
      %v3052 = vand.u32 %v884, 2139095040
      %v3053 = vshrl.u32 %v3052, 23
      %v3054 = vsub.s32 %v3053, 127
      %v3055 = vand.u32 2147483647, %v884
      %v3056 = vand.u32 %v3055, 8388607
      %v3057 = vor.u32 %v3056, 8388608
      %v3058 = vsub.s32 0, %v3057
      %v3059 = vadd.s32 %v3054, 1
      %vm3060 = vcmp.gt.s32.totalorder %v3059, 0
      %v3061 = vsel %vm3060, %v3059, 0
      %v3062 = vshrl.u32 %v3061, 5
      %v3063 = vand.u32 %v3061, 31
      %v3064 = vsub.s32 32, %v3063
      %v3065 = vshrl.u32 683565275, %v3064
      %v3066 = vshll.u32 683565275, %v3063
      %v3067 = vshrl.u32 2475754826, %v3064
      %v3068 = vor.u32 %v3066, %v3067
      %v3069 = vshll.u32 2475754826, %v3063
      %v3070 = vshrl.u32 2131351028, %v3064
      %v3071 = vor.u32 %v3069, %v3070
      %v3072 = vshll.u32 2131351028, %v3063
      %v3073 = vshrl.u32 2102212464, %v3064
      %v3074 = vor.u32 %v3072, %v3073
      %v3075 = vshll.u32 2102212464, %v3063
      %v3076 = vshrl.u32 920167782, %v3064
      %v3077 = vor.u32 %v3075, %v3076
      %v3078 = vshll.u32 920167782, %v3063
      %v3079 = vshrl.u32 1326507024, %v3064
      %v3080 = vor.u32 %v3078, %v3079
      %vm3081 = vcmp.lt.s32.totalorder %v3062, 1
      %vm3082 = vcmp.lt.s32.totalorder %v3062, 2
      %vm3083 = vcmp.lt.s32.totalorder %v3062, 3
      %vm3084 = vcmp.lt.s32.totalorder %v3062, 4
      %v3085 = vsel %vm3081, %v3065, %v3068
      %v3086 = vsel %vm3084, %v3074, 2102212464
      %v3087 = vsel %vm3083, %v3071, %v3086
      %v3088 = vsel %vm3082, %v3085, %v3087
      %v3089 = vsel %vm3081, %v3068, %v3071
      %v3090 = vsel %vm3084, %v3077, 920167782
      %v3091 = vsel %vm3083, %v3074, %v3090
      %v3092 = vsel %vm3082, %v3089, %v3091
      %v3093 = vsel %vm3081, %v3071, %v3074
      %v3094 = vsel %vm3084, %v3080, 1326507024
      %v3095 = vsel %vm3083, %v3077, %v3094
      %v3096 = vsel %vm3082, %v3093, %v3095
      %v3097 = vshll.u32 %v3057, 8
      %v3098 = vmul.u32.u64.compose %v3097, %v3096
      %v3099 = vextract.low.u32 %v3098
      %v3100 = vextract.high.u32 %v3098
      %v3101 = vmul.u32.u64.compose %v3097, %v3092
      %v3102 = vextract.low.u32 %v3101
      %v3103 = vextract.high.u32 %v3101
      %v3104 = vmul.u32 %v3097, %v3088
      %v3105 = vadd.s32 %v3100, %v3102
      %vm3106 = vc.u32 %v3100, %v3102
      %v3107 = vadd.s32 %v3103, 1
      %v3108 = vsel %vm3106, %v3107, %v3103
      %v3109 = vadd.s32 %v3104, %v3108
      %v3110 = vadd.s32 %v3109, 536870912
      %v3111 = vshrl.u32 %v3110, 30
      %v3112 = vshll.u32 %v3111, 30
      %v3113 = vsub.s32 %v3109, %v3112
      %vm3114 = vcmp.lt.s32.totalorder %v3113, 0
      %v3115 = vsub.s32 0, %v3113
      %v3116 = vsel %vm3114, %v3115, %v3113
      %v3117 = vclz %v3116
      %v3118 = vsub.s32 %v3117, 2
      %vm3119 = vcmp.gt.s32.totalorder 0, %v3118
      %v3120 = vsel %vm3119, 0, %v3118
      %v3121 = vsub.s32 32, %v3120
      %v3122 = vshll.u32 %v3113, %v3120
      %v3123 = vshrl.u32 %v3105, %v3121
      %v3124 = vor.u32 %v3122, %v3123
      %v3125 = vsub.s32 4294967266, %v3120
      %v3126 = vadd.s32 %v3125, 127
      %v3127 = vshll.u32 %v3126, 23
      %v3128 = vor.u32 4788187, %v3127
      %v3129 = vand.u32 2147483647, %v3128
      %v3131 = vcvt.s32.f32 %v3124
      %v3132 = vmul.f32 %v3131, %v3129
      %v3133 = vxor.u32 %v3132, 2147483648
      %v3134 = vsel %vm3051, %v3133, %v3132
      %v3135 = vsub.s32 4, %v3111
      %v3136 = vsel %vm3051, %v3135, %v3111
      %v3137 = vsel %vm3050, %v884, %v3134
      %v3138 = vsel %vm3050, 0, %v3136
      %v3139 = vcosq.f32.pop %v3137
      %v3140 = vsinq.f32.pop %v3137
      %vm3141 = vweird.f32 %v884
      %v3142 = vadd.s32 %v3138, 3
      %v3143 = vand.u32 %v3142, 3
      %vm3144 = vcmp.lt.s32.totalorder %v3143, 2
      %vm3145 = vcmp.eq.s32.totalorder %v3143, 0
      %v3146 = vxor.u32 %v3140, 2147483648
      %v3147 = vsel %vm3145, %v3139, %v3146
      %vm3148 = vcmp.eq.s32.totalorder %v3143, 2
      %v3149 = vxor.u32 %v3139, 2147483648
      %v3150 = vsel %vm3148, %v3149, %v3140
      %v3151 = vsel %vm3144, %v3147, %v3150
      %v3152 = vsel %vm3141, nan, %v3151
      %v3153 = vand.u32 2147483647, %v885
      %vm3154 = vcmp.le.f32.partialorder %v3153, 0.7853982
      %vm3155 = vcmp.lt.s32.totalorder %v885, 0
      %v3156 = vand.u32 %v885, 2139095040
      %v3157 = vshrl.u32 %v3156, 23
      %v3158 = vsub.s32 %v3157, 127
      %v3159 = vand.u32 2147483647, %v885
      %v3160 = vand.u32 %v3159, 8388607
      %v3161 = vor.u32 %v3160, 8388608
      %v3162 = vsub.s32 0, %v3161
      %v3163 = vadd.s32 %v3158, 1
      %vm3164 = vcmp.gt.s32.totalorder %v3163, 0
      %v3165 = vsel %vm3164, %v3163, 0
      %v3166 = vshrl.u32 %v3165, 5
      %v3167 = vand.u32 %v3165, 31
      %v3168 = vsub.s32 32, %v3167
      %v3169 = vshrl.u32 683565275, %v3168
      %v3170 = vshll.u32 683565275, %v3167
      %v3171 = vshrl.u32 2475754826, %v3168
      %v3172 = vor.u32 %v3170, %v3171
      %v3173 = vshll.u32 2475754826, %v3167
      %v3174 = vshrl.u32 2131351028, %v3168
      %v3175 = vor.u32 %v3173, %v3174
      %v3176 = vshll.u32 2131351028, %v3167
      %v3177 = vshrl.u32 2102212464, %v3168
      %v3178 = vor.u32 %v3176, %v3177
      %v3179 = vshll.u32 2102212464, %v3167
      %v3180 = vshrl.u32 920167782, %v3168
      %v3181 = vor.u32 %v3179, %v3180
      %v3182 = vshll.u32 920167782, %v3167
      %v3183 = vshrl.u32 1326507024, %v3168
      %v3184 = vor.u32 %v3182, %v3183
      %vm3185 = vcmp.lt.s32.totalorder %v3166, 1
      %vm3186 = vcmp.lt.s32.totalorder %v3166, 2
      %vm3187 = vcmp.lt.s32.totalorder %v3166, 3
      %vm3188 = vcmp.lt.s32.totalorder %v3166, 4
      %v3189 = vsel %vm3185, %v3169, %v3172
      %v3190 = vsel %vm3188, %v3178, 2102212464
      %v3191 = vsel %vm3187, %v3175, %v3190
      %v3192 = vsel %vm3186, %v3189, %v3191
      %v3193 = vsel %vm3185, %v3172, %v3175
      %v3194 = vsel %vm3188, %v3181, 920167782
      %v3195 = vsel %vm3187, %v3178, %v3194
      %v3196 = vsel %vm3186, %v3193, %v3195
      %v3197 = vsel %vm3185, %v3175, %v3178
      %v3198 = vsel %vm3188, %v3184, 1326507024
      %v3199 = vsel %vm3187, %v3181, %v3198
      %v3200 = vsel %vm3186, %v3197, %v3199
      %v3201 = vshll.u32 %v3161, 8
      %v3202 = vmul.u32.u64.compose %v3201, %v3200
      %v3203 = vextract.low.u32 %v3202
      %v3204 = vextract.high.u32 %v3202
      %v3205 = vmul.u32.u64.compose %v3201, %v3196
      %v3206 = vextract.low.u32 %v3205
      %v3207 = vextract.high.u32 %v3205
      %v3208 = vmul.u32 %v3201, %v3192
      %v3209 = vadd.s32 %v3204, %v3206
      %vm3210 = vc.u32 %v3204, %v3206
      %v3211 = vadd.s32 %v3207, 1
      %v3212 = vsel %vm3210, %v3211, %v3207
      %v3213 = vadd.s32 %v3208, %v3212
      %v3214 = vadd.s32 %v3213, 536870912
      %v3215 = vshrl.u32 %v3214, 30
      %v3216 = vshll.u32 %v3215, 30
      %v3217 = vsub.s32 %v3213, %v3216
      %vm3218 = vcmp.lt.s32.totalorder %v3217, 0
      %v3219 = vsub.s32 0, %v3217
      %v3220 = vsel %vm3218, %v3219, %v3217
      %v3221 = vclz %v3220
      %v3222 = vsub.s32 %v3221, 2
      %vm3223 = vcmp.gt.s32.totalorder 0, %v3222
      %v3224 = vsel %vm3223, 0, %v3222
      %v3225 = vsub.s32 32, %v3224
      %v3226 = vshll.u32 %v3217, %v3224
      %v3227 = vshrl.u32 %v3209, %v3225
      %v3228 = vor.u32 %v3226, %v3227
      %v3229 = vsub.s32 4294967266, %v3224
      %v3230 = vadd.s32 %v3229, 127
      %v3231 = vshll.u32 %v3230, 23
      %v3232 = vor.u32 4788187, %v3231
      %v3233 = vand.u32 2147483647, %v3232
      %v3235 = vcvt.s32.f32 %v3228
      %v3236 = vmul.f32 %v3235, %v3233
      %v3237 = vxor.u32 %v3236, 2147483648
      %v3238 = vsel %vm3155, %v3237, %v3236
      %v3239 = vsub.s32 4, %v3215
      %v3240 = vsel %vm3155, %v3239, %v3215
      %v3241 = vsel %vm3154, %v885, %v3238
      %v3242 = vsel %vm3154, 0, %v3240
      %v3243 = vcosq.f32.pop %v3241
      %v3244 = vsinq.f32.pop %v3241
      %vm3245 = vweird.f32 %v885
      %v3246 = vadd.s32 %v3242, 3
      %v3247 = vand.u32 %v3246, 3
      %vm3248 = vcmp.lt.s32.totalorder %v3247, 2
      %vm3249 = vcmp.eq.s32.totalorder %v3247, 0
      %v3250 = vxor.u32 %v3244, 2147483648
      %v3251 = vsel %vm3249, %v3243, %v3250
      %vm3252 = vcmp.eq.s32.totalorder %v3247, 2
      %v3253 = vxor.u32 %v3243, 2147483648
      %v3254 = vsel %vm3252, %v3253, %v3244
      %v3255 = vsel %vm3248, %v3251, %v3254
      %v3256 = vsel %vm3245, nan, %v3255
      %v3257 = vand.u32 2147483647, %v886
      %vm3258 = vcmp.le.f32.partialorder %v3257, 0.7853982
      %vm3259 = vcmp.lt.s32.totalorder %v886, 0
      %v3260 = vand.u32 %v886, 2139095040
      %v3261 = vshrl.u32 %v3260, 23
      %v3262 = vsub.s32 %v3261, 127
      %v3263 = vand.u32 2147483647, %v886
      %v3264 = vand.u32 %v3263, 8388607
      %v3265 = vor.u32 %v3264, 8388608
      %v3266 = vsub.s32 0, %v3265
      %v3267 = vadd.s32 %v3262, 1
      %vm3268 = vcmp.gt.s32.totalorder %v3267, 0
      %v3269 = vsel %vm3268, %v3267, 0
      %v3270 = vshrl.u32 %v3269, 5
      %v3271 = vand.u32 %v3269, 31
      %v3272 = vsub.s32 32, %v3271
      %v3273 = vshrl.u32 683565275, %v3272
      %v3274 = vshll.u32 683565275, %v3271
      %v3275 = vshrl.u32 2475754826, %v3272
      %v3276 = vor.u32 %v3274, %v3275
      %v3277 = vshll.u32 2475754826, %v3271
      %v3278 = vshrl.u32 2131351028, %v3272
      %v3279 = vor.u32 %v3277, %v3278
      %v3280 = vshll.u32 2131351028, %v3271
      %v3281 = vshrl.u32 2102212464, %v3272
      %v3282 = vor.u32 %v3280, %v3281
      %v3283 = vshll.u32 2102212464, %v3271
      %v3284 = vshrl.u32 920167782, %v3272
      %v3285 = vor.u32 %v3283, %v3284
      %v3286 = vshll.u32 920167782, %v3271
      %v3287 = vshrl.u32 1326507024, %v3272
      %v3288 = vor.u32 %v3286, %v3287
      %vm3289 = vcmp.lt.s32.totalorder %v3270, 1
      %vm3290 = vcmp.lt.s32.totalorder %v3270, 2
      %vm3291 = vcmp.lt.s32.totalorder %v3270, 3
      %vm3292 = vcmp.lt.s32.totalorder %v3270, 4
      %v3293 = vsel %vm3289, %v3273, %v3276
      %v3294 = vsel %vm3292, %v3282, 2102212464
      %v3295 = vsel %vm3291, %v3279, %v3294
      %v3296 = vsel %vm3290, %v3293, %v3295
      %v3297 = vsel %vm3289, %v3276, %v3279
      %v3298 = vsel %vm3292, %v3285, 920167782
      %v3299 = vsel %vm3291, %v3282, %v3298
      %v3300 = vsel %vm3290, %v3297, %v3299
      %v3301 = vsel %vm3289, %v3279, %v3282
      %v3302 = vsel %vm3292, %v3288, 1326507024
      %v3303 = vsel %vm3291, %v3285, %v3302
      %v3304 = vsel %vm3290, %v3301, %v3303
      %v3305 = vshll.u32 %v3265, 8
      %v3306 = vmul.u32.u64.compose %v3305, %v3304
      %v3307 = vextract.low.u32 %v3306
      %v3308 = vextract.high.u32 %v3306
      %v3309 = vmul.u32.u64.compose %v3305, %v3300
      %v3310 = vextract.low.u32 %v3309
      %v3311 = vextract.high.u32 %v3309
      %v3312 = vmul.u32 %v3305, %v3296
      %v3313 = vadd.s32 %v3308, %v3310
      %vm3314 = vc.u32 %v3308, %v3310
      %v3315 = vadd.s32 %v3311, 1
      %v3316 = vsel %vm3314, %v3315, %v3311
      %v3317 = vadd.s32 %v3312, %v3316
      %v3318 = vadd.s32 %v3317, 536870912
      %v3319 = vshrl.u32 %v3318, 30
      %v3320 = vshll.u32 %v3319, 30
      %v3321 = vsub.s32 %v3317, %v3320
      %vm3322 = vcmp.lt.s32.totalorder %v3321, 0
      %v3323 = vsub.s32 0, %v3321
      %v3324 = vsel %vm3322, %v3323, %v3321
      %v3325 = vclz %v3324
      %v3326 = vsub.s32 %v3325, 2
      %vm3327 = vcmp.gt.s32.totalorder 0, %v3326
      %v3328 = vsel %vm3327, 0, %v3326
      %v3329 = vsub.s32 32, %v3328
      %v3330 = vshll.u32 %v3321, %v3328
      %v3331 = vshrl.u32 %v3313, %v3329
      %v3332 = vor.u32 %v3330, %v3331
      %v3333 = vsub.s32 4294967266, %v3328
      %v3334 = vadd.s32 %v3333, 127
      %v3335 = vshll.u32 %v3334, 23
      %v3336 = vor.u32 4788187, %v3335
      %v3337 = vand.u32 2147483647, %v3336
      %v3339 = vcvt.s32.f32 %v3332
      %v3340 = vmul.f32 %v3339, %v3337
      %v3341 = vxor.u32 %v3340, 2147483648
      %v3342 = vsel %vm3259, %v3341, %v3340
      %v3343 = vsub.s32 4, %v3319
      %v3344 = vsel %vm3259, %v3343, %v3319
      %v3345 = vsel %vm3258, %v886, %v3342
      %v3346 = vsel %vm3258, 0, %v3344
      %v3347 = vcosq.f32.pop %v3345
      %v3348 = vsinq.f32.pop %v3345
      %vm3349 = vweird.f32 %v886
      %v3350 = vadd.s32 %v3346, 3
      %v3351 = vand.u32 %v3350, 3
      %vm3352 = vcmp.lt.s32.totalorder %v3351, 2
      %vm3353 = vcmp.eq.s32.totalorder %v3351, 0
      %v3354 = vxor.u32 %v3348, 2147483648
      %v3355 = vsel %vm3353, %v3347, %v3354
      %vm3356 = vcmp.eq.s32.totalorder %v3351, 2
      %v3357 = vxor.u32 %v3347, 2147483648
      %v3358 = vsel %vm3356, %v3357, %v3348
      %v3359 = vsel %vm3352, %v3355, %v3358
      %v3360 = vsel %vm3349, nan, %v3359
      %v3361 = vand.u32 2147483647, %v887
      %vm3362 = vcmp.le.f32.partialorder %v3361, 0.7853982
      %vm3363 = vcmp.lt.s32.totalorder %v887, 0
      %v3364 = vand.u32 %v887, 2139095040
      %v3365 = vshrl.u32 %v3364, 23
      %v3366 = vsub.s32 %v3365, 127
      %v3367 = vand.u32 2147483647, %v887
      %v3368 = vand.u32 %v3367, 8388607
      %v3369 = vor.u32 %v3368, 8388608
      %v3370 = vsub.s32 0, %v3369
      %v3371 = vadd.s32 %v3366, 1
      %vm3372 = vcmp.gt.s32.totalorder %v3371, 0
      %v3373 = vsel %vm3372, %v3371, 0
      %v3374 = vshrl.u32 %v3373, 5
      %v3375 = vand.u32 %v3373, 31
      %v3376 = vsub.s32 32, %v3375
      %v3377 = vshrl.u32 683565275, %v3376
      %v3378 = vshll.u32 683565275, %v3375
      %v3379 = vshrl.u32 2475754826, %v3376
      %v3380 = vor.u32 %v3378, %v3379
      %v3381 = vshll.u32 2475754826, %v3375
      %v3382 = vshrl.u32 2131351028, %v3376
      %v3383 = vor.u32 %v3381, %v3382
      %v3384 = vshll.u32 2131351028, %v3375
      %v3385 = vshrl.u32 2102212464, %v3376
      %v3386 = vor.u32 %v3384, %v3385
      %v3387 = vshll.u32 2102212464, %v3375
      %v3388 = vshrl.u32 920167782, %v3376
      %v3389 = vor.u32 %v3387, %v3388
      %v3390 = vshll.u32 920167782, %v3375
      %v3391 = vshrl.u32 1326507024, %v3376
      %v3392 = vor.u32 %v3390, %v3391
      %vm3393 = vcmp.lt.s32.totalorder %v3374, 1
      %vm3394 = vcmp.lt.s32.totalorder %v3374, 2
      %vm3395 = vcmp.lt.s32.totalorder %v3374, 3
      %vm3396 = vcmp.lt.s32.totalorder %v3374, 4
      %v3397 = vsel %vm3393, %v3377, %v3380
      %v3398 = vsel %vm3396, %v3386, 2102212464
      %v3399 = vsel %vm3395, %v3383, %v3398
      %v3400 = vsel %vm3394, %v3397, %v3399
      %v3401 = vsel %vm3393, %v3380, %v3383
      %v3402 = vsel %vm3396, %v3389, 920167782
      %v3403 = vsel %vm3395, %v3386, %v3402
      %v3404 = vsel %vm3394, %v3401, %v3403
      %v3405 = vsel %vm3393, %v3383, %v3386
      %v3406 = vsel %vm3396, %v3392, 1326507024
      %v3407 = vsel %vm3395, %v3389, %v3406
      %v3408 = vsel %vm3394, %v3405, %v3407
      %v3409 = vshll.u32 %v3369, 8
      %v3410 = vmul.u32.u64.compose %v3409, %v3408
      %v3411 = vextract.low.u32 %v3410
      %v3412 = vextract.high.u32 %v3410
      %v3413 = vmul.u32.u64.compose %v3409, %v3404
      %v3414 = vextract.low.u32 %v3413
      %v3415 = vextract.high.u32 %v3413
      %v3416 = vmul.u32 %v3409, %v3400
      %v3417 = vadd.s32 %v3412, %v3414
      %vm3418 = vc.u32 %v3412, %v3414
      %v3419 = vadd.s32 %v3415, 1
      %v3420 = vsel %vm3418, %v3419, %v3415
      %v3421 = vadd.s32 %v3416, %v3420
      %v3422 = vadd.s32 %v3421, 536870912
      %v3423 = vshrl.u32 %v3422, 30
      %v3424 = vshll.u32 %v3423, 30
      %v3425 = vsub.s32 %v3421, %v3424
      %vm3426 = vcmp.lt.s32.totalorder %v3425, 0
      %v3427 = vsub.s32 0, %v3425
      %v3428 = vsel %vm3426, %v3427, %v3425
      %v3429 = vclz %v3428
      %v3430 = vsub.s32 %v3429, 2
      %vm3431 = vcmp.gt.s32.totalorder 0, %v3430
      %v3432 = vsel %vm3431, 0, %v3430
      %v3433 = vsub.s32 32, %v3432
      %v3434 = vshll.u32 %v3425, %v3432
      %v3435 = vshrl.u32 %v3417, %v3433
      %v3436 = vor.u32 %v3434, %v3435
      %v3437 = vsub.s32 4294967266, %v3432
      %v3438 = vadd.s32 %v3437, 127
      %v3439 = vshll.u32 %v3438, 23
      %v3440 = vor.u32 4788187, %v3439
      %v3441 = vand.u32 2147483647, %v3440
      %v3443 = vcvt.s32.f32 %v3436
      %v3444 = vmul.f32 %v3443, %v3441
      %v3445 = vxor.u32 %v3444, 2147483648
      %v3446 = vsel %vm3363, %v3445, %v3444
      %v3447 = vsub.s32 4, %v3423
      %v3448 = vsel %vm3363, %v3447, %v3423
      %v3449 = vsel %vm3362, %v887, %v3446
      %v3450 = vsel %vm3362, 0, %v3448
      %v3451 = vcosq.f32.pop %v3449
      %v3452 = vsinq.f32.pop %v3449
      %vm3453 = vweird.f32 %v887
      %v3454 = vadd.s32 %v3450, 3
      %v3455 = vand.u32 %v3454, 3
      %vm3456 = vcmp.lt.s32.totalorder %v3455, 2
      %vm3457 = vcmp.eq.s32.totalorder %v3455, 0
      %v3458 = vxor.u32 %v3452, 2147483648
      %v3459 = vsel %vm3457, %v3451, %v3458
      %vm3460 = vcmp.eq.s32.totalorder %v3455, 2
      %v3461 = vxor.u32 %v3451, 2147483648
      %v3462 = vsel %vm3460, %v3461, %v3452
      %v3463 = vsel %vm3456, %v3459, %v3462
      %v3464 = vsel %vm3453, nan, %v3463
      %v3465 = vand.u32 2147483647, %v888
      %vm3466 = vcmp.le.f32.partialorder %v3465, 0.7853982
      %vm3467 = vcmp.lt.s32.totalorder %v888, 0
      %v3468 = vand.u32 %v888, 2139095040
      %v3469 = vshrl.u32 %v3468, 23
      %v3470 = vsub.s32 %v3469, 127
      %v3471 = vand.u32 2147483647, %v888
      %v3472 = vand.u32 %v3471, 8388607
      %v3473 = vor.u32 %v3472, 8388608
      %v3474 = vsub.s32 0, %v3473
      %v3475 = vadd.s32 %v3470, 1
      %vm3476 = vcmp.gt.s32.totalorder %v3475, 0
      %v3477 = vsel %vm3476, %v3475, 0
      %v3478 = vshrl.u32 %v3477, 5
      %v3479 = vand.u32 %v3477, 31
      %v3480 = vsub.s32 32, %v3479
      %v3481 = vshrl.u32 683565275, %v3480
      %v3482 = vshll.u32 683565275, %v3479
      %v3483 = vshrl.u32 2475754826, %v3480
      %v3484 = vor.u32 %v3482, %v3483
      %v3485 = vshll.u32 2475754826, %v3479
      %v3486 = vshrl.u32 2131351028, %v3480
      %v3487 = vor.u32 %v3485, %v3486
      %v3488 = vshll.u32 2131351028, %v3479
      %v3489 = vshrl.u32 2102212464, %v3480
      %v3490 = vor.u32 %v3488, %v3489
      %v3491 = vshll.u32 2102212464, %v3479
      %v3492 = vshrl.u32 920167782, %v3480
      %v3493 = vor.u32 %v3491, %v3492
      %v3494 = vshll.u32 920167782, %v3479
      %v3495 = vshrl.u32 1326507024, %v3480
      %v3496 = vor.u32 %v3494, %v3495
      %vm3497 = vcmp.lt.s32.totalorder %v3478, 1
      %vm3498 = vcmp.lt.s32.totalorder %v3478, 2
      %vm3499 = vcmp.lt.s32.totalorder %v3478, 3
      %vm3500 = vcmp.lt.s32.totalorder %v3478, 4
      %v3501 = vsel %vm3497, %v3481, %v3484
      %v3502 = vsel %vm3500, %v3490, 2102212464
      %v3503 = vsel %vm3499, %v3487, %v3502
      %v3504 = vsel %vm3498, %v3501, %v3503
      %v3505 = vsel %vm3497, %v3484, %v3487
      %v3506 = vsel %vm3500, %v3493, 920167782
      %v3507 = vsel %vm3499, %v3490, %v3506
      %v3508 = vsel %vm3498, %v3505, %v3507
      %v3509 = vsel %vm3497, %v3487, %v3490
      %v3510 = vsel %vm3500, %v3496, 1326507024
      %v3511 = vsel %vm3499, %v3493, %v3510
      %v3512 = vsel %vm3498, %v3509, %v3511
      %v3513 = vshll.u32 %v3473, 8
      %v3514 = vmul.u32.u64.compose %v3513, %v3512
      %v3515 = vextract.low.u32 %v3514
      %v3516 = vextract.high.u32 %v3514
      %v3517 = vmul.u32.u64.compose %v3513, %v3508
      %v3518 = vextract.low.u32 %v3517
      %v3519 = vextract.high.u32 %v3517
      %v3520 = vmul.u32 %v3513, %v3504
      %v3521 = vadd.s32 %v3516, %v3518
      %vm3522 = vc.u32 %v3516, %v3518
      %v3523 = vadd.s32 %v3519, 1
      %v3524 = vsel %vm3522, %v3523, %v3519
      %v3525 = vadd.s32 %v3520, %v3524
      %v3526 = vadd.s32 %v3525, 536870912
      %v3527 = vshrl.u32 %v3526, 30
      %v3528 = vshll.u32 %v3527, 30
      %v3529 = vsub.s32 %v3525, %v3528
      %vm3530 = vcmp.lt.s32.totalorder %v3529, 0
      %v3531 = vsub.s32 0, %v3529
      %v3532 = vsel %vm3530, %v3531, %v3529
      %v3533 = vclz %v3532
      %v3534 = vsub.s32 %v3533, 2
      %vm3535 = vcmp.gt.s32.totalorder 0, %v3534
      %v3536 = vsel %vm3535, 0, %v3534
      %v3537 = vsub.s32 32, %v3536
      %v3538 = vshll.u32 %v3529, %v3536
      %v3539 = vshrl.u32 %v3521, %v3537
      %v3540 = vor.u32 %v3538, %v3539
      %v3541 = vsub.s32 4294967266, %v3536
      %v3542 = vadd.s32 %v3541, 127
      %v3543 = vshll.u32 %v3542, 23
      %v3544 = vor.u32 4788187, %v3543
      %v3545 = vand.u32 2147483647, %v3544
      %v3547 = vcvt.s32.f32 %v3540
      %v3548 = vmul.f32 %v3547, %v3545
      %v3549 = vxor.u32 %v3548, 2147483648
      %v3550 = vsel %vm3467, %v3549, %v3548
      %v3551 = vsub.s32 4, %v3527
      %v3552 = vsel %vm3467, %v3551, %v3527
      %v3553 = vsel %vm3466, %v888, %v3550
      %v3554 = vsel %vm3466, 0, %v3552
      %v3555 = vcosq.f32.pop %v3553
      %v3556 = vsinq.f32.pop %v3553
      %vm3557 = vweird.f32 %v888
      %v3558 = vadd.s32 %v3554, 3
      %v3559 = vand.u32 %v3558, 3
      %vm3560 = vcmp.lt.s32.totalorder %v3559, 2
      %vm3561 = vcmp.eq.s32.totalorder %v3559, 0
      %v3562 = vxor.u32 %v3556, 2147483648
      %v3563 = vsel %vm3561, %v3555, %v3562
      %vm3564 = vcmp.eq.s32.totalorder %v3559, 2
      %v3565 = vxor.u32 %v3555, 2147483648
      %v3566 = vsel %vm3564, %v3565, %v3556
      %v3567 = vsel %vm3560, %v3563, %v3566
      %v3568 = vsel %vm3557, nan, %v3567
      %v3569 = vand.u32 2147483647, %v889
      %vm3570 = vcmp.le.f32.partialorder %v3569, 0.7853982
      %vm3571 = vcmp.lt.s32.totalorder %v889, 0
      %v3572 = vand.u32 %v889, 2139095040
      %v3573 = vshrl.u32 %v3572, 23
      %v3574 = vsub.s32 %v3573, 127
      %v3575 = vand.u32 2147483647, %v889
      %v3576 = vand.u32 %v3575, 8388607
      %v3577 = vor.u32 %v3576, 8388608
      %v3578 = vsub.s32 0, %v3577
      %v3579 = vadd.s32 %v3574, 1
      %vm3580 = vcmp.gt.s32.totalorder %v3579, 0
      %v3581 = vsel %vm3580, %v3579, 0
      %v3582 = vshrl.u32 %v3581, 5
      %v3583 = vand.u32 %v3581, 31
      %v3584 = vsub.s32 32, %v3583
      %v3585 = vshrl.u32 683565275, %v3584
      %v3586 = vshll.u32 683565275, %v3583
      %v3587 = vshrl.u32 2475754826, %v3584
      %v3588 = vor.u32 %v3586, %v3587
      %v3589 = vshll.u32 2475754826, %v3583
      %v3590 = vshrl.u32 2131351028, %v3584
      %v3591 = vor.u32 %v3589, %v3590
      %v3592 = vshll.u32 2131351028, %v3583
      %v3593 = vshrl.u32 2102212464, %v3584
      %v3594 = vor.u32 %v3592, %v3593
      %v3595 = vshll.u32 2102212464, %v3583
      %v3596 = vshrl.u32 920167782, %v3584
      %v3597 = vor.u32 %v3595, %v3596
      %v3598 = vshll.u32 920167782, %v3583
      %v3599 = vshrl.u32 1326507024, %v3584
      %v3600 = vor.u32 %v3598, %v3599
      %vm3601 = vcmp.lt.s32.totalorder %v3582, 1
      %vm3602 = vcmp.lt.s32.totalorder %v3582, 2
      %vm3603 = vcmp.lt.s32.totalorder %v3582, 3
      %vm3604 = vcmp.lt.s32.totalorder %v3582, 4
      %v3605 = vsel %vm3601, %v3585, %v3588
      %v3606 = vsel %vm3604, %v3594, 2102212464
      %v3607 = vsel %vm3603, %v3591, %v3606
      %v3608 = vsel %vm3602, %v3605, %v3607
      %v3609 = vsel %vm3601, %v3588, %v3591
      %v3610 = vsel %vm3604, %v3597, 920167782
      %v3611 = vsel %vm3603, %v3594, %v3610
      %v3612 = vsel %vm3602, %v3609, %v3611
      %v3613 = vsel %vm3601, %v3591, %v3594
      %v3614 = vsel %vm3604, %v3600, 1326507024
      %v3615 = vsel %vm3603, %v3597, %v3614
      %v3616 = vsel %vm3602, %v3613, %v3615
      %v3617 = vshll.u32 %v3577, 8
      %v3618 = vmul.u32.u64.compose %v3617, %v3616
      %v3619 = vextract.low.u32 %v3618
      %v3620 = vextract.high.u32 %v3618
      %v3621 = vmul.u32.u64.compose %v3617, %v3612
      %v3622 = vextract.low.u32 %v3621
      %v3623 = vextract.high.u32 %v3621
      %v3624 = vmul.u32 %v3617, %v3608
      %v3625 = vadd.s32 %v3620, %v3622
      %vm3626 = vc.u32 %v3620, %v3622
      %v3627 = vadd.s32 %v3623, 1
      %v3628 = vsel %vm3626, %v3627, %v3623
      %v3629 = vadd.s32 %v3624, %v3628
      %v3630 = vadd.s32 %v3629, 536870912
      %v3631 = vshrl.u32 %v3630, 30
      %v3632 = vshll.u32 %v3631, 30
      %v3633 = vsub.s32 %v3629, %v3632
      %vm3634 = vcmp.lt.s32.totalorder %v3633, 0
      %v3635 = vsub.s32 0, %v3633
      %v3636 = vsel %vm3634, %v3635, %v3633
      %v3637 = vclz %v3636
      %v3638 = vsub.s32 %v3637, 2
      %vm3639 = vcmp.gt.s32.totalorder 0, %v3638
      %v3640 = vsel %vm3639, 0, %v3638
      %v3641 = vsub.s32 32, %v3640
      %v3642 = vshll.u32 %v3633, %v3640
      %v3643 = vshrl.u32 %v3625, %v3641
      %v3644 = vor.u32 %v3642, %v3643
      %v3645 = vsub.s32 4294967266, %v3640
      %v3646 = vadd.s32 %v3645, 127
      %v3647 = vshll.u32 %v3646, 23
      %v3648 = vor.u32 4788187, %v3647
      %v3649 = vand.u32 2147483647, %v3648
      %v3651 = vcvt.s32.f32 %v3644
      %v3652 = vmul.f32 %v3651, %v3649
      %v3653 = vxor.u32 %v3652, 2147483648
      %v3654 = vsel %vm3571, %v3653, %v3652
      %v3655 = vsub.s32 4, %v3631
      %v3656 = vsel %vm3571, %v3655, %v3631
      %v3657 = vsel %vm3570, %v889, %v3654
      %v3658 = vsel %vm3570, 0, %v3656
      %v3659 = vcosq.f32.pop %v3657
      %v3660 = vsinq.f32.pop %v3657
      %vm3661 = vweird.f32 %v889
      %v3662 = vadd.s32 %v3658, 3
      %v3663 = vand.u32 %v3662, 3
      %vm3664 = vcmp.lt.s32.totalorder %v3663, 2
      %vm3665 = vcmp.eq.s32.totalorder %v3663, 0
      %v3666 = vxor.u32 %v3660, 2147483648
      %v3667 = vsel %vm3665, %v3659, %v3666
      %vm3668 = vcmp.eq.s32.totalorder %v3663, 2
      %v3669 = vxor.u32 %v3659, 2147483648
      %v3670 = vsel %vm3668, %v3669, %v3660
      %v3671 = vsel %vm3664, %v3667, %v3670
      %v3672 = vsel %vm3661, nan, %v3671
      %v3673 = vand.u32 2147483647, %v890
      %vm3674 = vcmp.le.f32.partialorder %v3673, 0.7853982
      %vm3675 = vcmp.lt.s32.totalorder %v890, 0
      %v3676 = vand.u32 %v890, 2139095040
      %v3677 = vshrl.u32 %v3676, 23
      %v3678 = vsub.s32 %v3677, 127
      %v3679 = vand.u32 2147483647, %v890
      %v3680 = vand.u32 %v3679, 8388607
      %v3681 = vor.u32 %v3680, 8388608
      %v3682 = vsub.s32 0, %v3681
      %v3683 = vadd.s32 %v3678, 1
      %vm3684 = vcmp.gt.s32.totalorder %v3683, 0
      %v3685 = vsel %vm3684, %v3683, 0
      %v3686 = vshrl.u32 %v3685, 5
      %v3687 = vand.u32 %v3685, 31
      %v3688 = vsub.s32 32, %v3687
      %v3689 = vshrl.u32 683565275, %v3688
      %v3690 = vshll.u32 683565275, %v3687
      %v3691 = vshrl.u32 2475754826, %v3688
      %v3692 = vor.u32 %v3690, %v3691
      %v3693 = vshll.u32 2475754826, %v3687
      %v3694 = vshrl.u32 2131351028, %v3688
      %v3695 = vor.u32 %v3693, %v3694
      %v3696 = vshll.u32 2131351028, %v3687
      %v3697 = vshrl.u32 2102212464, %v3688
      %v3698 = vor.u32 %v3696, %v3697
      %v3699 = vshll.u32 2102212464, %v3687
      %v3700 = vshrl.u32 920167782, %v3688
      %v3701 = vor.u32 %v3699, %v3700
      %v3702 = vshll.u32 920167782, %v3687
      %v3703 = vshrl.u32 1326507024, %v3688
      %v3704 = vor.u32 %v3702, %v3703
      %vm3705 = vcmp.lt.s32.totalorder %v3686, 1
      %vm3706 = vcmp.lt.s32.totalorder %v3686, 2
      %vm3707 = vcmp.lt.s32.totalorder %v3686, 3
      %vm3708 = vcmp.lt.s32.totalorder %v3686, 4
      %v3709 = vsel %vm3705, %v3689, %v3692
      %v3710 = vsel %vm3708, %v3698, 2102212464
      %v3711 = vsel %vm3707, %v3695, %v3710
      %v3712 = vsel %vm3706, %v3709, %v3711
      %v3713 = vsel %vm3705, %v3692, %v3695
      %v3714 = vsel %vm3708, %v3701, 920167782
      %v3715 = vsel %vm3707, %v3698, %v3714
      %v3716 = vsel %vm3706, %v3713, %v3715
      %v3717 = vsel %vm3705, %v3695, %v3698
      %v3718 = vsel %vm3708, %v3704, 1326507024
      %v3719 = vsel %vm3707, %v3701, %v3718
      %v3720 = vsel %vm3706, %v3717, %v3719
      %v3721 = vshll.u32 %v3681, 8
      %v3722 = vmul.u32.u64.compose %v3721, %v3720
      %v3723 = vextract.low.u32 %v3722
      %v3724 = vextract.high.u32 %v3722
      %v3725 = vmul.u32.u64.compose %v3721, %v3716
      %v3726 = vextract.low.u32 %v3725
      %v3727 = vextract.high.u32 %v3725
      %v3728 = vmul.u32 %v3721, %v3712
      %v3729 = vadd.s32 %v3724, %v3726
      %vm3730 = vc.u32 %v3724, %v3726
      %v3731 = vadd.s32 %v3727, 1
      %v3732 = vsel %vm3730, %v3731, %v3727
      %v3733 = vadd.s32 %v3728, %v3732
      %v3734 = vadd.s32 %v3733, 536870912
      %v3735 = vshrl.u32 %v3734, 30
      %v3736 = vshll.u32 %v3735, 30
      %v3737 = vsub.s32 %v3733, %v3736
      %vm3738 = vcmp.lt.s32.totalorder %v3737, 0
      %v3739 = vsub.s32 0, %v3737
      %v3740 = vsel %vm3738, %v3739, %v3737
      %v3741 = vclz %v3740
      %v3742 = vsub.s32 %v3741, 2
      %vm3743 = vcmp.gt.s32.totalorder 0, %v3742
      %v3744 = vsel %vm3743, 0, %v3742
      %v3745 = vsub.s32 32, %v3744
      %v3746 = vshll.u32 %v3737, %v3744
      %v3747 = vshrl.u32 %v3729, %v3745
      %v3748 = vor.u32 %v3746, %v3747
      %v3749 = vsub.s32 4294967266, %v3744
      %v3750 = vadd.s32 %v3749, 127
      %v3751 = vshll.u32 %v3750, 23
      %v3752 = vor.u32 4788187, %v3751
      %v3753 = vand.u32 2147483647, %v3752
      %v3755 = vcvt.s32.f32 %v3748
      %v3756 = vmul.f32 %v3755, %v3753
      %v3757 = vxor.u32 %v3756, 2147483648
      %v3758 = vsel %vm3675, %v3757, %v3756
      %v3759 = vsub.s32 4, %v3735
      %v3760 = vsel %vm3675, %v3759, %v3735
      %v3761 = vsel %vm3674, %v890, %v3758
      %v3762 = vsel %vm3674, 0, %v3760
      %v3763 = vcosq.f32.pop %v3761
      %v3764 = vsinq.f32.pop %v3761
      %vm3765 = vweird.f32 %v890
      %v3766 = vadd.s32 %v3762, 3
      %v3767 = vand.u32 %v3766, 3
      %vm3768 = vcmp.lt.s32.totalorder %v3767, 2
      %vm3769 = vcmp.eq.s32.totalorder %v3767, 0
      %v3770 = vxor.u32 %v3764, 2147483648
      %v3771 = vsel %vm3769, %v3763, %v3770
      %vm3772 = vcmp.eq.s32.totalorder %v3767, 2
      %v3773 = vxor.u32 %v3763, 2147483648
      %v3774 = vsel %vm3772, %v3773, %v3764
      %v3775 = vsel %vm3768, %v3771, %v3774
      %v3776 = vsel %vm3765, nan, %v3775
      %v3777 = vand.u32 2147483647, %v891
      %vm3778 = vcmp.le.f32.partialorder %v3777, 0.7853982
      %vm3779 = vcmp.lt.s32.totalorder %v891, 0
      %v3780 = vand.u32 %v891, 2139095040
      %v3781 = vshrl.u32 %v3780, 23
      %v3782 = vsub.s32 %v3781, 127
      %v3783 = vand.u32 2147483647, %v891
      %v3784 = vand.u32 %v3783, 8388607
      %v3785 = vor.u32 %v3784, 8388608
      %v3786 = vsub.s32 0, %v3785
      %v3787 = vadd.s32 %v3782, 1
      %vm3788 = vcmp.gt.s32.totalorder %v3787, 0
      %v3789 = vsel %vm3788, %v3787, 0
      %v3790 = vshrl.u32 %v3789, 5
      %v3791 = vand.u32 %v3789, 31
      %v3792 = vsub.s32 32, %v3791
      %v3793 = vshrl.u32 683565275, %v3792
      %v3794 = vshll.u32 683565275, %v3791
      %v3795 = vshrl.u32 2475754826, %v3792
      %v3796 = vor.u32 %v3794, %v3795
      %v3797 = vshll.u32 2475754826, %v3791
      %v3798 = vshrl.u32 2131351028, %v3792
      %v3799 = vor.u32 %v3797, %v3798
      %v3800 = vshll.u32 2131351028, %v3791
      %v3801 = vshrl.u32 2102212464, %v3792
      %v3802 = vor.u32 %v3800, %v3801
      %v3803 = vshll.u32 2102212464, %v3791
      %v3804 = vshrl.u32 920167782, %v3792
      %v3805 = vor.u32 %v3803, %v3804
      %v3806 = vshll.u32 920167782, %v3791
      %v3807 = vshrl.u32 1326507024, %v3792
      %v3808 = vor.u32 %v3806, %v3807
      %vm3809 = vcmp.lt.s32.totalorder %v3790, 1
      %vm3810 = vcmp.lt.s32.totalorder %v3790, 2
      %vm3811 = vcmp.lt.s32.totalorder %v3790, 3
      %vm3812 = vcmp.lt.s32.totalorder %v3790, 4
      %v3813 = vsel %vm3809, %v3793, %v3796
      %v3814 = vsel %vm3812, %v3802, 2102212464
      %v3815 = vsel %vm3811, %v3799, %v3814
      %v3816 = vsel %vm3810, %v3813, %v3815
      %v3817 = vsel %vm3809, %v3796, %v3799
      %v3818 = vsel %vm3812, %v3805, 920167782
      %v3819 = vsel %vm3811, %v3802, %v3818
      %v3820 = vsel %vm3810, %v3817, %v3819
      %v3821 = vsel %vm3809, %v3799, %v3802
      %v3822 = vsel %vm3812, %v3808, 1326507024
      %v3823 = vsel %vm3811, %v3805, %v3822
      %v3824 = vsel %vm3810, %v3821, %v3823
      %v3825 = vshll.u32 %v3785, 8
      %v3826 = vmul.u32.u64.compose %v3825, %v3824
      %v3827 = vextract.low.u32 %v3826
      %v3828 = vextract.high.u32 %v3826
      %v3829 = vmul.u32.u64.compose %v3825, %v3820
      %v3830 = vextract.low.u32 %v3829
      %v3831 = vextract.high.u32 %v3829
      %v3832 = vmul.u32 %v3825, %v3816
      %v3833 = vadd.s32 %v3828, %v3830
      %vm3834 = vc.u32 %v3828, %v3830
      %v3835 = vadd.s32 %v3831, 1
      %v3836 = vsel %vm3834, %v3835, %v3831
      %v3837 = vadd.s32 %v3832, %v3836
      %v3838 = vadd.s32 %v3837, 536870912
      %v3839 = vshrl.u32 %v3838, 30
      %v3840 = vshll.u32 %v3839, 30
      %v3841 = vsub.s32 %v3837, %v3840
      %vm3842 = vcmp.lt.s32.totalorder %v3841, 0
      %v3843 = vsub.s32 0, %v3841
      %v3844 = vsel %vm3842, %v3843, %v3841
      %v3845 = vclz %v3844
      %v3846 = vsub.s32 %v3845, 2
      %vm3847 = vcmp.gt.s32.totalorder 0, %v3846
      %v3848 = vsel %vm3847, 0, %v3846
      %v3849 = vsub.s32 32, %v3848
      %v3850 = vshll.u32 %v3841, %v3848
      %v3851 = vshrl.u32 %v3833, %v3849
      %v3852 = vor.u32 %v3850, %v3851
      %v3853 = vsub.s32 4294967266, %v3848
      %v3854 = vadd.s32 %v3853, 127
      %v3855 = vshll.u32 %v3854, 23
      %v3856 = vor.u32 4788187, %v3855
      %v3857 = vand.u32 2147483647, %v3856
      %v3859 = vcvt.s32.f32 %v3852
      %v3860 = vmul.f32 %v3859, %v3857
      %v3861 = vxor.u32 %v3860, 2147483648
      %v3862 = vsel %vm3779, %v3861, %v3860
      %v3863 = vsub.s32 4, %v3839
      %v3864 = vsel %vm3779, %v3863, %v3839
      %v3865 = vsel %vm3778, %v891, %v3862
      %v3866 = vsel %vm3778, 0, %v3864
      %v3867 = vcosq.f32.pop %v3865
      %v3868 = vsinq.f32.pop %v3865
      %vm3869 = vweird.f32 %v891
      %v3870 = vadd.s32 %v3866, 3
      %v3871 = vand.u32 %v3870, 3
      %vm3872 = vcmp.lt.s32.totalorder %v3871, 2
      %vm3873 = vcmp.eq.s32.totalorder %v3871, 0
      %v3874 = vxor.u32 %v3868, 2147483648
      %v3875 = vsel %vm3873, %v3867, %v3874
      %vm3876 = vcmp.eq.s32.totalorder %v3871, 2
      %v3877 = vxor.u32 %v3867, 2147483648
      %v3878 = vsel %vm3876, %v3877, %v3868
      %v3879 = vsel %vm3872, %v3875, %v3878
      %v3880 = vsel %vm3869, nan, %v3879
      %v3881 = vand.u32 2147483647, %v892
      %vm3882 = vcmp.le.f32.partialorder %v3881, 0.7853982
      %vm3883 = vcmp.lt.s32.totalorder %v892, 0
      %v3884 = vand.u32 %v892, 2139095040
      %v3885 = vshrl.u32 %v3884, 23
      %v3886 = vsub.s32 %v3885, 127
      %v3887 = vand.u32 2147483647, %v892
      %v3888 = vand.u32 %v3887, 8388607
      %v3889 = vor.u32 %v3888, 8388608
      %v3890 = vsub.s32 0, %v3889
      %v3891 = vadd.s32 %v3886, 1
      %vm3892 = vcmp.gt.s32.totalorder %v3891, 0
      %v3893 = vsel %vm3892, %v3891, 0
      %v3894 = vshrl.u32 %v3893, 5
      %v3895 = vand.u32 %v3893, 31
      %v3896 = vsub.s32 32, %v3895
      %v3897 = vshrl.u32 683565275, %v3896
      %v3898 = vshll.u32 683565275, %v3895
      %v3899 = vshrl.u32 2475754826, %v3896
      %v3900 = vor.u32 %v3898, %v3899
      %v3901 = vshll.u32 2475754826, %v3895
      %v3902 = vshrl.u32 2131351028, %v3896
      %v3903 = vor.u32 %v3901, %v3902
      %v3904 = vshll.u32 2131351028, %v3895
      %v3905 = vshrl.u32 2102212464, %v3896
      %v3906 = vor.u32 %v3904, %v3905
      %v3907 = vshll.u32 2102212464, %v3895
      %v3908 = vshrl.u32 920167782, %v3896
      %v3909 = vor.u32 %v3907, %v3908
      %v3910 = vshll.u32 920167782, %v3895
      %v3911 = vshrl.u32 1326507024, %v3896
      %v3912 = vor.u32 %v3910, %v3911
      %vm3913 = vcmp.lt.s32.totalorder %v3894, 1
      %vm3914 = vcmp.lt.s32.totalorder %v3894, 2
      %vm3915 = vcmp.lt.s32.totalorder %v3894, 3
      %vm3916 = vcmp.lt.s32.totalorder %v3894, 4
      %v3917 = vsel %vm3913, %v3897, %v3900
      %v3918 = vsel %vm3916, %v3906, 2102212464
      %v3919 = vsel %vm3915, %v3903, %v3918
      %v3920 = vsel %vm3914, %v3917, %v3919
      %v3921 = vsel %vm3913, %v3900, %v3903
      %v3922 = vsel %vm3916, %v3909, 920167782
      %v3923 = vsel %vm3915, %v3906, %v3922
      %v3924 = vsel %vm3914, %v3921, %v3923
      %v3925 = vsel %vm3913, %v3903, %v3906
      %v3926 = vsel %vm3916, %v3912, 1326507024
      %v3927 = vsel %vm3915, %v3909, %v3926
      %v3928 = vsel %vm3914, %v3925, %v3927
      %v3929 = vshll.u32 %v3889, 8
      %v3930 = vmul.u32.u64.compose %v3929, %v3928
      %v3931 = vextract.low.u32 %v3930
      %v3932 = vextract.high.u32 %v3930
      %v3933 = vmul.u32.u64.compose %v3929, %v3924
      %v3934 = vextract.low.u32 %v3933
      %v3935 = vextract.high.u32 %v3933
      %v3936 = vmul.u32 %v3929, %v3920
      %v3937 = vadd.s32 %v3932, %v3934
      %vm3938 = vc.u32 %v3932, %v3934
      %v3939 = vadd.s32 %v3935, 1
      %v3940 = vsel %vm3938, %v3939, %v3935
      %v3941 = vadd.s32 %v3936, %v3940
      %v3942 = vadd.s32 %v3941, 536870912
      %v3943 = vshrl.u32 %v3942, 30
      %v3944 = vshll.u32 %v3943, 30
      %v3945 = vsub.s32 %v3941, %v3944
      %vm3946 = vcmp.lt.s32.totalorder %v3945, 0
      %v3947 = vsub.s32 0, %v3945
      %v3948 = vsel %vm3946, %v3947, %v3945
      %v3949 = vclz %v3948
      %v3950 = vsub.s32 %v3949, 2
      %vm3951 = vcmp.gt.s32.totalorder 0, %v3950
      %v3952 = vsel %vm3951, 0, %v3950
      %v3953 = vsub.s32 32, %v3952
      %v3954 = vshll.u32 %v3945, %v3952
      %v3955 = vshrl.u32 %v3937, %v3953
      %v3956 = vor.u32 %v3954, %v3955
      %v3957 = vsub.s32 4294967266, %v3952
      %v3958 = vadd.s32 %v3957, 127
      %v3959 = vshll.u32 %v3958, 23
      %v3960 = vor.u32 4788187, %v3959
      %v3961 = vand.u32 2147483647, %v3960
      %v3963 = vcvt.s32.f32 %v3956
      %v3964 = vmul.f32 %v3963, %v3961
      %v3965 = vxor.u32 %v3964, 2147483648
      %v3966 = vsel %vm3883, %v3965, %v3964
      %v3967 = vsub.s32 4, %v3943
      %v3968 = vsel %vm3883, %v3967, %v3943
      %v3969 = vsel %vm3882, %v892, %v3966
      %v3970 = vsel %vm3882, 0, %v3968
      %v3971 = vcosq.f32.pop %v3969
      %v3972 = vsinq.f32.pop %v3969
      %vm3973 = vweird.f32 %v892
      %v3974 = vadd.s32 %v3970, 3
      %v3975 = vand.u32 %v3974, 3
      %vm3976 = vcmp.lt.s32.totalorder %v3975, 2
      %vm3977 = vcmp.eq.s32.totalorder %v3975, 0
      %v3978 = vxor.u32 %v3972, 2147483648
      %v3979 = vsel %vm3977, %v3971, %v3978
      %vm3980 = vcmp.eq.s32.totalorder %v3975, 2
      %v3981 = vxor.u32 %v3971, 2147483648
      %v3982 = vsel %vm3980, %v3981, %v3972
      %v3983 = vsel %vm3976, %v3979, %v3982
      %v3984 = vsel %vm3973, nan, %v3983
      %v3985 = vand.u32 2147483647, %v893
      %vm3986 = vcmp.le.f32.partialorder %v3985, 0.7853982
      %vm3987 = vcmp.lt.s32.totalorder %v893, 0
      %v3988 = vand.u32 %v893, 2139095040
      %v3989 = vshrl.u32 %v3988, 23
      %v3990 = vsub.s32 %v3989, 127
      %v3991 = vand.u32 2147483647, %v893
      %v3992 = vand.u32 %v3991, 8388607
      %v3993 = vor.u32 %v3992, 8388608
      %v3994 = vsub.s32 0, %v3993
      %v3995 = vadd.s32 %v3990, 1
      %vm3996 = vcmp.gt.s32.totalorder %v3995, 0
      %v3997 = vsel %vm3996, %v3995, 0
      %v3998 = vshrl.u32 %v3997, 5
      %v3999 = vand.u32 %v3997, 31
      %v4000 = vsub.s32 32, %v3999
      %v4001 = vshrl.u32 683565275, %v4000
      %v4002 = vshll.u32 683565275, %v3999
      %v4003 = vshrl.u32 2475754826, %v4000
      %v4004 = vor.u32 %v4002, %v4003
      %v4005 = vshll.u32 2475754826, %v3999
      %v4006 = vshrl.u32 2131351028, %v4000
      %v4007 = vor.u32 %v4005, %v4006
      %v4008 = vshll.u32 2131351028, %v3999
      %v4009 = vshrl.u32 2102212464, %v4000
      %v4010 = vor.u32 %v4008, %v4009
      %v4011 = vshll.u32 2102212464, %v3999
      %v4012 = vshrl.u32 920167782, %v4000
      %v4013 = vor.u32 %v4011, %v4012
      %v4014 = vshll.u32 920167782, %v3999
      %v4015 = vshrl.u32 1326507024, %v4000
      %v4016 = vor.u32 %v4014, %v4015
      %vm4017 = vcmp.lt.s32.totalorder %v3998, 1
      %vm4018 = vcmp.lt.s32.totalorder %v3998, 2
      %vm4019 = vcmp.lt.s32.totalorder %v3998, 3
      %vm4020 = vcmp.lt.s32.totalorder %v3998, 4
      %v4021 = vsel %vm4017, %v4001, %v4004
      %v4022 = vsel %vm4020, %v4010, 2102212464
      %v4023 = vsel %vm4019, %v4007, %v4022
      %v4024 = vsel %vm4018, %v4021, %v4023
      %v4025 = vsel %vm4017, %v4004, %v4007
      %v4026 = vsel %vm4020, %v4013, 920167782
      %v4027 = vsel %vm4019, %v4010, %v4026
      %v4028 = vsel %vm4018, %v4025, %v4027
      %v4029 = vsel %vm4017, %v4007, %v4010
      %v4030 = vsel %vm4020, %v4016, 1326507024
      %v4031 = vsel %vm4019, %v4013, %v4030
      %v4032 = vsel %vm4018, %v4029, %v4031
      %v4033 = vshll.u32 %v3993, 8
      %v4034 = vmul.u32.u64.compose %v4033, %v4032
      %v4035 = vextract.low.u32 %v4034
      %v4036 = vextract.high.u32 %v4034
      %v4037 = vmul.u32.u64.compose %v4033, %v4028
      %v4038 = vextract.low.u32 %v4037
      %v4039 = vextract.high.u32 %v4037
      %v4040 = vmul.u32 %v4033, %v4024
      %v4041 = vadd.s32 %v4036, %v4038
      %vm4042 = vc.u32 %v4036, %v4038
      %v4043 = vadd.s32 %v4039, 1
      %v4044 = vsel %vm4042, %v4043, %v4039
      %v4045 = vadd.s32 %v4040, %v4044
      %v4046 = vadd.s32 %v4045, 536870912
      %v4047 = vshrl.u32 %v4046, 30
      %v4048 = vshll.u32 %v4047, 30
      %v4049 = vsub.s32 %v4045, %v4048
      %vm4050 = vcmp.lt.s32.totalorder %v4049, 0
      %v4051 = vsub.s32 0, %v4049
      %v4052 = vsel %vm4050, %v4051, %v4049
      %v4053 = vclz %v4052
      %v4054 = vsub.s32 %v4053, 2
      %vm4055 = vcmp.gt.s32.totalorder 0, %v4054
      %v4056 = vsel %vm4055, 0, %v4054
      %v4057 = vsub.s32 32, %v4056
      %v4058 = vshll.u32 %v4049, %v4056
      %v4059 = vshrl.u32 %v4041, %v4057
      %v4060 = vor.u32 %v4058, %v4059
      %v4061 = vsub.s32 4294967266, %v4056
      %v4062 = vadd.s32 %v4061, 127
      %v4063 = vshll.u32 %v4062, 23
      %v4064 = vor.u32 4788187, %v4063
      %v4065 = vand.u32 2147483647, %v4064
      %v4067 = vcvt.s32.f32 %v4060
      %v4068 = vmul.f32 %v4067, %v4065
      %v4069 = vxor.u32 %v4068, 2147483648
      %v4070 = vsel %vm3987, %v4069, %v4068
      %v4071 = vsub.s32 4, %v4047
      %v4072 = vsel %vm3987, %v4071, %v4047
      %v4073 = vsel %vm3986, %v893, %v4070
      %v4074 = vsel %vm3986, 0, %v4072
      %v4075 = vcosq.f32.pop %v4073
      %v4076 = vsinq.f32.pop %v4073
      %vm4077 = vweird.f32 %v893
      %v4078 = vadd.s32 %v4074, 3
      %v4079 = vand.u32 %v4078, 3
      %vm4080 = vcmp.lt.s32.totalorder %v4079, 2
      %vm4081 = vcmp.eq.s32.totalorder %v4079, 0
      %v4082 = vxor.u32 %v4076, 2147483648
      %v4083 = vsel %vm4081, %v4075, %v4082
      %vm4084 = vcmp.eq.s32.totalorder %v4079, 2
      %v4085 = vxor.u32 %v4075, 2147483648
      %v4086 = vsel %vm4084, %v4085, %v4076
      %v4087 = vsel %vm4080, %v4083, %v4086
      %v4088 = vsel %vm4077, nan, %v4087
      %v4089 = vand.u32 2147483647, %v894
      %vm4090 = vcmp.le.f32.partialorder %v4089, 0.7853982
      %vm4091 = vcmp.lt.s32.totalorder %v894, 0
      %v4092 = vand.u32 %v894, 2139095040
      %v4093 = vshrl.u32 %v4092, 23
      %v4094 = vsub.s32 %v4093, 127
      %v4095 = vand.u32 2147483647, %v894
      %v4096 = vand.u32 %v4095, 8388607
      %v4097 = vor.u32 %v4096, 8388608
      %v4098 = vsub.s32 0, %v4097
      %v4099 = vadd.s32 %v4094, 1
      %vm4100 = vcmp.gt.s32.totalorder %v4099, 0
      %v4101 = vsel %vm4100, %v4099, 0
      %v4102 = vshrl.u32 %v4101, 5
      %v4103 = vand.u32 %v4101, 31
      %v4104 = vsub.s32 32, %v4103
      %v4105 = vshrl.u32 683565275, %v4104
      %v4106 = vshll.u32 683565275, %v4103
      %v4107 = vshrl.u32 2475754826, %v4104
      %v4108 = vor.u32 %v4106, %v4107
      %v4109 = vshll.u32 2475754826, %v4103
      %v4110 = vshrl.u32 2131351028, %v4104
      %v4111 = vor.u32 %v4109, %v4110
      %v4112 = vshll.u32 2131351028, %v4103
      %v4113 = vshrl.u32 2102212464, %v4104
      %v4114 = vor.u32 %v4112, %v4113
      %v4115 = vshll.u32 2102212464, %v4103
      %v4116 = vshrl.u32 920167782, %v4104
      %v4117 = vor.u32 %v4115, %v4116
      %v4118 = vshll.u32 920167782, %v4103
      %v4119 = vshrl.u32 1326507024, %v4104
      %v4120 = vor.u32 %v4118, %v4119
      %vm4121 = vcmp.lt.s32.totalorder %v4102, 1
      %vm4122 = vcmp.lt.s32.totalorder %v4102, 2
      %vm4123 = vcmp.lt.s32.totalorder %v4102, 3
      %vm4124 = vcmp.lt.s32.totalorder %v4102, 4
      %v4125 = vsel %vm4121, %v4105, %v4108
      %v4126 = vsel %vm4124, %v4114, 2102212464
      %v4127 = vsel %vm4123, %v4111, %v4126
      %v4128 = vsel %vm4122, %v4125, %v4127
      %v4129 = vsel %vm4121, %v4108, %v4111
      %v4130 = vsel %vm4124, %v4117, 920167782
      %v4131 = vsel %vm4123, %v4114, %v4130
      %v4132 = vsel %vm4122, %v4129, %v4131
      %v4133 = vsel %vm4121, %v4111, %v4114
      %v4134 = vsel %vm4124, %v4120, 1326507024
      %v4135 = vsel %vm4123, %v4117, %v4134
      %v4136 = vsel %vm4122, %v4133, %v4135
      %v4137 = vshll.u32 %v4097, 8
      %v4138 = vmul.u32.u64.compose %v4137, %v4136
      %v4139 = vextract.low.u32 %v4138
      %v4140 = vextract.high.u32 %v4138
      %v4141 = vmul.u32.u64.compose %v4137, %v4132
      %v4142 = vextract.low.u32 %v4141
      %v4143 = vextract.high.u32 %v4141
      %v4144 = vmul.u32 %v4137, %v4128
      %v4145 = vadd.s32 %v4140, %v4142
      %vm4146 = vc.u32 %v4140, %v4142
      %v4147 = vadd.s32 %v4143, 1
      %v4148 = vsel %vm4146, %v4147, %v4143
      %v4149 = vadd.s32 %v4144, %v4148
      %v4150 = vadd.s32 %v4149, 536870912
      %v4151 = vshrl.u32 %v4150, 30
      %v4152 = vshll.u32 %v4151, 30
      %v4153 = vsub.s32 %v4149, %v4152
      %vm4154 = vcmp.lt.s32.totalorder %v4153, 0
      %v4155 = vsub.s32 0, %v4153
      %v4156 = vsel %vm4154, %v4155, %v4153
      %v4157 = vclz %v4156
      %v4158 = vsub.s32 %v4157, 2
      %vm4159 = vcmp.gt.s32.totalorder 0, %v4158
      %v4160 = vsel %vm4159, 0, %v4158
      %v4161 = vsub.s32 32, %v4160
      %v4162 = vshll.u32 %v4153, %v4160
      %v4163 = vshrl.u32 %v4145, %v4161
      %v4164 = vor.u32 %v4162, %v4163
      %v4165 = vsub.s32 4294967266, %v4160
      %v4166 = vadd.s32 %v4165, 127
      %v4167 = vshll.u32 %v4166, 23
      %v4168 = vor.u32 4788187, %v4167
      %v4169 = vand.u32 2147483647, %v4168
      %v4171 = vcvt.s32.f32 %v4164
      %v4172 = vmul.f32 %v4171, %v4169
      %v4173 = vxor.u32 %v4172, 2147483648
      %v4174 = vsel %vm4091, %v4173, %v4172
      %v4175 = vsub.s32 4, %v4151
      %v4176 = vsel %vm4091, %v4175, %v4151
      %v4177 = vsel %vm4090, %v894, %v4174
      %v4178 = vsel %vm4090, 0, %v4176
      %v4179 = vcosq.f32.pop %v4177
      %v4180 = vsinq.f32.pop %v4177
      %vm4181 = vweird.f32 %v894
      %v4182 = vadd.s32 %v4178, 3
      %v4183 = vand.u32 %v4182, 3
      %vm4184 = vcmp.lt.s32.totalorder %v4183, 2
      %vm4185 = vcmp.eq.s32.totalorder %v4183, 0
      %v4186 = vxor.u32 %v4180, 2147483648
      %v4187 = vsel %vm4185, %v4179, %v4186
      %vm4188 = vcmp.eq.s32.totalorder %v4183, 2
      %v4189 = vxor.u32 %v4179, 2147483648
      %v4190 = vsel %vm4188, %v4189, %v4180
      %v4191 = vsel %vm4184, %v4187, %v4190
      %v4192 = vsel %vm4181, nan, %v4191
      %v4193 = vand.u32 2147483647, %v895
      %vm4194 = vcmp.le.f32.partialorder %v4193, 0.7853982
      %vm4195 = vcmp.lt.s32.totalorder %v895, 0
      %v4196 = vand.u32 %v895, 2139095040
      %v4197 = vshrl.u32 %v4196, 23
      %v4198 = vsub.s32 %v4197, 127
      %v4199 = vand.u32 2147483647, %v895
      %v4200 = vand.u32 %v4199, 8388607
      %v4201 = vor.u32 %v4200, 8388608
      %v4202 = vsub.s32 0, %v4201
      %v4203 = vadd.s32 %v4198, 1
      %vm4204 = vcmp.gt.s32.totalorder %v4203, 0
      %v4205 = vsel %vm4204, %v4203, 0
      %v4206 = vshrl.u32 %v4205, 5
      %v4207 = vand.u32 %v4205, 31
      %v4208 = vsub.s32 32, %v4207
      %v4209 = vshrl.u32 683565275, %v4208
      %v4210 = vshll.u32 683565275, %v4207
      %v4211 = vshrl.u32 2475754826, %v4208
      %v4212 = vor.u32 %v4210, %v4211
      %v4213 = vshll.u32 2475754826, %v4207
      %v4214 = vshrl.u32 2131351028, %v4208
      %v4215 = vor.u32 %v4213, %v4214
      %v4216 = vshll.u32 2131351028, %v4207
      %v4217 = vshrl.u32 2102212464, %v4208
      %v4218 = vor.u32 %v4216, %v4217
      %v4219 = vshll.u32 2102212464, %v4207
      %v4220 = vshrl.u32 920167782, %v4208
      %v4221 = vor.u32 %v4219, %v4220
      %v4222 = vshll.u32 920167782, %v4207
      %v4223 = vshrl.u32 1326507024, %v4208
      %v4224 = vor.u32 %v4222, %v4223
      %vm4225 = vcmp.lt.s32.totalorder %v4206, 1
      %vm4226 = vcmp.lt.s32.totalorder %v4206, 2
      %vm4227 = vcmp.lt.s32.totalorder %v4206, 3
      %vm4228 = vcmp.lt.s32.totalorder %v4206, 4
      %v4229 = vsel %vm4225, %v4209, %v4212
      %v4230 = vsel %vm4228, %v4218, 2102212464
      %v4231 = vsel %vm4227, %v4215, %v4230
      %v4232 = vsel %vm4226, %v4229, %v4231
      %v4233 = vsel %vm4225, %v4212, %v4215
      %v4234 = vsel %vm4228, %v4221, 920167782
      %v4235 = vsel %vm4227, %v4218, %v4234
      %v4236 = vsel %vm4226, %v4233, %v4235
      %v4237 = vsel %vm4225, %v4215, %v4218
      %v4238 = vsel %vm4228, %v4224, 1326507024
      %v4239 = vsel %vm4227, %v4221, %v4238
      %v4240 = vsel %vm4226, %v4237, %v4239
      %v4241 = vshll.u32 %v4201, 8
      %v4242 = vmul.u32.u64.compose %v4241, %v4240
      %v4243 = vextract.low.u32 %v4242
      %v4244 = vextract.high.u32 %v4242
      %v4245 = vmul.u32.u64.compose %v4241, %v4236
      %v4246 = vextract.low.u32 %v4245
      %v4247 = vextract.high.u32 %v4245
      %v4248 = vmul.u32 %v4241, %v4232
      %v4249 = vadd.s32 %v4244, %v4246
      %vm4250 = vc.u32 %v4244, %v4246
      %v4251 = vadd.s32 %v4247, 1
      %v4252 = vsel %vm4250, %v4251, %v4247
      %v4253 = vadd.s32 %v4248, %v4252
      %v4254 = vadd.s32 %v4253, 536870912
      %v4255 = vshrl.u32 %v4254, 30
      %v4256 = vshll.u32 %v4255, 30
      %v4257 = vsub.s32 %v4253, %v4256
      %vm4258 = vcmp.lt.s32.totalorder %v4257, 0
      %v4259 = vsub.s32 0, %v4257
      %v4260 = vsel %vm4258, %v4259, %v4257
      %v4261 = vclz %v4260
      %v4262 = vsub.s32 %v4261, 2
      %vm4263 = vcmp.gt.s32.totalorder 0, %v4262
      %v4264 = vsel %vm4263, 0, %v4262
      %v4265 = vsub.s32 32, %v4264
      %v4266 = vshll.u32 %v4257, %v4264
      %v4267 = vshrl.u32 %v4249, %v4265
      %v4268 = vor.u32 %v4266, %v4267
      %v4269 = vsub.s32 4294967266, %v4264
      %v4270 = vadd.s32 %v4269, 127
      %v4271 = vshll.u32 %v4270, 23
      %v4272 = vor.u32 4788187, %v4271
      %v4273 = vand.u32 2147483647, %v4272
      %v4275 = vcvt.s32.f32 %v4268
      %v4276 = vmul.f32 %v4275, %v4273
      %v4277 = vxor.u32 %v4276, 2147483648
      %v4278 = vsel %vm4195, %v4277, %v4276
      %v4279 = vsub.s32 4, %v4255
      %v4280 = vsel %vm4195, %v4279, %v4255
      %v4281 = vsel %vm4194, %v895, %v4278
      %v4282 = vsel %vm4194, 0, %v4280
      %v4283 = vcosq.f32.pop %v4281
      %v4284 = vsinq.f32.pop %v4281
      %vm4285 = vweird.f32 %v895
      %v4286 = vadd.s32 %v4282, 3
      %v4287 = vand.u32 %v4286, 3
      %vm4288 = vcmp.lt.s32.totalorder %v4287, 2
      %vm4289 = vcmp.eq.s32.totalorder %v4287, 0
      %v4290 = vxor.u32 %v4284, 2147483648
      %v4291 = vsel %vm4289, %v4283, %v4290
      %vm4292 = vcmp.eq.s32.totalorder %v4287, 2
      %v4293 = vxor.u32 %v4283, 2147483648
      %v4294 = vsel %vm4292, %v4293, %v4284
      %v4295 = vsel %vm4288, %v4291, %v4294
      %v4296 = vsel %vm4285, nan, %v4295
      %v4297 = vand.u32 2147483647, %v896
      %vm4298 = vcmp.le.f32.partialorder %v4297, 0.7853982
      %vm4299 = vcmp.lt.s32.totalorder %v896, 0
      %v4300 = vand.u32 %v896, 2139095040
      %v4301 = vshrl.u32 %v4300, 23
      %v4302 = vsub.s32 %v4301, 127
      %v4303 = vand.u32 2147483647, %v896
      %v4304 = vand.u32 %v4303, 8388607
      %v4305 = vor.u32 %v4304, 8388608
      %v4306 = vsub.s32 0, %v4305
      %v4307 = vadd.s32 %v4302, 1
      %vm4308 = vcmp.gt.s32.totalorder %v4307, 0
      %v4309 = vsel %vm4308, %v4307, 0
      %v4310 = vshrl.u32 %v4309, 5
      %v4311 = vand.u32 %v4309, 31
      %v4312 = vsub.s32 32, %v4311
      %v4313 = vshrl.u32 683565275, %v4312
      %v4314 = vshll.u32 683565275, %v4311
      %v4315 = vshrl.u32 2475754826, %v4312
      %v4316 = vor.u32 %v4314, %v4315
      %v4317 = vshll.u32 2475754826, %v4311
      %v4318 = vshrl.u32 2131351028, %v4312
      %v4319 = vor.u32 %v4317, %v4318
      %v4320 = vshll.u32 2131351028, %v4311
      %v4321 = vshrl.u32 2102212464, %v4312
      %v4322 = vor.u32 %v4320, %v4321
      %v4323 = vshll.u32 2102212464, %v4311
      %v4324 = vshrl.u32 920167782, %v4312
      %v4325 = vor.u32 %v4323, %v4324
      %v4326 = vshll.u32 920167782, %v4311
      %v4327 = vshrl.u32 1326507024, %v4312
      %v4328 = vor.u32 %v4326, %v4327
      %vm4329 = vcmp.lt.s32.totalorder %v4310, 1
      %vm4330 = vcmp.lt.s32.totalorder %v4310, 2
      %vm4331 = vcmp.lt.s32.totalorder %v4310, 3
      %vm4332 = vcmp.lt.s32.totalorder %v4310, 4
      %v4333 = vsel %vm4329, %v4313, %v4316
      %v4334 = vsel %vm4332, %v4322, 2102212464
      %v4335 = vsel %vm4331, %v4319, %v4334
      %v4336 = vsel %vm4330, %v4333, %v4335
      %v4337 = vsel %vm4329, %v4316, %v4319
      %v4338 = vsel %vm4332, %v4325, 920167782
      %v4339 = vsel %vm4331, %v4322, %v4338
      %v4340 = vsel %vm4330, %v4337, %v4339
      %v4341 = vsel %vm4329, %v4319, %v4322
      %v4342 = vsel %vm4332, %v4328, 1326507024
      %v4343 = vsel %vm4331, %v4325, %v4342
      %v4344 = vsel %vm4330, %v4341, %v4343
      %v4345 = vshll.u32 %v4305, 8
      %v4346 = vmul.u32.u64.compose %v4345, %v4344
      %v4347 = vextract.low.u32 %v4346
      %v4348 = vextract.high.u32 %v4346
      %v4349 = vmul.u32.u64.compose %v4345, %v4340
      %v4350 = vextract.low.u32 %v4349
      %v4351 = vextract.high.u32 %v4349
      %v4352 = vmul.u32 %v4345, %v4336
      %v4353 = vadd.s32 %v4348, %v4350
      %vm4354 = vc.u32 %v4348, %v4350
      %v4355 = vadd.s32 %v4351, 1
      %v4356 = vsel %vm4354, %v4355, %v4351
      %v4357 = vadd.s32 %v4352, %v4356
      %v4358 = vadd.s32 %v4357, 536870912
      %v4359 = vshrl.u32 %v4358, 30
      %v4360 = vshll.u32 %v4359, 30
      %v4361 = vsub.s32 %v4357, %v4360
      %vm4362 = vcmp.lt.s32.totalorder %v4361, 0
      %v4363 = vsub.s32 0, %v4361
      %v4364 = vsel %vm4362, %v4363, %v4361
      %v4365 = vclz %v4364
      %v4366 = vsub.s32 %v4365, 2
      %vm4367 = vcmp.gt.s32.totalorder 0, %v4366
      %v4368 = vsel %vm4367, 0, %v4366
      %v4369 = vsub.s32 32, %v4368
      %v4370 = vshll.u32 %v4361, %v4368
      %v4371 = vshrl.u32 %v4353, %v4369
      %v4372 = vor.u32 %v4370, %v4371
      %v4373 = vsub.s32 4294967266, %v4368
      %v4374 = vadd.s32 %v4373, 127
      %v4375 = vshll.u32 %v4374, 23
      %v4376 = vor.u32 4788187, %v4375
      %v4377 = vand.u32 2147483647, %v4376
      %v4379 = vcvt.s32.f32 %v4372
      %v4380 = vmul.f32 %v4379, %v4377
      %v4381 = vxor.u32 %v4380, 2147483648
      %v4382 = vsel %vm4299, %v4381, %v4380
      %v4383 = vsub.s32 4, %v4359
      %v4384 = vsel %vm4299, %v4383, %v4359
      %v4385 = vsel %vm4298, %v896, %v4382
      %v4386 = vsel %vm4298, 0, %v4384
      %v4387 = vcosq.f32.pop %v4385
      %v4388 = vsinq.f32.pop %v4385
      %vm4389 = vweird.f32 %v896
      %v4390 = vadd.s32 %v4386, 3
      %v4391 = vand.u32 %v4390, 3
      %vm4392 = vcmp.lt.s32.totalorder %v4391, 2
      %vm4393 = vcmp.eq.s32.totalorder %v4391, 0
      %v4394 = vxor.u32 %v4388, 2147483648
      %v4395 = vsel %vm4393, %v4387, %v4394
      %vm4396 = vcmp.eq.s32.totalorder %v4391, 2
      %v4397 = vxor.u32 %v4387, 2147483648
      %v4398 = vsel %vm4396, %v4397, %v4388
      %v4399 = vsel %vm4392, %v4395, %v4398
      %v4400 = vsel %vm4389, nan, %v4399
      %4417 = vrot.lane.b32.xlu0 %v2840, 32
      %v4418 = vpop.permute.xlu0 %4417
      %4419 = vrot.lane.b32.xlu0 %v2944, 32
      %v4420 = vpop.permute.xlu0 %4419
      %4421 = vrot.lane.b32.xlu0 %v3048, 32
      %v4422 = vpop.permute.xlu0 %4421
      %4423 = vrot.lane.b32.xlu0 %v3152, 32
      %v4424 = vpop.permute.xlu0 %4423
      %4425 = vrot.lane.b32.xlu0 %v3256, 32
      %v4426 = vpop.permute.xlu0 %4425
      %4427 = vrot.lane.b32.xlu0 %v3360, 32
      %v4428 = vpop.permute.xlu0 %4427
      %4429 = vrot.lane.b32.xlu0 %v3464, 32
      %v4430 = vpop.permute.xlu0 %4429
      %4431 = vrot.lane.b32.xlu0 %v3568, 32
      %v4432 = vpop.permute.xlu0 %4431
      %4433 = vrot.lane.b32.xlu0 %v3672, 32
      %v4434 = vpop.permute.xlu0 %4433
      %4435 = vrot.lane.b32.xlu0 %v3776, 32
      %v4436 = vpop.permute.xlu0 %4435
      %4437 = vrot.lane.b32.xlu0 %v3880, 32
      %v4438 = vpop.permute.xlu0 %4437
      %4439 = vrot.lane.b32.xlu0 %v3984, 32
      %v4440 = vpop.permute.xlu0 %4439
      %4441 = vrot.lane.b32.xlu0 %v4088, 32
      %v4442 = vpop.permute.xlu0 %4441
      %4443 = vrot.lane.b32.xlu0 %v4192, 32
      %v4444 = vpop.permute.xlu0 %4443
      %4445 = vrot.lane.b32.xlu0 %v4296, 32
      %v4446 = vpop.permute.xlu0 %4445
      %4447 = vrot.lane.b32.xlu0 %v4400, 32
      %v4448 = vpop.permute.xlu0 %4447
      %v4465 = vmul.f32 %v898, %v4418
      %v4466 = vmul.f32 %v900, %v4420
      %v4467 = vmul.f32 %v902, %v4422
      %v4468 = vmul.f32 %v904, %v4424
      %v4469 = vmul.f32 %v906, %v4426
      %v4470 = vmul.f32 %v908, %v4428
      %v4471 = vmul.f32 %v910, %v4430
      %v4472 = vmul.f32 %v912, %v4432
      %v4473 = vmul.f32 %v914, %v4434
      %v4474 = vmul.f32 %v916, %v4436
      %v4475 = vmul.f32 %v918, %v4438
      %v4476 = vmul.f32 %v920, %v4440
      %v4477 = vmul.f32 %v922, %v4442
      %v4478 = vmul.f32 %v924, %v4444
      %v4479 = vmul.f32 %v926, %v4446
      %v4480 = vmul.f32 %v928, %v4448
      %vm4481 = vcmask 523520
      %4482 = vst.msk [vmem:[%s221] sm:$0xff] %vm4481, %v4465
      %4483 = vst.msk [vmem:[%s221 + $0x8] sm:$0xff] %vm4481, %v4466
      %4484 = vst.msk [vmem:[%s221 + $0x10] sm:$0xff] %vm4481, %v4467
      %4485 = vst.msk [vmem:[%s221 + $0x18] sm:$0xff] %vm4481, %v4468
      %4486 = vst.msk [vmem:[%s221 + $0x20] sm:$0xff] %vm4481, %v4469
      %4487 = vst.msk [vmem:[%s221 + $0x28] sm:$0xff] %vm4481, %v4470
      %4488 = vst.msk [vmem:[%s221 + $0x30] sm:$0xff] %vm4481, %v4471
      %4489 = vst.msk [vmem:[%s221 + $0x38] sm:$0xff] %vm4481, %v4472
      %4490 = vst.msk [vmem:[%s221 + $0x40] sm:$0xff] %vm4481, %v4473
      %4491 = vst.msk [vmem:[%s221 + $0x48] sm:$0xff] %vm4481, %v4474
      %4492 = vst.msk [vmem:[%s221 + $0x50] sm:$0xff] %vm4481, %v4475
      %4493 = vst.msk [vmem:[%s221 + $0x58] sm:$0xff] %vm4481, %v4476
      %4494 = vst.msk [vmem:[%s221 + $0x60] sm:$0xff] %vm4481, %v4477
      %4495 = vst.msk [vmem:[%s221 + $0x68] sm:$0xff] %vm4481, %v4478
      %4496 = vst.msk [vmem:[%s221 + $0x70] sm:$0xff] %vm4481, %v4479
      %4497 = vst.msk [vmem:[%s221 + $0x78] sm:$0xff] %vm4481, %v4480
      %s4498 = smul.u32 16, %s15
      %p4499 = scmp.lt.s32.totalorder %s4498, 63
      %s4500 = scalar_select %p4499, %s4498, 63
      %s4501 = smul.addr %s4500, 8
      %s4502 = scalar_lea.vmem %s4, %s4501
      // Predicated region
      $region37: #{complex_gabor_layer_packed.1} parent=35 // pred_check
        %p4503 = pneg %p127
      $region38: #{complex_gabor_layer_packed.1} parent=35 // pred_check_branch
        %4505 = sbr.rel (%p4503) target = $region40
      $region39: #{complex_gabor_layer_packed.1} parent=35 // pred_region
        %s4506 = smul.u32 16, %s15
      $region40: #{complex_gabor_layer_packed.1} parent=35 // pred_fallthru
        _
    $region36: #{complex_gabor_layer_packed.1} parent=5 // pred_fallthru
      _
    %p4507 = scmp.le.s32.totalorder 2, %s10
    // Predicated region
    $region41: #{complex_gabor_layer_packed.1} parent=5 // pred_check
      %p4508 = pneg %p4507
    $region42: #{complex_gabor_layer_packed.1} parent=5 // pred_check_branch
      %4510 = sbr.rel (%p4508) target = $region44
    $region43: #{complex_gabor_layer_packed.1} parent=5 // pred_region
      %s4511 = ssub.s32 %s10, 2
      // Predicated region
      $region45: #{complex_gabor_layer_packed.1} parent=43 // pred_check
        %p4512 = pneg %p133
      $region46: #{complex_gabor_layer_packed.1} parent=43 // pred_check_branch
        %4514 = sbr.rel (%p4512) target = $region48
      $region47: #{complex_gabor_layer_packed.1} parent=43 // pred_region
        %s4515 = smul.u32 16, %s16
        %p4516 = scmp.lt.s32.totalorder %s4515, 63
        %s4517 = scalar_select %p4516, %s4515, 63
        %s4518 = smul.addr %s4517, 8
        %s4519 = scalar_lea.vmem %s4, %s4518
      $region48: #{complex_gabor_layer_packed.1} parent=43 // pred_fallthru
        _
    $region44: #{complex_gabor_layer_packed.1} parent=5 // pred_fallthru
      _
  $region6: #{complex_gabor_layer_packed.1} parent=0 // loop_footer
    %s14 = sadd.s32 1, %s10
  $region7: #{complex_gabor_layer_packed.1} parent=0 // loop_footer_branch
    %9 = sbr.rel target = $region3
  $region8: #{complex_gabor_layer_packed.1} parent=0 // loop_exit
    _

</llo_original>
